<compile_context>
chip_gen: v7x
topology: tpu7x:2x2x1
jax: 0.10.0
libtpu: 0.0.40
codegen_flags: <defaults>
</compile_context>

<pallas_src>
import functools
import math

import jax
import jax.numpy as jnp
from jax.experimental import pallas as pl
from jax.experimental.pallas import tpu as pltpu


# ----------------------------------------------------------------------------
# Kernel 1: gated + L1 row-normalized subspace factors  (tiny, single block)
# ----------------------------------------------------------------------------
def ssf_norm_kernel(ssf_ref, gate_ref, out_ref):
    gated = ssf_ref[...] * gate_ref[...]
    denom = jnp.maximum(jnp.sum(jnp.abs(gated), axis=1, keepdims=True), 1e-12)
    out_ref[...] = gated / denom


# ----------------------------------------------------------------------------
# Kernel 2: fused per-row-tile SMN forward
# ----------------------------------------------------------------------------
def make_smn_kernel(nhop, nclass, negative_slope):
    def kernel(*refs):
        x_refs = refs[:nhop]
        (w1_ref, b1_ref, att_ref, w2_ref, b2_ref, ssfn_ref,
         out_ref, feat_ref, loss_ref) = refs[nhop:]

        w1 = w1_ref[...]
        b1 = b1_ref[...]

        # per-hop hidden features and attention matrices (all [tm, heads*hid])
        h, a = [], []
        for hop in range(nhop):
            hh = jnp.dot(x_refs[hop][...], w1,
                         preferred_element_type=jnp.float32) + b1
            hh = jnp.where(hh >= 0, hh, negative_slope * hh)     # leaky_relu
            h.append(hh)
            a.append(hh * att_ref[hop:hop + 1, :])               # h * att (per hop)

        # attention_score[hop] = root + a[hop]; softmax over the hop axis
        root = a[0]
        scores = [root + a[hop] for hop in range(nhop)]
        m = scores[0]
        for hop in range(1, nhop):
            m = jnp.maximum(m, scores[hop])
        exps = [jnp.exp(s - m) for s in scores]
        denom = exps[0]
        for hop in range(1, nhop):
            denom = denom + exps[hop]

        mixed = h[0] * (exps[0] / denom)
        for hop in range(1, nhop):
            mixed = mixed + h[hop] * (exps[hop] / denom)         # sum over hops

        # post linear + leaky_relu -> features [tm, nssf]
        feat = jnp.dot(mixed, w2_ref[...],
                       preferred_element_type=jnp.float32) + b2_ref[...]
        feat = jnp.where(feat >= 0, feat, negative_slope * feat)
        feat_ref[...] = feat

        # classification head against ssf_norm (lane-padded to NCP columns of zeros)
        ssfn = ssfn_ref[...]                                     # [nssf, NCP]
        dot = jnp.dot(feat, ssfn, preferred_element_type=jnp.float32)
        out_ref[...] = dot

        feat_sq = jnp.sum(feat * feat, axis=-1, keepdims=True)   # [tm, 1]
        col_sq = jnp.sum(ssfn * ssfn, axis=0, keepdims=True)     # [1, NCP]
        d2 = jnp.maximum(feat_sq + col_sq - 2.0 * dot, 0.0)
        dist = -jnp.sqrt(d2)                                     # -cdist
        cos = dot / jnp.maximum(jnp.sqrt(feat_sq) * jnp.sqrt(col_sq), 1e-6)

        # masked log_softmax over the real nclass columns only
        tm, ncp = out_ref.shape
        valid = jax.lax.broadcasted_iota(jnp.int32, (tm, ncp), 1) < nclass

        def log_softmax(v):
            vm = jnp.where(valid, v, -jnp.inf)
            mx = jnp.max(vm, axis=-1, keepdims=True)
            e = jnp.where(valid, jnp.exp(v - mx), 0.0)
            return v - mx - jnp.log(jnp.sum(e, axis=-1, keepdims=True))

        loss_ref[...] = 0.5 * (log_softmax(dist) + log_softmax(cos))

    return kernel


# ----------------------------------------------------------------------------
# Wrapper
# ----------------------------------------------------------------------------
def smn_forward(x, w1, b1, att, w2, b2, ssf, sparse_gate, sigma,
                negative_slope=0.2, tm=128):
    """x: [N, nhop, nfeat] (k-step propagated features); returns the 5-tuple."""
    N, nhop, nfeat = x.shape
    nheads, _, nhid = att.shape
    HH = nheads * nhid
    nssf, nclass = ssf.shape
    NCP = max(128, ((nclass + 127) // 128) * 128)   # lane-pad class dim
    assert N % tm == 0, "N must be a multiple of the row tile"

    # --- ssf_norm (computed once) ---
    ssf_norm = pl.pallas_call(
        ssf_norm_kernel,
        out_shape=jax.ShapeDtypeStruct((nssf, nclass), jnp.float32),
        in_specs=[pl.BlockSpec((nssf, nclass), lambda: (0, 0)),
                  pl.BlockSpec((nssf, nclass), lambda: (0, 0))],
        out_specs=pl.BlockSpec((nssf, nclass), lambda: (0, 0)),
    )(ssf, sparse_gate)
    ssfn_pad = jnp.pad(ssf_norm, ((0, 0), (0, NCP - nclass)))

    # layout plumbing (outside the kernel): per-hop 2-D slabs, head-major att rows
    x_hops = [x[:, hop, :] for hop in range(nhop)]
    att_flat = jnp.swapaxes(att, 0, 1).reshape(nhop, HH)
    b1_2d = b1.reshape(1, HH)
    b2_2d = b2.reshape(1, nssf)

    kernel = make_smn_kernel(nhop=nhop, nclass=nclass,
                             negative_slope=negative_slope)

    full = lambda shape: pl.BlockSpec(shape, lambda i: (0, 0))
    hop_specs = [pl.BlockSpec((tm, nfeat), lambda i: (i, 0)) for _ in range(nhop)]

    flops = 2 * N * (nhop * nfeat * HH + HH * nssf + nssf * NCP) \
        + 16 * N * (nhop * HH + NCP)
    transcendentals = N * (nhop * HH + 6 * NCP)
    bytes_accessed = 4 * (N * nhop * nfeat + nfeat * HH + HH * nssf
                          + nssf * NCP + N * (nssf + 2 * NCP))

    out_p, feat, loss_p = pl.pallas_call(
        kernel,
        out_shape=(jax.ShapeDtypeStruct((N, NCP), jnp.float32),
                   jax.ShapeDtypeStruct((N, nssf), jnp.float32),
                   jax.ShapeDtypeStruct((N, NCP), jnp.float32)),
        grid=(N // tm,),
        in_specs=hop_specs + [
            full((nfeat, HH)),        # w1
            full((1, HH)),            # b1
            full((nhop, HH)),         # att (hop-major, head*hid lanes)
            full((HH, nssf)),         # w2
            full((1, nssf)),          # b2
            full((nssf, NCP)),        # ssf_norm (lane padded)
        ],
        out_specs=(pl.BlockSpec((tm, NCP), lambda i: (i, 0)),
                   pl.BlockSpec((tm, nssf), lambda i: (i, 0)),
                   pl.BlockSpec((tm, NCP), lambda i: (i, 0))),
        compiler_params=pltpu.CompilerParams(
            dimension_semantics=("parallel",),
            vmem_limit_bytes=64 << 20),
        cost_estimate=pl.CostEstimate(flops=flops,
                                      transcendentals=transcendentals,
                                      bytes_accessed=bytes_accessed),
    )(*x_hops, w1, b1_2d, att_flat, w2, b2_2d, ssfn_pad)

    return out_p[:, :nclass], ssf_norm, feat, loss_p[:, :nclass], sigma


# ----------------------------------------------------------------------------
# Pure-JAX reference (same branch of the module), for correctness checking.
# ----------------------------------------------------------------------------
def smn_reference(x, w1, b1, att, w2, b2, ssf, sparse_gate, negative_slope):
    hp = jax.lax.Precision.HIGHEST
    N, nhop, nfeat = x.shape
    nheads, _, nhid = att.shape
    h = jnp.einsum("nhf,fo->nho", x, w1, precision=hp) + b1
    h = h.reshape(N, nhop, nheads, nhid).swapaxes(1, 2)      # [N, heads, hops, hid]
    h = jnp.where(h >= 0, h, negative_slope * h)
    att_m = h * att[None, :, :, :]
    score = att_m[:, :, 0:1, :] + att_m
    w = jax.nn.softmax(score, axis=2)
    mixed = jnp.sum(h * w, axis=2).reshape(N, nheads * nhid)
    feat = jnp.einsum("nd,do->no", mixed, w2, precision=hp) + b2
    feat = jnp.where(feat >= 0, feat, negative_slope * feat)
    gated = ssf * sparse_gate
    ssf_norm = gated / jnp.maximum(
        jnp.sum(jnp.abs(gated), axis=1, keepdims=True), 1e-12)
    out = jnp.einsum("ns,sc->nc", feat, ssf_norm, precision=hp)
    diff = feat[:, None, :] - ssf_norm.T[None, :, :]
    dist = -jnp.sqrt(jnp.sum(diff * diff, axis=-1))
    fn = jnp.sqrt(jnp.sum(feat * feat, axis=-1, keepdims=True))
    cn = jnp.sqrt(jnp.sum(ssf_norm * ssf_norm, axis=0, keepdims=True))
    cos = out / jnp.maximum(fn * cn, 1e-6)
    loss = 0.5 * (jax.nn.log_softmax(dist, axis=1) + jax.nn.log_softmax(cos, axis=1))
    return out, ssf_norm, feat, loss


if __name__ == "__main__":
    # Small deterministic config consistent with the module
    N = 256                 # nodes (multiple of the 128-row tile)
    nfeat = 64
    nhid = 32
    nheads = 4              # heads*hid = 128 -> lane dense
    nhop = 3
    nssf = 128
    nclass = 8
    negative_slope = 0.2

    key = jax.random.PRNGKey(0)
    kx, k1, k2, k3, k4, k5, k6, k7 = jax.random.split(key, 8)
    HH = nheads * nhid

    def xavier(k, shape, fan_in, fan_out):
        bound = math.sqrt(6.0 / (fan_in + fan_out))
        return jax.random.uniform(k, shape, minval=-bound, maxval=bound,
                                  dtype=jnp.float32)

    x = jax.random.normal(kx, (N, nhop, nfeat), dtype=jnp.float32)
    # pre_ln_2.weight is [HH, nfeat] in torch; we store its transpose [nfeat, HH]
    w1 = xavier(k1, (nfeat, HH), nfeat, HH)
    b1 = jax.random.uniform(k2, (HH,), minval=-1 / math.sqrt(nfeat),
                            maxval=1 / math.sqrt(nfeat), dtype=jnp.float32)
    att = xavier(k3, (nheads, nhop, nhid), nhop * nhid, nhid)
    w2 = xavier(k4, (HH, nssf), HH, nssf)
    b2 = jax.random.uniform(k5, (nssf,), minval=-1 / math.sqrt(HH),
                            maxval=1 / math.sqrt(HH), dtype=jnp.float32)
    sparse_gate = xavier(k6, (nssf, nclass), nssf, nclass)
    ssf = xavier(k7, (nssf, nclass), nssf, nclass)
    sigma = jnp.ones((2,), dtype=jnp.float32)

    fwd = jax.jit(functools.partial(smn_forward,
                                    negative_slope=negative_slope, tm=128))
    out, ssf_n, feat, loss, sigma_out = fwd(x, w1, b1, att, w2, b2,
                                            ssf, sparse_gate, sigma)
    out = jax.block_until_ready(out)

    ro, rn, rf, rl = smn_reference(x, w1, b1, att, w2, b2, ssf, sparse_gate,
                                   negative_slope)

    assert out.shape == (N, nclass) and loss.shape == (N, nclass)
    assert feat.shape == (N, nssf) and ssf_n.shape == (nssf, nclass)
    assert jnp.allclose(ssf_n, rn, atol=1e-4, rtol=1e-4), "ssf_norm mismatch"
    assert jnp.allclose(feat, rf, atol=1e-4, rtol=1e-4), "features mismatch"
    assert jnp.allclose(out, ro, atol=1e-4, rtol=1e-4), "out mismatch"
    assert jnp.allclose(loss, rl, atol=5e-4, rtol=5e-4), "spatial_loss mismatch"
    assert jnp.allclose(sigma_out, sigma), "sigma mismatch"

    print("KERNEL_OK")
</pallas_src>

<mosaic_0001>
module attributes {stable_mosaic.version = 11 : i64} {
  func.func @ssf_norm_kernel(%arg0: memref<128x8xf32, #tpu.memory_space<vmem>>, %arg1: memref<128x8xf32, #tpu.memory_space<vmem>>, %arg2: memref<128x8xf32, #tpu.memory_space<vmem>>) attributes {dimension_semantics = [], scalar_prefetch = 0 : i64, scratch_operands = 0 : i64, tpu.core_type = #tpu.core_type<tc>} {
    %c0 = arith.constant 0 : index
    %c0_0 = arith.constant 0 : index
    %0 = vector.load %arg0[%c0, %c0_0] : memref<128x8xf32, #tpu.memory_space<vmem>>, vector<128x8xf32>
    %c0_1 = arith.constant 0 : index
    %c0_2 = arith.constant 0 : index
    %1 = vector.load %arg1[%c0_1, %c0_2] : memref<128x8xf32, #tpu.memory_space<vmem>>, vector<128x8xf32>
    %2 = arith.mulf %0, %1 : vector<128x8xf32>
    %3 = math.absf %2 : vector<128x8xf32>
    %cst = arith.constant dense<0.000000e+00> : vector<128xf32>
    %4 = vector.multi_reduction <add>, %3, %cst [1] : vector<128x8xf32> to vector<128xf32>
    %5 = vector.shape_cast %4 : vector<128xf32> to vector<128x1xf32>
    %cst_3 = arith.constant 9.99999996E-13 : f32
    %6 = vector.broadcast %cst_3 : f32 to vector<128x1xf32>
    %7 = arith.maximumf %5, %6 : vector<128x1xf32>
    %8 = vector.broadcast %7 : vector<128x1xf32> to vector<128x8xf32>
    %9 = arith.divf %2, %8 : vector<128x8xf32>
    %c0_4 = arith.constant 0 : index
    %c0_5 = arith.constant 0 : index
    %10 = vector.load %arg2[%c0_4, %c0_5] : memref<128x8xf32, #tpu.memory_space<vmem>>, vector<128x8xf32>
    tpu.vector_store %arg2[%c0_4, %c0_5], %9 {strides = array<i32>} : memref<128x8xf32, #tpu.memory_space<vmem>>, vector<128x8xf32>,
    return
  }
}

module attributes {stable_mosaic.version = 11 : i64} {
  func.func @kernel(%arg0: i32, %arg1: memref<128x64xf32, #tpu.memory_space<vmem>>, %arg2: memref<128x64xf32, #tpu.memory_space<vmem>>, %arg3: memref<128x64xf32, #tpu.memory_space<vmem>>, %arg4: memref<64x128xf32, #tpu.memory_space<vmem>>, %arg5: memref<1x128xf32, #tpu.memory_space<vmem>>, %arg6: memref<3x128xf32, #tpu.memory_space<vmem>>, %arg7: memref<128x128xf32, #tpu.memory_space<vmem>>, %arg8: memref<1x128xf32, #tpu.memory_space<vmem>>, %arg9: memref<128x128xf32, #tpu.memory_space<vmem>>, %arg10: memref<128x128xf32, #tpu.memory_space<vmem>>, %arg11: memref<128x128xf32, #tpu.memory_space<vmem>>, %arg12: memref<128x128xf32, #tpu.memory_space<vmem>>) attributes {dimension_semantics = [#tpu.dimension_semantics<parallel>], iteration_bounds = array<i64: 2>, scalar_prefetch = 0 : i64, scratch_operands = 0 : i64, tpu.core_type = #tpu.core_type<tc>, window_params = [{transform_indices = @transform_0, window_bounds = array<i64: 128, 64>}, {transform_indices = @transform_1, window_bounds = array<i64: 128, 64>}, {transform_indices = @transform_2, window_bounds = array<i64: 128, 64>}, {pipeline_mode = #tpu.pipeline_mode<synchronous>, transform_indices = @transform_3, window_bounds = array<i64: 64, 128>}, {pipeline_mode = #tpu.pipeline_mode<synchronous>, transform_indices = @transform_4, window_bounds = array<i64: 1, 128>}, {pipeline_mode = #tpu.pipeline_mode<synchronous>, transform_indices = @transform_5, window_bounds = array<i64: 3, 128>}, {pipeline_mode = #tpu.pipeline_mode<synchronous>, transform_indices = @transform_6, window_bounds = array<i64: 128, 128>}, {pipeline_mode = #tpu.pipeline_mode<synchronous>, transform_indices = @transform_7, window_bounds = array<i64: 1, 128>}, {pipeline_mode = #tpu.pipeline_mode<synchronous>, transform_indices = @transform_8, window_bounds = array<i64: 128, 128>}, {transform_indices = @transform_9, window_bounds = array<i64: 128, 128>}, {transform_indices = @transform_10, window_bounds = array<i64: 128, 128>}, {transform_indices = @transform_11, window_bounds = array<i64: 128, 128>}]} {
    %c0 = arith.constant 0 : index
    %c0_0 = arith.constant 0 : index
    %0 = vector.load %arg4[%c0, %c0_0] : memref<64x128xf32, #tpu.memory_space<vmem>>, vector<64x128xf32>
    %c0_1 = arith.constant 0 : index
    %c0_2 = arith.constant 0 : index
    %1 = vector.load %arg5[%c0_1, %c0_2] : memref<1x128xf32, #tpu.memory_space<vmem>>, vector<1x128xf32>
    %c0_3 = arith.constant 0 : index
    %c0_4 = arith.constant 0 : index
    %2 = vector.load %arg1[%c0_3, %c0_4] : memref<128x64xf32, #tpu.memory_space<vmem>>, vector<128x64xf32>
    %cst = arith.constant dense<0.000000e+00> : vector<128x128xf32>
    %3 = tpu.matmul %2, %0, %cst {dimension_numbers = #tpu.dot_dimension_numbers<[1], [0], [0], [1], [0, 0, 1, 1], [], []>} : vector<128x64xf32>, vector<64x128xf32>, vector<128x128xf32> -> vector<128x128xf32>
    %4 = vector.broadcast %1 : vector<1x128xf32> to vector<128x128xf32>
    %5 = arith.addf %3, %4 : vector<128x128xf32>
    %cst_5 = arith.constant 0.000000e+00 : f32
    %6 = vector.broadcast %cst_5 : f32 to vector<128x128xf32>
    %7 = arith.cmpf oge, %5, %6 : vector<128x128xf32>
    %cst_6 = arith.constant 2.000000e-01 : f32
    %8 = vector.broadcast %cst_6 : f32 to vector<128x128xf32>
    %9 = arith.mulf %8, %5 : vector<128x128xf32>
    %10 = arith.select %7, %5, %9 : vector<128x128xi1>, vector<128x128xf32>
    %c0_7 = arith.constant 0 : index
    %c0_8 = arith.constant 0 : index
    %11 = vector.load %arg6[%c0_7, %c0_8] : memref<3x128xf32, #tpu.memory_space<vmem>>, vector<1x128xf32>
    %12 = vector.broadcast %11 : vector<1x128xf32> to vector<128x128xf32>
    %13 = arith.mulf %10, %12 : vector<128x128xf32>
    %c0_9 = arith.constant 0 : index
    %c0_10 = arith.constant 0 : index
    %14 = vector.load %arg2[%c0_9, %c0_10] : memref<128x64xf32, #tpu.memory_space<vmem>>, vector<128x64xf32>
    %cst_11 = arith.constant dense<0.000000e+00> : vector<128x128xf32>
    %15 = tpu.matmul %14, %0, %cst_11 {dimension_numbers = #tpu.dot_dimension_numbers<[1], [0], [0], [1], [0, 0, 1, 1], [], []>} : vector<128x64xf32>, vector<64x128xf32>, vector<128x128xf32> -> vector<128x128xf32>
    %16 = vector.broadcast %1 : vector<1x128xf32> to vector<128x128xf32>
    %17 = arith.addf %15, %16 : vector<128x128xf32>
    %cst_12 = arith.constant 0.000000e+00 : f32
    %18 = vector.broadcast %cst_12 : f32 to vector<128x128xf32>
    %19 = arith.cmpf oge, %17, %18 : vector<128x128xf32>
    %cst_13 = arith.constant 2.000000e-01 : f32
    %20 = vector.broadcast %cst_13 : f32 to vector<128x128xf32>
    %21 = arith.mulf %20, %17 : vector<128x128xf32>
    %22 = arith.select %19, %17, %21 : vector<128x128xi1>, vector<128x128xf32>
    %c1 = arith.constant 1 : index
    %c0_14 = arith.constant 0 : index
    %23 = vector.load %arg6[%c1, %c0_14] : memref<3x128xf32, #tpu.memory_space<vmem>>, vector<1x128xf32>
    %24 = vector.broadcast %23 : vector<1x128xf32> to vector<128x128xf32>
    %25 = arith.mulf %22, %24 : vector<128x128xf32>
    %c0_15 = arith.constant 0 : index
    %c0_16 = arith.constant 0 : index
    %26 = vector.load %arg3[%c0_15, %c0_16] : memref<128x64xf32, #tpu.memory_space<vmem>>, vector<128x64xf32>
    %cst_17 = arith.constant dense<0.000000e+00> : vector<128x128xf32>
    %27 = tpu.matmul %26, %0, %cst_17 {dimension_numbers = #tpu.dot_dimension_numbers<[1], [0], [0], [1], [0, 0, 1, 1], [], []>} : vector<128x64xf32>, vector<64x128xf32>, vector<128x128xf32> -> vector<128x128xf32>
    %28 = vector.broadcast %1 : vector<1x128xf32> to vector<128x128xf32>
    %29 = arith.addf %27, %28 : vector<128x128xf32>
    %cst_18 = arith.constant 0.000000e+00 : f32
    %30 = vector.broadcast %cst_18 : f32 to vector<128x128xf32>
    %31 = arith.cmpf oge, %29, %30 : vector<128x128xf32>
    %cst_19 = arith.constant 2.000000e-01 : f32
    %32 = vector.broadcast %cst_19 : f32 to vector<128x128xf32>
    %33 = arith.mulf %32, %29 : vector<128x128xf32>
    %34 = arith.select %31, %29, %33 : vector<128x128xi1>, vector<128x128xf32>
    %c2 = arith.constant 2 : index
    %c0_20 = arith.constant 0 : index
    %35 = vector.load %arg6[%c2, %c0_20] : memref<3x128xf32, #tpu.memory_space<vmem>>, vector<1x128xf32>
    %36 = vector.broadcast %35 : vector<1x128xf32> to vector<128x128xf32>
    %37 = arith.mulf %34, %36 : vector<128x128xf32>
    %38 = arith.addf %13, %13 : vector<128x128xf32>
    %39 = arith.addf %13, %25 : vector<128x128xf32>
    %40 = arith.addf %13, %37 : vector<128x128xf32>
    %41 = arith.maximumf %38, %39 : vector<128x128xf32>
    %42 = arith.maximumf %41, %40 : vector<128x128xf32>
    %43 = arith.subf %38, %42 : vector<128x128xf32>
    %44 = math.exp %43 : vector<128x128xf32>
    %45 = arith.subf %39, %42 : vector<128x128xf32>
    %46 = math.exp %45 : vector<128x128xf32>
    %47 = arith.subf %40, %42 : vector<128x128xf32>
    %48 = math.exp %47 : vector<128x128xf32>
    %49 = arith.addf %44, %46 : vector<128x128xf32>
    %50 = arith.addf %49, %48 : vector<128x128xf32>
    %51 = arith.divf %44, %50 : vector<128x128xf32>
    %52 = arith.mulf %10, %51 : vector<128x128xf32>
    %53 = arith.divf %46, %50 : vector<128x128xf32>
    %54 = arith.mulf %22, %53 : vector<128x128xf32>
    %55 = arith.addf %52, %54 : vector<128x128xf32>
    %56 = arith.divf %48, %50 : vector<128x128xf32>
    %57 = arith.mulf %34, %56 : vector<128x128xf32>
    %58 = arith.addf %55, %57 : vector<128x128xf32>
    %c0_21 = arith.constant 0 : index
    %c0_22 = arith.constant 0 : index
    %59 = vector.load %arg7[%c0_21, %c0_22] : memref<128x128xf32, #tpu.memory_space<vmem>>, vector<128x128xf32>
    %cst_23 = arith.constant dense<0.000000e+00> : vector<128x128xf32>
    %60 = tpu.matmul %58, %59, %cst_23 {dimension_numbers = #tpu.dot_dimension_numbers<[1], [0], [0], [1], [0, 0, 1, 1], [], []>} : vector<128x128xf32>, vector<128x128xf32>, vector<128x128xf32> -> vector<128x128xf32>
    %c0_24 = arith.constant 0 : index
    %c0_25 = arith.constant 0 : index
    %61 = vector.load %arg8[%c0_24, %c0_25] : memref<1x128xf32, #tpu.memory_space<vmem>>, vector<1x128xf32>
    %62 = vector.broadcast %61 : vector<1x128xf32> to vector<128x128xf32>
    %63 = arith.addf %60, %62 : vector<128x128xf32>
    %cst_26 = arith.constant 0.000000e+00 : f32
    %64 = vector.broadcast %cst_26 : f32 to vector<128x128xf32>
    %65 = arith.cmpf oge, %63, %64 : vector<128x128xf32>
    %cst_27 = arith.constant 2.000000e-01 : f32
    %66 = vector.broadcast %cst_27 : f32 to vector<128x128xf32>
    %67 = arith.mulf %66, %63 : vector<128x128xf32>
    %68 = arith.select %65, %63, %67 : vector<128x128xi1>, vector<128x128xf32>
    %c0_28 = arith.constant 0 : index
    %c0_29 = arith.constant 0 : index
    %69 = vector.load %arg11[%c0_28, %c0_29] : memref<128x128xf32, #tpu.memory_space<vmem>>, vector<128x128xf32>
    tpu.vector_store %arg11[%c0_28, %c0_29], %68 {strides = array<i32>} : memref<128x128xf32, #tpu.memory_space<vmem>>, vector<128x128xf32>,
    %c0_30 = arith.constant 0 : index
    %c0_31 = arith.constant 0 : index
    %70 = vector.load %arg9[%c0_30, %c0_31] : memref<128x128xf32, #tpu.memory_space<vmem>>, vector<128x128xf32>
    %cst_32 = arith.constant dense<0.000000e+00> : vector<128x128xf32>
    %71 = tpu.matmul %68, %70, %cst_32 {dimension_numbers = #tpu.dot_dimension_numbers<[1], [0], [0], [1], [0, 0, 1, 1], [], []>} : vector<128x128xf32>, vector<128x128xf32>, vector<128x128xf32> -> vector<128x128xf32>
    %c0_33 = arith.constant 0 : index
    %c0_34 = arith.constant 0 : index
    %72 = vector.load %arg10[%c0_33, %c0_34] : memref<128x128xf32, #tpu.memory_space<vmem>>, vector<128x128xf32>
    tpu.vector_store %arg10[%c0_33, %c0_34], %71 {strides = array<i32>} : memref<128x128xf32, #tpu.memory_space<vmem>>, vector<128x128xf32>,
    %73 = arith.mulf %68, %68 : vector<128x128xf32>
    %cst_35 = arith.constant dense<0.000000e+00> : vector<128xf32>
    %74 = vector.multi_reduction <add>, %73, %cst_35 [1] : vector<128x128xf32> to vector<128xf32>
    %75 = vector.shape_cast %74 : vector<128xf32> to vector<128x1xf32>
    %76 = arith.mulf %70, %70 : vector<128x128xf32>
    %cst_36 = arith.constant dense<0.000000e+00> : vector<128xf32>
    %77 = vector.multi_reduction <add>, %76, %cst_36 [0] : vector<128x128xf32> to vector<128xf32>
    %78 = vector.shape_cast %77 : vector<128xf32> to vector<1x128xf32>
    %79 = vector.broadcast %75 : vector<128x1xf32> to vector<128x128xf32>
    %80 = vector.broadcast %78 : vector<1x128xf32> to vector<128x128xf32>
    %81 = arith.addf %79, %80 : vector<128x128xf32>
    %cst_37 = arith.constant 2.000000e+00 : f32
    %82 = vector.broadcast %cst_37 : f32 to vector<128x128xf32>
    %83 = arith.mulf %82, %71 : vector<128x128xf32>
    %84 = arith.subf %81, %83 : vector<128x128xf32>
    %cst_38 = arith.constant 0.000000e+00 : f32
    %85 = vector.broadcast %cst_38 : f32 to vector<128x128xf32>
    %86 = arith.maximumf %84, %85 : vector<128x128xf32>
    %87 = math.sqrt %86 : vector<128x128xf32>
    %cst_39 = arith.constant 0.000000e+00 : f32
    %88 = vector.broadcast %cst_39 : f32 to vector<128x128xf32>
    %89 = arith.subf %88, %87 : vector<128x128xf32>
    %90 = math.sqrt %75 : vector<128x1xf32>
    %91 = math.sqrt %78 : vector<1x128xf32>
    %92 = vector.broadcast %90 : vector<128x1xf32> to vector<128x128xf32>
    %93 = vector.broadcast %91 : vector<1x128xf32> to vector<128x128xf32>
    %94 = arith.mulf %92, %93 : vector<128x128xf32>
    %cst_40 = arith.constant 9.99999997E-7 : f32
    %95 = vector.broadcast %cst_40 : f32 to vector<128x128xf32>
    %96 = arith.maximumf %94, %95 : vector<128x128xf32>
    %97 = arith.divf %71, %96 : vector<128x128xf32>
    %98 = tpu.iota {dimensions = array<i32: 1>} : vector<128x128xi32>
    %c8_i32 = arith.constant 8 : i32
    %99 = vector.broadcast %c8_i32 : i32 to vector<128x128xi32>
    %100 = arith.cmpi slt, %98, %99 : vector<128x128xi32>
    %cst_41 = arith.constant 0xFF800000 : f32
    %101 = vector.broadcast %cst_41 : f32 to vector<128x128xf32>
    %102 = arith.select %100, %89, %101 : vector<128x128xi1>, vector<128x128xf32>
    %cst_42 = arith.constant dense<0xFF800000> : vector<128xf32>
    %103 = vector.multi_reduction <maximumf>, %102, %cst_42 [1] : vector<128x128xf32> to vector<128xf32>
    %104 = vector.shape_cast %103 : vector<128xf32> to vector<128x1xf32>
    %105 = vector.broadcast %104 : vector<128x1xf32> to vector<128x128xf32>
    %106 = arith.subf %89, %105 : vector<128x128xf32>
    %107 = math.exp %106 : vector<128x128xf32>
    %cst_43 = arith.constant 0.000000e+00 : f32
    %108 = vector.broadcast %cst_43 : f32 to vector<128x128xf32>
    %109 = arith.select %100, %107, %108 : vector<128x128xi1>, vector<128x128xf32>
    %110 = vector.broadcast %104 : vector<128x1xf32> to vector<128x128xf32>
    %111 = arith.subf %89, %110 : vector<128x128xf32>
    %cst_44 = arith.constant dense<0.000000e+00> : vector<128xf32>
    %112 = vector.multi_reduction <add>, %109, %cst_44 [1] : vector<128x128xf32> to vector<128xf32>
    %113 = vector.shape_cast %112 : vector<128xf32> to vector<128x1xf32>
    %114 = math.log %113 : vector<128x1xf32>
    %115 = vector.broadcast %114 : vector<128x1xf32> to vector<128x128xf32>
    %116 = arith.subf %111, %115 : vector<128x128xf32>
    %cst_45 = arith.constant 0xFF800000 : f32
    %117 = vector.broadcast %cst_45 : f32 to vector<128x128xf32>
    %118 = arith.select %100, %97, %117 : vector<128x128xi1>, vector<128x128xf32>
    %cst_46 = arith.constant dense<0xFF800000> : vector<128xf32>
    %119 = vector.multi_reduction <maximumf>, %118, %cst_46 [1] : vector<128x128xf32> to vector<128xf32>
    %120 = vector.shape_cast %119 : vector<128xf32> to vector<128x1xf32>
    %121 = vector.broadcast %120 : vector<128x1xf32> to vector<128x128xf32>
    %122 = arith.subf %97, %121 : vector<128x128xf32>
    %123 = math.exp %122 : vector<128x128xf32>
    %cst_47 = arith.constant 0.000000e+00 : f32
    %124 = vector.broadcast %cst_47 : f32 to vector<128x128xf32>
    %125 = arith.select %100, %123, %124 : vector<128x128xi1>, vector<128x128xf32>
    %126 = vector.broadcast %120 : vector<128x1xf32> to vector<128x128xf32>
    %127 = arith.subf %97, %126 : vector<128x128xf32>
    %cst_48 = arith.constant dense<0.000000e+00> : vector<128xf32>
    %128 = vector.multi_reduction <add>, %125, %cst_48 [1] : vector<128x128xf32> to vector<128xf32>
    %129 = vector.shape_cast %128 : vector<128xf32> to vector<128x1xf32>
    %130 = math.log %129 : vector<128x1xf32>
    %131 = vector.broadcast %130 : vector<128x1xf32> to vector<128x128xf32>
    %132 = arith.subf %127, %131 : vector<128x128xf32>
    %133 = arith.addf %116, %132 : vector<128x128xf32>
    %cst_49 = arith.constant 5.000000e-01 : f32
    %134 = vector.broadcast %cst_49 : f32 to vector<128x128xf32>
    %135 = arith.mulf %134, %133 : vector<128x128xf32>
    %c0_50 = arith.constant 0 : index
    %c0_51 = arith.constant 0 : index
    %136 = vector.load %arg12[%c0_50, %c0_51] : memref<128x128xf32, #tpu.memory_space<vmem>>, vector<128x128xf32>
    tpu.vector_store %arg12[%c0_50, %c0_51], %135 {strides = array<i32>} : memref<128x128xf32, #tpu.memory_space<vmem>>, vector<128x128xf32>,
    return
  }
  func.func @transform_0(%arg0: i32) -> (i32, i32) {
    %c0_i32 = arith.constant 0 : i32
    %c0_i32_0 = arith.constant 0 : i32
    return %arg0, %c0_i32 : i32, i32
  }
  func.func @transform_1(%arg0: i32) -> (i32, i32) {
    %c0_i32 = arith.constant 0 : i32
    %c0_i32_0 = arith.constant 0 : i32
    return %arg0, %c0_i32 : i32, i32
  }
  func.func @transform_2(%arg0: i32) -> (i32, i32) {
    %c0_i32 = arith.constant 0 : i32
    %c0_i32_0 = arith.constant 0 : i32
    return %arg0, %c0_i32 : i32, i32
  }
  func.func @transform_3(%arg0: i32) -> (i32, i32) {
    %c0_i32 = arith.constant 0 : i32
    %c0_i32_0 = arith.constant 0 : i32
    %c0_i32_1 = arith.constant 0 : i32
    return %c0_i32, %c0_i32_0 : i32, i32
  }
  func.func @transform_4(%arg0: i32) -> (i32, i32) {
    %c0_i32 = arith.constant 0 : i32
    %c0_i32_0 = arith.constant 0 : i32
    %c0_i32_1 = arith.constant 0 : i32
    return %c0_i32, %c0_i32_0 : i32, i32
  }
  func.func @transform_5(%arg0: i32) -> (i32, i32) {
    %c0_i32 = arith.constant 0 : i32
    %c0_i32_0 = arith.constant 0 : i32
    %c0_i32_1 = arith.constant 0 : i32
    return %c0_i32, %c0_i32_0 : i32, i32
  }
  func.func @transform_6(%arg0: i32) -> (i32, i32) {
    %c0_i32 = arith.constant 0 : i32
    %c0_i32_0 = arith.constant 0 : i32
    %c0_i32_1 = arith.constant 0 : i32
    return %c0_i32, %c0_i32_0 : i32, i32
  }
  func.func @transform_7(%arg0: i32) -> (i32, i32) {
    %c0_i32 = arith.constant 0 : i32
    %c0_i32_0 = arith.constant 0 : i32
    %c0_i32_1 = arith.constant 0 : i32
    return %c0_i32, %c0_i32_0 : i32, i32
  }
  func.func @transform_8(%arg0: i32) -> (i32, i32) {
    %c0_i32 = arith.constant 0 : i32
    %c0_i32_0 = arith.constant 0 : i32
    %c0_i32_1 = arith.constant 0 : i32
    return %c0_i32, %c0_i32_0 : i32, i32
  }
  func.func @transform_9(%arg0: i32) -> (i32, i32) {
    %c0_i32 = arith.constant 0 : i32
    %c0_i32_0 = arith.constant 0 : i32
    return %arg0, %c0_i32 : i32, i32
  }
  func.func @transform_10(%arg0: i32) -> (i32, i32) {
    %c0_i32 = arith.constant 0 : i32
    %c0_i32_0 = arith.constant 0 : i32
    return %arg0, %c0_i32 : i32, i32
  }
  func.func @transform_11(%arg0: i32) -> (i32, i32) {
    %c0_i32 = arith.constant 0 : i32
    %c0_i32_0 = arith.constant 0 : i32
    return %arg0, %c0_i32 : i32, i32
  }
}

</mosaic_0001>

<llo_original>
// kernel: smn_forward.2
$region0: #{smn_forward.2}
  #allocation0 [shape = 'u32[]', space=smem, size = 0x4, offset = 0x4, fixed_abs, tag = 'smem constant byte address 0x4 - core index']
  #allocation1 [shape = 'u32[144,128]{1,0:T(1,128)}', space=vmem, size = 0x12000, scoped, tag = 'internal scratch']
  %s0 = inlined_call_operand.vmem [shape: f32[128,8], index: 0, kind: input, shape index: {}]
  %s1 = inlined_call_operand.vmem [shape: f32[128,8], index: 1, kind: input, shape index: {}]
  %s2 = inlined_call_operand.vmem [shape: f32[128,8], index: 2, kind: output, shape index: {}]
  %s3 = sld [smem:[#allocation0]]
  $region18: #{smn_forward.2} parent=0
    _
  %s5 = ssub.s32 1, %s3
  %s6 = scalar_select 0, %s5, %s3
  // Predicated region
  $region2: #{smn_forward.2} parent=0 // pred_check
    _
  $region3: #{smn_forward.2} parent=0 // pred_check_branch
    %8 = sbr.rel (0) target = $region5
  $region4: #{smn_forward.2} parent=0 // pred_region
    _
  $region5: #{smn_forward.2} parent=0 // pred_fallthru
    _
  // Predicated region
  $region6: #{smn_forward.2} parent=0 // pred_check
    _
  $region7: #{smn_forward.2} parent=0 // pred_check_branch
    %10 = sbr.rel (0) target = $region9
  $region8: #{smn_forward.2} parent=0 // pred_region
    _
  $region9: #{smn_forward.2} parent=0 // pred_fallthru
    _
  %v11 = vld [vmem:[%s0] sm:$0xff]
  %v12 = vld [vmem:[%s0 + $0x8] sm:$0xff]
  %v13 = vld [vmem:[%s0 + $0x10] sm:$0xff]
  %v14 = vld [vmem:[%s0 + $0x18] sm:$0xff]
  %v15 = vld [vmem:[%s0 + $0x20] sm:$0xff]
  %v16 = vld [vmem:[%s0 + $0x28] sm:$0xff]
  %v17 = vld [vmem:[%s0 + $0x30] sm:$0xff]
  %v18 = vld [vmem:[%s0 + $0x38] sm:$0xff]
  %v19 = vld [vmem:[%s0 + $0x40] sm:$0xff]
  %v20 = vld [vmem:[%s0 + $0x48] sm:$0xff]
  %v21 = vld [vmem:[%s0 + $0x50] sm:$0xff]
  %v22 = vld [vmem:[%s0 + $0x58] sm:$0xff]
  %v23 = vld [vmem:[%s0 + $0x60] sm:$0xff]
  %v24 = vld [vmem:[%s0 + $0x68] sm:$0xff]
  %v25 = vld [vmem:[%s0 + $0x70] sm:$0xff]
  %v26 = vld [vmem:[%s0 + $0x78] sm:$0xff]
  %v27 = vld [vmem:[%s1] sm:$0xff]
  %v28 = vld [vmem:[%s1 + $0x8] sm:$0xff]
  %v29 = vld [vmem:[%s1 + $0x10] sm:$0xff]
  %v30 = vld [vmem:[%s1 + $0x18] sm:$0xff]
  %v31 = vld [vmem:[%s1 + $0x20] sm:$0xff]
  %v32 = vld [vmem:[%s1 + $0x28] sm:$0xff]
  %v33 = vld [vmem:[%s1 + $0x30] sm:$0xff]
  %v34 = vld [vmem:[%s1 + $0x38] sm:$0xff]
  %v35 = vld [vmem:[%s1 + $0x40] sm:$0xff]
  %v36 = vld [vmem:[%s1 + $0x48] sm:$0xff]
  %v37 = vld [vmem:[%s1 + $0x50] sm:$0xff]
  %v38 = vld [vmem:[%s1 + $0x58] sm:$0xff]
  %v39 = vld [vmem:[%s1 + $0x60] sm:$0xff]
  %v40 = vld [vmem:[%s1 + $0x68] sm:$0xff]
  %v41 = vld [vmem:[%s1 + $0x70] sm:$0xff]
  %v42 = vld [vmem:[%s1 + $0x78] sm:$0xff]
  %v43 = vmul.f32 %v11, %v27
  %v44 = vmul.f32 %v12, %v28
  %v45 = vmul.f32 %v13, %v29
  %v46 = vmul.f32 %v14, %v30
  %v47 = vmul.f32 %v15, %v31
  %v48 = vmul.f32 %v16, %v32
  %v49 = vmul.f32 %v17, %v33
  %v50 = vmul.f32 %v18, %v34
  %v51 = vmul.f32 %v19, %v35
  %v52 = vmul.f32 %v20, %v36
  %v53 = vmul.f32 %v21, %v37
  %v54 = vmul.f32 %v22, %v38
  %v55 = vmul.f32 %v23, %v39
  %v56 = vmul.f32 %v24, %v40
  %v57 = vmul.f32 %v25, %v41
  %v58 = vmul.f32 %v26, %v42
  %v59 = vand.u32 2147483647, %v43
  %v60 = vand.u32 2147483647, %v44
  %v61 = vand.u32 2147483647, %v45
  %v62 = vand.u32 2147483647, %v46
  %v63 = vand.u32 2147483647, %v47
  %v64 = vand.u32 2147483647, %v48
  %v65 = vand.u32 2147483647, %v49
  %v66 = vand.u32 2147483647, %v50
  %v67 = vand.u32 2147483647, %v51
  %v68 = vand.u32 2147483647, %v52
  %v69 = vand.u32 2147483647, %v53
  %v70 = vand.u32 2147483647, %v54
  %v71 = vand.u32 2147483647, %v55
  %v72 = vand.u32 2147483647, %v56
  %v73 = vand.u32 2147483647, %v57
  %v74 = vand.u32 2147483647, %v58
  %vm75 = vcmask 64512
  %v76 = vsel %vm75, %v59, 0.0
  %77 = vadd.xlane.f32.xlu0 %v76
  %v78 = vpop.xlane.xlu0 %77
  %v79 = vsel %vm75, %v60, 0.0
  %80 = vadd.xlane.f32.xlu0 %v79
  %v81 = vpop.xlane.xlu0 %80
  %v82 = vsel %vm75, %v61, 0.0
  %83 = vadd.xlane.f32.xlu0 %v82
  %v84 = vpop.xlane.xlu0 %83
  %v85 = vsel %vm75, %v62, 0.0
  %86 = vadd.xlane.f32.xlu0 %v85
  %v87 = vpop.xlane.xlu0 %86
  %v88 = vsel %vm75, %v63, 0.0
  %89 = vadd.xlane.f32.xlu0 %v88
  %v90 = vpop.xlane.xlu0 %89
  %v91 = vsel %vm75, %v64, 0.0
  %92 = vadd.xlane.f32.xlu0 %v91
  %v93 = vpop.xlane.xlu0 %92
  %v94 = vsel %vm75, %v65, 0.0
  %95 = vadd.xlane.f32.xlu0 %v94
  %v96 = vpop.xlane.xlu0 %95
  %v97 = vsel %vm75, %v66, 0.0
  %98 = vadd.xlane.f32.xlu0 %v97
  %v99 = vpop.xlane.xlu0 %98
  %v100 = vsel %vm75, %v67, 0.0
  %101 = vadd.xlane.f32.xlu0 %v100
  %v102 = vpop.xlane.xlu0 %101
  %v103 = vsel %vm75, %v68, 0.0
  %104 = vadd.xlane.f32.xlu0 %v103
  %v105 = vpop.xlane.xlu0 %104
  %v106 = vsel %vm75, %v69, 0.0
  %107 = vadd.xlane.f32.xlu0 %v106
  %v108 = vpop.xlane.xlu0 %107
  %v109 = vsel %vm75, %v70, 0.0
  %110 = vadd.xlane.f32.xlu0 %v109
  %v111 = vpop.xlane.xlu0 %110
  %v112 = vsel %vm75, %v71, 0.0
  %113 = vadd.xlane.f32.xlu0 %v112
  %v114 = vpop.xlane.xlu0 %113
  %v115 = vsel %vm75, %v72, 0.0
  %116 = vadd.xlane.f32.xlu0 %v115
  %v117 = vpop.xlane.xlu0 %116
  %v118 = vsel %vm75, %v73, 0.0
  %119 = vadd.xlane.f32.xlu0 %v118
  %v120 = vpop.xlane.xlu0 %119
  %v121 = vsel %vm75, %v74, 0.0
  %122 = vadd.xlane.f32.xlu0 %v121
  %v123 = vpop.xlane.xlu0 %122
  %v124 = vmax.f32 %v78, 1e-12
  %v125 = vmax.f32 %v81, 1e-12
  %v126 = vmax.f32 %v84, 1e-12
  %v127 = vmax.f32 %v87, 1e-12
  %v128 = vmax.f32 %v90, 1e-12
  %v129 = vmax.f32 %v93, 1e-12
  %v130 = vmax.f32 %v96, 1e-12
  %v131 = vmax.f32 %v99, 1e-12
  %v132 = vmax.f32 %v102, 1e-12
  %v133 = vmax.f32 %v105, 1e-12
  %v134 = vmax.f32 %v108, 1e-12
  %v135 = vmax.f32 %v111, 1e-12
  %v136 = vmax.f32 %v114, 1e-12
  %v137 = vmax.f32 %v117, 1e-12
  %v138 = vmax.f32 %v120, 1e-12
  %v139 = vmax.f32 %v123, 1e-12
  %v140 = vrcp.pop %v124
  %v141 = vmul.f32 %v43, %v140
  %v142 = vrcp.pop %v125
  %v143 = vmul.f32 %v44, %v142
  %v144 = vrcp.pop %v126
  %v145 = vmul.f32 %v45, %v144
  %v146 = vrcp.pop %v127
  %v147 = vmul.f32 %v46, %v146
  %v148 = vrcp.pop %v128
  %v149 = vmul.f32 %v47, %v148
  %v150 = vrcp.pop %v129
  %v151 = vmul.f32 %v48, %v150
  %v152 = vrcp.pop %v130
  %v153 = vmul.f32 %v49, %v152
  %v154 = vrcp.pop %v131
  %v155 = vmul.f32 %v50, %v154
  %v156 = vrcp.pop %v132
  %v157 = vmul.f32 %v51, %v156
  %v158 = vrcp.pop %v133
  %v159 = vmul.f32 %v52, %v158
  %v160 = vrcp.pop %v134
  %v161 = vmul.f32 %v53, %v160
  %v162 = vrcp.pop %v135
  %v163 = vmul.f32 %v54, %v162
  %v164 = vrcp.pop %v136
  %v165 = vmul.f32 %v55, %v164
  %v166 = vrcp.pop %v137
  %v167 = vmul.f32 %v56, %v166
  %v168 = vrcp.pop %v138
  %v169 = vmul.f32 %v57, %v168
  %v170 = vrcp.pop %v139
  %v171 = vmul.f32 %v58, %v170
  %172 = vst.msk [vmem:[%s2] sm:$0xff] %vm75, %v141
  %173 = vst.msk [vmem:[%s2 + $0x8] sm:$0xff] %vm75, %v143
  %174 = vst.msk [vmem:[%s2 + $0x10] sm:$0xff] %vm75, %v145
  %175 = vst.msk [vmem:[%s2 + $0x18] sm:$0xff] %vm75, %v147
  %176 = vst.msk [vmem:[%s2 + $0x20] sm:$0xff] %vm75, %v149
  %177 = vst.msk [vmem:[%s2 + $0x28] sm:$0xff] %vm75, %v151
  %178 = vst.msk [vmem:[%s2 + $0x30] sm:$0xff] %vm75, %v153
  %179 = vst.msk [vmem:[%s2 + $0x38] sm:$0xff] %vm75, %v155
  %180 = vst.msk [vmem:[%s2 + $0x40] sm:$0xff] %vm75, %v157
  %181 = vst.msk [vmem:[%s2 + $0x48] sm:$0xff] %vm75, %v159
  %182 = vst.msk [vmem:[%s2 + $0x50] sm:$0xff] %vm75, %v161
  %183 = vst.msk [vmem:[%s2 + $0x58] sm:$0xff] %vm75, %v163
  %184 = vst.msk [vmem:[%s2 + $0x60] sm:$0xff] %vm75, %v165
  %185 = vst.msk [vmem:[%s2 + $0x68] sm:$0xff] %vm75, %v167
  %186 = vst.msk [vmem:[%s2 + $0x70] sm:$0xff] %vm75, %v169
  %187 = vst.msk [vmem:[%s2 + $0x78] sm:$0xff] %vm75, %v171
  // Predicated region
  $region10: #{smn_forward.2} parent=0 // pred_check
    _
  $region11: #{smn_forward.2} parent=0 // pred_check_branch
    %189 = sbr.rel (0) target = $region13
  $region12: #{smn_forward.2} parent=0 // pred_region
    _
  $region13: #{smn_forward.2} parent=0 // pred_fallthru
    _
  // Predicated region
  $region14: #{smn_forward.2} parent=0 // pred_check
    _
  $region15: #{smn_forward.2} parent=0 // pred_check_branch
    %191 = sbr.rel (0) target = $region17
  $region16: #{smn_forward.2} parent=0 // pred_region
    _
  $region17: #{smn_forward.2} parent=0 // pred_fallthru
    _

// kernel: smn_forward.3
$region0: #{smn_forward.3}
  #allocation0 [shape = 'u32[]', space=smem, size = 0x4, offset = 0x4, fixed_abs, tag = 'smem constant byte address 0x4 - core index']
  #allocation1 [shape = 'u32[144,128]{1,0:T(1,128)}', space=vmem, size = 0x12000, scoped, tag = 'internal scratch']
  %s0 = inlined_call_operand.hbm [shape: f32[256,64], index: 0, kind: input, shape index: {}]
  %s1 = inlined_call_operand.hbm [shape: f32[256,64], index: 1, kind: input, shape index: {}]
  %s2 = inlined_call_operand.hbm [shape: f32[256,64], index: 2, kind: input, shape index: {}]
  %s3 = inlined_call_operand.hbm [shape: f32[64,128], index: 3, kind: input, shape index: {}]
  %s4 = inlined_call_operand.hbm [shape: f32[1,128], index: 4, kind: input, shape index: {}]
  %s5 = inlined_call_operand.hbm [shape: f32[3,128], index: 5, kind: input, shape index: {}]
  %s6 = inlined_call_operand.hbm [shape: f32[128,128], index: 6, kind: input, shape index: {}]
  %s7 = inlined_call_operand.hbm [shape: f32[1,128], index: 7, kind: input, shape index: {}]
  %s8 = inlined_call_operand.hbm [shape: f32[128,128], index: 8, kind: input, shape index: {}]
  %s9 = inlined_call_operand.hbm [shape: f32[256,128], index: 9, kind: output, shape index: {0}]
  %s10 = inlined_call_operand.hbm [shape: f32[256,128], index: 10, kind: output, shape index: {1}]
  %s11 = inlined_call_operand.hbm [shape: f32[256,128], index: 11, kind: output, shape index: {2}]
  %12 = xla_tuple %s9, %s10, %s11
  %s13 = sld [smem:[#allocation0]]
  $region121: #{smn_forward.3} parent=0
    _
  %s15 = ssub.s32 1, %s13
  %s16 = scalar_select 0, %s15, %s13
  $region1: #{smn_forward.3} parent=0
    #allocation2 [shape = 'u8[131072]{0}', space=vmem, size = 0x20000, scoped, tag = 'input window, operand 0']
    #allocation3 [shape = 's32[2]{0}', space=sflag, size = 0x8, scoped, tag = 'scoped memory for smn_forward.3']
    #allocation4 [shape = 's32[2]{0}', space=sflag, size = 0x8, scoped, tag = 'scoped memory for smn_forward.3']
    #allocation5 [shape = 'u8[131072]{0}', space=vmem, size = 0x20000, scoped, tag = 'input window, operand 1']
    #allocation6 [shape = 's32[2]{0}', space=sflag, size = 0x8, scoped, tag = 'scoped memory for smn_forward.3']
    #allocation7 [shape = 'u8[131072]{0}', space=vmem, size = 0x20000, scoped, tag = 'input window, operand 2']
    #allocation8 [shape = 'u8[32768]{0}', space=vmem, size = 0x8000, scoped, tag = 'input window, operand 3, single buffered']
    #allocation9 [shape = 's32[1]{0}', space=sflag, size = 0x4, scoped, tag = 'scoped memory for smn_forward.3']
    #allocation10 [shape = 'u8[512]{0}', space=vmem, size = 0x400, scoped, tag = 'input window, operand 4, single buffered']
    #allocation11 [shape = 'u8[2048]{0}', space=vmem, size = 0x800, scoped, tag = 'input window, operand 5, single buffered']
    #allocation12 [shape = 's32[1]{0}', space=sflag, size = 0x4, scoped, tag = 'scoped memory for smn_forward.3']
    #allocation13 [shape = 'u8[65536]{0}', space=vmem, size = 0x10000, scoped, tag = 'input window, operand 6, single buffered']
    #allocation14 [shape = 'u8[512]{0}', space=vmem, size = 0x400, scoped, tag = 'input window, operand 7, single buffered']
    #allocation15 [shape = 's32[1]{0}', space=sflag, size = 0x4, scoped, tag = 'scoped memory for smn_forward.3']
    #allocation16 [shape = 'u8[65536]{0}', space=vmem, size = 0x10000, scoped, tag = 'input window, operand 8, single buffered']
    #allocation17 [shape = 'u8[131072]{0}', space=vmem, size = 0x20000, scoped, tag = 'output window, operand 0']
    #allocation18 [shape = 'u8[131072]{0}', space=vmem, size = 0x20000, scoped, tag = 'output window, operand 1']
    #allocation19 [shape = 's32[2]{0}', space=sflag, size = 0x8, scoped, tag = 'scoped memory for smn_forward.3']
    #allocation20 [shape = 'u8[131072]{0}', space=vmem, size = 0x20000, scoped, tag = 'output window, operand 2']
    %17 = vsyncpa [#allocation3], 0
    %s18 = scalar_lea.sflag [#allocation3], 1
    %19 = vsyncpa %s18, 0
    %20 = vsyncpa [#allocation6], 0
    %s21 = scalar_lea.sflag [#allocation6], 1
    %22 = vsyncpa %s21, 0
    %23 = vsyncpa [#allocation9], 0
    %24 = vsyncpa [#allocation12], 0
    %25 = vsyncpa [#allocation15], 0
    %26 = vsyncpa [#allocation4], 0
    %s27 = scalar_lea.sflag [#allocation4], 1
    %28 = vsyncpa %s27, 0
    %29 = vsyncpa [#allocation19], 0
    %s30 = scalar_lea.sflag [#allocation19], 1
    %31 = vsyncpa %s30, 0
    loop: start=0, step=1, limit=4
    $region2: #{smn_forward.3} parent=1 // loop_pre_header
      _
    $region3: #{smn_forward.3} parent=1 // loop_header
      %s33 = sphi 0, %s37
      %p34 = scmp.ge.s32.totalorder %s33, 4
      %s43 = sphi 0, %s45
      %s46 = sphi 0, %s43
      %s47 = sphi 0, %s46
      %s63 = sphi 0, %s47
      %s69 = sphi 0, %s71
      %s72 = sphi 0, %s69
      %s73 = sphi 0, %s72
      %s89 = sphi 0, %s73
      %s95 = sphi 0, %s97
      %s98 = sphi 0, %s95
      %s99 = sphi 0, %s98
      %s115 = sphi 0, %s99
      %s119 = sphi 0, %s119
      %s121 = sphi 0, %s119
      %s122 = sphi 0, %s121
      %s136 = sphi 0, %s122
      %s140 = sphi 0, %s140
      %s142 = sphi 0, %s140
      %s143 = sphi 0, %s142
      %s157 = sphi 0, %s143
      %s161 = sphi 0, %s161
      %s163 = sphi 0, %s161
      %s164 = sphi 0, %s163
      %s178 = sphi 0, %s164
      %s182 = sphi 0, %s182
      %s184 = sphi 0, %s182
      %s185 = sphi 0, %s184
      %s199 = sphi 0, %s185
      %s203 = sphi 0, %s203
      %s205 = sphi 0, %s203
      %s206 = sphi 0, %s205
      %s220 = sphi 0, %s206
      %s224 = sphi 0, %s224
      %s226 = sphi 0, %s224
      %s227 = sphi 0, %s226
      %s241 = sphi 0, %s227
      %s247 = sphi 0, %s249
      %s250 = sphi 0, %s247
      %s251 = sphi 0, %s250
      %s267 = sphi 0, %s251
      %s273 = sphi 0, %s275
      %s276 = sphi 0, %s273
      %s277 = sphi 0, %s276
      %s293 = sphi 0, %s277
      %s299 = sphi 0, %s301
      %s302 = sphi 0, %s299
      %s303 = sphi 0, %s302
      %s319 = sphi 0, %s303
    $region4: #{smn_forward.3} parent=1 // loop_header_branch
      %36 = sbr.rel (%p34) target = $region8
    $region5: #{smn_forward.3} parent=1 // loop_body
      %s38 = ssub.s32 %s33, 1
      %s39 = ssub.s32 %s33, 2
      %s40 = sadd.s32 %s33, 1
      %s41 = ssub.s32 %s33, %s40
      %p42 = scmp.eq.s32.totalorder %s41, 0
      %s44 = sadd.s32 %s43, 1
      %s45 = scalar_select %p42, %s43, %s44
      %p48 = pneg %p42
      %p49 = scmp.eq.s32.totalorder %s33, 1
      %p50 = por %p48, %p49
      %p51 = scmp.ne.s32.totalorder %s43, %s46
      %p52 = scmp.eq.s32.totalorder %s33, 0
      %p53 = por %p51, %p52
      %p54 = scmp.ne.s32.totalorder %s43, %s46
      %p55 = scmp.eq.s32.totalorder %s38, 1
      %p56 = por %p54, %p55
      %p57 = scmp.ne.s32.totalorder %s46, %s47
      %p58 = scmp.eq.s32.totalorder %s38, 0
      %p59 = por %p57, %p58
      %p60 = scmp.ne.s32.totalorder %s46, %s47
      %p61 = scmp.eq.s32.totalorder %s39, 1
      %p62 = por %p60, %p61
      %p64 = scmp.ne.s32.totalorder %s47, %s63
      %p65 = scmp.eq.s32.totalorder %s39, 0
      %p66 = por %p64, %p65
      %s67 = ssub.s32 %s33, %s40
      %p68 = scmp.eq.s32.totalorder %s67, 0
      %s70 = sadd.s32 %s69, 1
      %s71 = scalar_select %p68, %s69, %s70
      %p74 = pneg %p68
      %p75 = scmp.eq.s32.totalorder %s33, 1
      %p76 = por %p74, %p75
      %p77 = scmp.ne.s32.totalorder %s69, %s72
      %p78 = scmp.eq.s32.totalorder %s33, 0
      %p79 = por %p77, %p78
      %p80 = scmp.ne.s32.totalorder %s69, %s72
      %p81 = scmp.eq.s32.totalorder %s38, 1
      %p82 = por %p80, %p81
      %p83 = scmp.ne.s32.totalorder %s72, %s73
      %p84 = scmp.eq.s32.totalorder %s38, 0
      %p85 = por %p83, %p84
      %p86 = scmp.ne.s32.totalorder %s72, %s73
      %p87 = scmp.eq.s32.totalorder %s39, 1
      %p88 = por %p86, %p87
      %p90 = scmp.ne.s32.totalorder %s73, %s89
      %p91 = scmp.eq.s32.totalorder %s39, 0
      %p92 = por %p90, %p91
      %s93 = ssub.s32 %s33, %s40
      %p94 = scmp.eq.s32.totalorder %s93, 0
      %s96 = sadd.s32 %s95, 1
      %s97 = scalar_select %p94, %s95, %s96
      %p100 = pneg %p94
      %p101 = scmp.eq.s32.totalorder %s33, 1
      %p102 = por %p100, %p101
      %p103 = scmp.ne.s32.totalorder %s95, %s98
      %p104 = scmp.eq.s32.totalorder %s33, 0
      %p105 = por %p103, %p104
      %p106 = scmp.ne.s32.totalorder %s95, %s98
      %p107 = scmp.eq.s32.totalorder %s38, 1
      %p108 = por %p106, %p107
      %p109 = scmp.ne.s32.totalorder %s98, %s99
      %p110 = scmp.eq.s32.totalorder %s38, 0
      %p111 = por %p109, %p110
      %p112 = scmp.ne.s32.totalorder %s98, %s99
      %p113 = scmp.eq.s32.totalorder %s39, 1
      %p114 = por %p112, %p113
      %p116 = scmp.ne.s32.totalorder %s99, %s115
      %p117 = scmp.eq.s32.totalorder %s39, 0
      %p118 = por %p116, %p117
      %s120 = sadd.s32 %s119, 1
      %p123 = scmp.eq.s32.totalorder %s33, 1
      %p124 = scmp.ne.s32.totalorder %s119, %s121
      %p125 = scmp.eq.s32.totalorder %s33, 0
      %p126 = por %p124, %p125
      %p127 = scmp.ne.s32.totalorder %s119, %s121
      %p128 = scmp.eq.s32.totalorder %s38, 1
      %p129 = por %p127, %p128
      %p130 = scmp.ne.s32.totalorder %s121, %s122
      %p131 = scmp.eq.s32.totalorder %s38, 0
      %p132 = por %p130, %p131
      %p133 = scmp.ne.s32.totalorder %s121, %s122
      %p134 = scmp.eq.s32.totalorder %s39, 1
      %p135 = por %p133, %p134
      %p137 = scmp.ne.s32.totalorder %s122, %s136
      %p138 = scmp.eq.s32.totalorder %s39, 0
      %p139 = por %p137, %p138
      %s141 = sadd.s32 %s140, 1
      %p144 = scmp.eq.s32.totalorder %s33, 1
      %p145 = scmp.ne.s32.totalorder %s140, %s142
      %p146 = scmp.eq.s32.totalorder %s33, 0
      %p147 = por %p145, %p146
      %p148 = scmp.ne.s32.totalorder %s140, %s142
      %p149 = scmp.eq.s32.totalorder %s38, 1
      %p150 = por %p148, %p149
      %p151 = scmp.ne.s32.totalorder %s142, %s143
      %p152 = scmp.eq.s32.totalorder %s38, 0
      %p153 = por %p151, %p152
      %p154 = scmp.ne.s32.totalorder %s142, %s143
      %p155 = scmp.eq.s32.totalorder %s39, 1
      %p156 = por %p154, %p155
      %p158 = scmp.ne.s32.totalorder %s143, %s157
      %p159 = scmp.eq.s32.totalorder %s39, 0
      %p160 = por %p158, %p159
      %s162 = sadd.s32 %s161, 1
      %p165 = scmp.eq.s32.totalorder %s33, 1
      %p166 = scmp.ne.s32.totalorder %s161, %s163
      %p167 = scmp.eq.s32.totalorder %s33, 0
      %p168 = por %p166, %p167
      %p169 = scmp.ne.s32.totalorder %s161, %s163
      %p170 = scmp.eq.s32.totalorder %s38, 1
      %p171 = por %p169, %p170
      %p172 = scmp.ne.s32.totalorder %s163, %s164
      %p173 = scmp.eq.s32.totalorder %s38, 0
      %p174 = por %p172, %p173
      %p175 = scmp.ne.s32.totalorder %s163, %s164
      %p176 = scmp.eq.s32.totalorder %s39, 1
      %p177 = por %p175, %p176
      %p179 = scmp.ne.s32.totalorder %s164, %s178
      %p180 = scmp.eq.s32.totalorder %s39, 0
      %p181 = por %p179, %p180
      %s183 = sadd.s32 %s182, 1
      %p186 = scmp.eq.s32.totalorder %s33, 1
      %p187 = scmp.ne.s32.totalorder %s182, %s184
      %p188 = scmp.eq.s32.totalorder %s33, 0
      %p189 = por %p187, %p188
      %p190 = scmp.ne.s32.totalorder %s182, %s184
      %p191 = scmp.eq.s32.totalorder %s38, 1
      %p192 = por %p190, %p191
      %p193 = scmp.ne.s32.totalorder %s184, %s185
      %p194 = scmp.eq.s32.totalorder %s38, 0
      %p195 = por %p193, %p194
      %p196 = scmp.ne.s32.totalorder %s184, %s185
      %p197 = scmp.eq.s32.totalorder %s39, 1
      %p198 = por %p196, %p197
      %p200 = scmp.ne.s32.totalorder %s185, %s199
      %p201 = scmp.eq.s32.totalorder %s39, 0
      %p202 = por %p200, %p201
      %s204 = sadd.s32 %s203, 1
      %p207 = scmp.eq.s32.totalorder %s33, 1
      %p208 = scmp.ne.s32.totalorder %s203, %s205
      %p209 = scmp.eq.s32.totalorder %s33, 0
      %p210 = por %p208, %p209
      %p211 = scmp.ne.s32.totalorder %s203, %s205
      %p212 = scmp.eq.s32.totalorder %s38, 1
      %p213 = por %p211, %p212
      %p214 = scmp.ne.s32.totalorder %s205, %s206
      %p215 = scmp.eq.s32.totalorder %s38, 0
      %p216 = por %p214, %p215
      %p217 = scmp.ne.s32.totalorder %s205, %s206
      %p218 = scmp.eq.s32.totalorder %s39, 1
      %p219 = por %p217, %p218
      %p221 = scmp.ne.s32.totalorder %s206, %s220
      %p222 = scmp.eq.s32.totalorder %s39, 0
      %p223 = por %p221, %p222
      %s225 = sadd.s32 %s224, 1
      %p228 = scmp.eq.s32.totalorder %s33, 1
      %p229 = scmp.ne.s32.totalorder %s224, %s226
      %p230 = scmp.eq.s32.totalorder %s33, 0
      %p231 = por %p229, %p230
      %p232 = scmp.ne.s32.totalorder %s224, %s226
      %p233 = scmp.eq.s32.totalorder %s38, 1
      %p234 = por %p232, %p233
      %p235 = scmp.ne.s32.totalorder %s226, %s227
      %p236 = scmp.eq.s32.totalorder %s38, 0
      %p237 = por %p235, %p236
      %p238 = scmp.ne.s32.totalorder %s226, %s227
      %p239 = scmp.eq.s32.totalorder %s39, 1
      %p240 = por %p238, %p239
      %p242 = scmp.ne.s32.totalorder %s227, %s241
      %p243 = scmp.eq.s32.totalorder %s39, 0
      %p244 = por %p242, %p243
      %s245 = ssub.s32 %s33, %s40
      %p246 = scmp.eq.s32.totalorder %s245, 0
      %s248 = sadd.s32 %s247, 1
      %s249 = scalar_select %p246, %s247, %s248
      %p252 = pneg %p246
      %p253 = scmp.eq.s32.totalorder %s33, 1
      %p254 = por %p252, %p253
      %p255 = scmp.ne.s32.totalorder %s247, %s250
      %p256 = scmp.eq.s32.totalorder %s33, 0
      %p257 = por %p255, %p256
      %p258 = scmp.ne.s32.totalorder %s247, %s250
      %p259 = scmp.eq.s32.totalorder %s38, 1
      %p260 = por %p258, %p259
      %p261 = scmp.ne.s32.totalorder %s250, %s251
      %p262 = scmp.eq.s32.totalorder %s38, 0
      %p263 = por %p261, %p262
      %p264 = scmp.ne.s32.totalorder %s250, %s251
      %p265 = scmp.eq.s32.totalorder %s39, 1
      %p266 = por %p264, %p265
      %p268 = scmp.ne.s32.totalorder %s251, %s267
      %p269 = scmp.eq.s32.totalorder %s39, 0
      %p270 = por %p268, %p269
      %s271 = ssub.s32 %s33, %s40
      %p272 = scmp.eq.s32.totalorder %s271, 0
      %s274 = sadd.s32 %s273, 1
      %s275 = scalar_select %p272, %s273, %s274
      %p278 = pneg %p272
      %p279 = scmp.eq.s32.totalorder %s33, 1
      %p280 = por %p278, %p279
      %p281 = scmp.ne.s32.totalorder %s273, %s276
      %p282 = scmp.eq.s32.totalorder %s33, 0
      %p283 = por %p281, %p282
      %p284 = scmp.ne.s32.totalorder %s273, %s276
      %p285 = scmp.eq.s32.totalorder %s38, 1
      %p286 = por %p284, %p285
      %p287 = scmp.ne.s32.totalorder %s276, %s277
      %p288 = scmp.eq.s32.totalorder %s38, 0
      %p289 = por %p287, %p288
      %p290 = scmp.ne.s32.totalorder %s276, %s277
      %p291 = scmp.eq.s32.totalorder %s39, 1
      %p292 = por %p290, %p291
      %p294 = scmp.ne.s32.totalorder %s277, %s293
      %p295 = scmp.eq.s32.totalorder %s39, 0
      %p296 = por %p294, %p295
      %s297 = ssub.s32 %s33, %s40
      %p298 = scmp.eq.s32.totalorder %s297, 0
      %s300 = sadd.s32 %s299, 1
      %s301 = scalar_select %p298, %s299, %s300
      %p304 = pneg %p298
      %p305 = scmp.eq.s32.totalorder %s33, 1
      %p306 = por %p304, %p305
      %p307 = scmp.ne.s32.totalorder %s299, %s302
      %p308 = scmp.eq.s32.totalorder %s33, 0
      %p309 = por %p307, %p308
      %p310 = scmp.ne.s32.totalorder %s299, %s302
      %p311 = scmp.eq.s32.totalorder %s38, 1
      %p312 = por %p310, %p311
      %p313 = scmp.ne.s32.totalorder %s302, %s303
      %p314 = scmp.eq.s32.totalorder %s38, 0
      %p315 = por %p313, %p314
      %p316 = scmp.ne.s32.totalorder %s302, %s303
      %p317 = scmp.eq.s32.totalorder %s39, 1
      %p318 = por %p316, %p317
      %p320 = scmp.ne.s32.totalorder %s303, %s319
      %p321 = scmp.eq.s32.totalorder %s39, 0
      %p322 = por %p320, %p321
      %p323 = scmp.le.s32.totalorder 1, %s33
      %p324 = scmp.lt.s32.totalorder %s33, 3
      %p325 = pnand %p323, %p324
      %p326 = pneg %p325
      // Predicated region
      $region9: #{smn_forward.3} parent=5 // pred_check
        _
      $region10: #{smn_forward.3} parent=5 // pred_check_branch
        %328 = sbr.rel (%p325) target = $region12
      $region11: #{smn_forward.3} parent=5 // pred_region
        %s329 = ssub.s32 %s33, 1
        // Predicated region
        $region13: #{smn_forward.3} parent=11 // pred_check
          %p330 = pneg %p132
        $region14: #{smn_forward.3} parent=11 // pred_check_branch
          %332 = sbr.rel (%p330) target = $region16
        $region15: #{smn_forward.3} parent=11 // pred_region
          %s334 = ssub.s32 1024, 1024
          %335 = vsyncadd [#allocation9], %s334
          %s336 = sshll.u32 [#allocation8], 4
          %s337 = int_to_ptr.vmem [resolvable:$true] %s336
          %342 = dma.hbm_to_vmem [thread:$0]  %s3, 1024, %s337, [#allocation9], 128, 128, 8
        $region16: #{smn_forward.3} parent=11 // pred_fallthru
          _
        // Predicated region
        $region17: #{smn_forward.3} parent=11 // pred_check
          %p343 = pneg %p153
        $region18: #{smn_forward.3} parent=11 // pred_check_branch
          %345 = sbr.rel (%p343) target = $region20
        $region19: #{smn_forward.3} parent=11 // pred_region
          %s347 = ssub.s32 16, 16
          %348 = vsyncadd [#allocation9], %s347
          %s350 = sshll.u32 [#allocation10], 4
          %s351 = int_to_ptr.vmem [resolvable:$true] %s350
          %353 = dma.hbm_to_vmem [thread:$0]  %s4, 16, %s351, [#allocation9]
        $region20: #{smn_forward.3} parent=11 // pred_fallthru
          _
        // Predicated region
        $region21: #{smn_forward.3} parent=11 // pred_check
          %p354 = pneg %p174
        $region22: #{smn_forward.3} parent=11 // pred_check_branch
          %356 = sbr.rel (%p354) target = $region24
        $region23: #{smn_forward.3} parent=11 // pred_region
          %s358 = ssub.s32 64, 64
          %359 = vsyncadd [#allocation12], %s358
          %s361 = sshll.u32 [#allocation11], 4
          %s362 = int_to_ptr.vmem [resolvable:$true] %s361
          %364 = dma.hbm_to_vmem [thread:$0]  %s5, 64, %s362, [#allocation12]
        $region24: #{smn_forward.3} parent=11 // pred_fallthru
          _
        // Predicated region
        $region25: #{smn_forward.3} parent=11 // pred_check
          %p365 = pneg %p195
        $region26: #{smn_forward.3} parent=11 // pred_check_branch
          %367 = sbr.rel (%p365) target = $region28
        $region27: #{smn_forward.3} parent=11 // pred_region
          %s369 = ssub.s32 2048, 2048
          %370 = vsyncadd [#allocation12], %s369
          %s371 = sshll.u32 [#allocation13], 4
          %s372 = int_to_ptr.vmem [resolvable:$true] %s371
          %377 = dma.hbm_to_vmem [thread:$0]  %s6, 2048, %s372, [#allocation12], 128, 128, 8
        $region28: #{smn_forward.3} parent=11 // pred_fallthru
          _
        // Predicated region
        $region29: #{smn_forward.3} parent=11 // pred_check
          %p378 = pneg %p216
        $region30: #{smn_forward.3} parent=11 // pred_check_branch
          %380 = sbr.rel (%p378) target = $region32
        $region31: #{smn_forward.3} parent=11 // pred_region
          %s382 = ssub.s32 16, 16
          %383 = vsyncadd [#allocation15], %s382
          %s385 = sshll.u32 [#allocation14], 4
          %s386 = int_to_ptr.vmem [resolvable:$true] %s385
          %388 = dma.hbm_to_vmem [thread:$0]  %s7, 16, %s386, [#allocation15]
        $region32: #{smn_forward.3} parent=11 // pred_fallthru
          _
        // Predicated region
        $region33: #{smn_forward.3} parent=11 // pred_check
          %p389 = pneg %p237
        $region34: #{smn_forward.3} parent=11 // pred_check_branch
          %391 = sbr.rel (%p389) target = $region36
        $region35: #{smn_forward.3} parent=11 // pred_region
          %s393 = ssub.s32 2048, 2048
          %394 = vsyncadd [#allocation15], %s393
          %s395 = sshll.u32 [#allocation16], 4
          %s396 = int_to_ptr.vmem [resolvable:$true] %s395
          %401 = dma.hbm_to_vmem [thread:$0]  %s8, 2048, %s396, [#allocation15], 128, 128, 8
        $region36: #{smn_forward.3} parent=11 // pred_fallthru
          _
      $region12: #{smn_forward.3} parent=5 // pred_fallthru
        _
      %p402 = scmp.lt.s32.totalorder %s33, 2
      // Predicated region
      $region37: #{smn_forward.3} parent=5 // pred_check
        %p403 = pneg %p402
      $region38: #{smn_forward.3} parent=5 // pred_check_branch
        %405 = sbr.rel (%p403) target = $region40
      $region39: #{smn_forward.3} parent=5 // pred_region
        // Predicated region
        $region41: #{smn_forward.3} parent=39 // pred_check
          %p406 = pneg %p53
        $region42: #{smn_forward.3} parent=39 // pred_check_branch
          %408 = sbr.rel (%p406) target = $region44
        $region43: #{smn_forward.3} parent=39 // pred_region
          %s409 = sand.u32 %s43, 1
          %s410 = scalar_lea.sflag [#allocation3], %s409
          %s411 = sand.u32 %s43, 1
          %s412 = smul.addr %s411, 128
          %s413 = scalar_lea.vmem [#allocation2], %s412
          %s414 = smul.u32 16, %s33
          %s416 = ssub.s32 2048, 2048
          %417 = vsyncadd %s410, %s416
          %s418 = smul.addr %s414, 128
          %s419 = scalar_lea.hbm %s0, %s418
          %s420 = sshll.u32 %s413, 4
          %s421 = int_to_ptr.vmem [resolvable:$true] %s420
          %426 = dma.hbm_to_vmem [thread:$0]  %s419, 2048, %s421, %s410, 128, 128, 8
        $region44: #{smn_forward.3} parent=39 // pred_fallthru
          _
        // Predicated region
        $region45: #{smn_forward.3} parent=39 // pred_check
          %p427 = pneg %p79
        $region46: #{smn_forward.3} parent=39 // pred_check_branch
          %429 = sbr.rel (%p427) target = $region48
        $region47: #{smn_forward.3} parent=39 // pred_region
          %s430 = sand.u32 %s33, 1
          %s431 = scalar_lea.sflag [#allocation6], %s430
          %s432 = sand.u32 %s69, 1
          %s433 = smul.addr %s432, 128
          %s434 = scalar_lea.vmem [#allocation5], %s433
          %s435 = smul.u32 16, %s33
          %s437 = ssub.s32 2048, 2048
          %438 = vsyncadd %s431, %s437
          %s439 = smul.addr %s435, 128
          %s440 = scalar_lea.hbm %s1, %s439
          %s441 = sshll.u32 %s434, 4
          %s442 = int_to_ptr.vmem [resolvable:$true] %s441
          %447 = dma.hbm_to_vmem [thread:$0]  %s440, 2048, %s442, %s431, 128, 128, 8
        $region48: #{smn_forward.3} parent=39 // pred_fallthru
          _
        // Predicated region
        $region49: #{smn_forward.3} parent=39 // pred_check
          %p448 = pneg %p105
        $region50: #{smn_forward.3} parent=39 // pred_check_branch
          %450 = sbr.rel (%p448) target = $region52
        $region51: #{smn_forward.3} parent=39 // pred_region
          %s451 = sand.u32 %s33, 1
          %s452 = scalar_lea.sflag [#allocation6], %s451
          %s453 = sand.u32 %s95, 1
          %s454 = smul.addr %s453, 128
          %s455 = scalar_lea.vmem [#allocation7], %s454
          %s456 = smul.u32 16, %s33
          %s458 = ssub.s32 2048, 2048
          %459 = vsyncadd %s452, %s458
          %s460 = smul.addr %s456, 128
          %s461 = scalar_lea.hbm %s2, %s460
          %s462 = sshll.u32 %s455, 4
          %s463 = int_to_ptr.vmem [resolvable:$true] %s462
          %468 = dma.hbm_to_vmem [thread:$0]  %s461, 2048, %s463, %s452, 128, 128, 8
        $region52: #{smn_forward.3} parent=39 // pred_fallthru
          _
      $region40: #{smn_forward.3} parent=5 // pred_fallthru
        _
      %p469 = scmp.le.s32.totalorder 1, %s33
      %p470 = scmp.lt.s32.totalorder %s33, 3
      %p471 = pnand %p469, %p470
      %p472 = pneg %p471
      // Predicated region
      $region53: #{smn_forward.3} parent=5 // pred_check
        _
      $region54: #{smn_forward.3} parent=5 // pred_check_branch
        %474 = sbr.rel (%p471) target = $region56
      $region55: #{smn_forward.3} parent=5 // pred_region
        %s475 = ssub.s32 %s33, 1
        %s476 = sand.u32 %s46, 1
        %s477 = scalar_lea.sflag [#allocation3], %s476
        %s478 = sand.u32 %s46, 1
        %s479 = smul.addr %s478, 128
        %s480 = scalar_lea.vmem [#allocation2], %s479
        // Predicated region
        $region57: #{smn_forward.3} parent=55 // pred_check
          %p481 = pneg %p59
        $region58: #{smn_forward.3} parent=55 // pred_check_branch
          %483 = sbr.rel (%p481) target = $region60
        $region59: #{smn_forward.3} parent=55 // pred_region
          %484 = dma.done %s477, 2048
        $region60: #{smn_forward.3} parent=55 // pred_fallthru
          _
        %s485 = sand.u32 %s38, 1
        %s486 = scalar_lea.sflag [#allocation6], %s485
        %s487 = sand.u32 %s72, 1
        %s488 = smul.addr %s487, 128
        %s489 = scalar_lea.vmem [#allocation5], %s488
        // Predicated region
        $region61: #{smn_forward.3} parent=55 // pred_check
          %p490 = pneg %p85
        $region62: #{smn_forward.3} parent=55 // pred_check_branch
          %492 = sbr.rel (%p490) target = $region64
        $region63: #{smn_forward.3} parent=55 // pred_region
          %493 = dma.done %s486, 2048
        $region64: #{smn_forward.3} parent=55 // pred_fallthru
          _
        %s494 = sand.u32 %s38, 1
        %s495 = scalar_lea.sflag [#allocation6], %s494
        %s496 = sand.u32 %s98, 1
        %s497 = smul.addr %s496, 128
        %s498 = scalar_lea.vmem [#allocation7], %s497
        // Predicated region
        $region65: #{smn_forward.3} parent=55 // pred_check
          %p499 = pneg %p111
        $region66: #{smn_forward.3} parent=55 // pred_check_branch
          %501 = sbr.rel (%p499) target = $region68
        $region67: #{smn_forward.3} parent=55 // pred_region
          %502 = dma.done %s495, 2048
        $region68: #{smn_forward.3} parent=55 // pred_fallthru
          _
        // Predicated region
        $region69: #{smn_forward.3} parent=55 // pred_check
          %p503 = pneg %p132
        $region70: #{smn_forward.3} parent=55 // pred_check_branch
          %505 = sbr.rel (%p503) target = $region72
        $region71: #{smn_forward.3} parent=55 // pred_region
          %506 = dma.done [#allocation9], 1024
        $region72: #{smn_forward.3} parent=55 // pred_fallthru
          _
        // Predicated region
        $region73: #{smn_forward.3} parent=55 // pred_check
          %p507 = pneg %p153
        $region74: #{smn_forward.3} parent=55 // pred_check_branch
          %509 = sbr.rel (%p507) target = $region76
        $region75: #{smn_forward.3} parent=55 // pred_region
          %510 = dma.done [#allocation9], 16
        $region76: #{smn_forward.3} parent=55 // pred_fallthru
          _
        // Predicated region
        $region77: #{smn_forward.3} parent=55 // pred_check
          %p511 = pneg %p174
        $region78: #{smn_forward.3} parent=55 // pred_check_branch
          %513 = sbr.rel (%p511) target = $region80
        $region79: #{smn_forward.3} parent=55 // pred_region
          %514 = dma.done [#allocation12], 64
        $region80: #{smn_forward.3} parent=55 // pred_fallthru
          _
        // Predicated region
        $region81: #{smn_forward.3} parent=55 // pred_check
          %p515 = pneg %p195
        $region82: #{smn_forward.3} parent=55 // pred_check_branch
          %517 = sbr.rel (%p515) target = $region84
        $region83: #{smn_forward.3} parent=55 // pred_region
          %518 = dma.done [#allocation12], 2048
        $region84: #{smn_forward.3} parent=55 // pred_fallthru
          _
        // Predicated region
        $region85: #{smn_forward.3} parent=55 // pred_check
          %p519 = pneg %p216
        $region86: #{smn_forward.3} parent=55 // pred_check_branch
          %521 = sbr.rel (%p519) target = $region88
        $region87: #{smn_forward.3} parent=55 // pred_region
          %522 = dma.done [#allocation15], 16
        $region88: #{smn_forward.3} parent=55 // pred_fallthru
          _
        // Predicated region
        $region89: #{smn_forward.3} parent=55 // pred_check
          %p523 = pneg %p237
        $region90: #{smn_forward.3} parent=55 // pred_check_branch
          %525 = sbr.rel (%p523) target = $region92
        $region91: #{smn_forward.3} parent=55 // pred_region
          %526 = dma.done [#allocation15], 2048
        $region92: #{smn_forward.3} parent=55 // pred_fallthru
          _
        %s527 = sand.u32 %s46, 1
        %s528 = scalar_lea.sflag [#allocation3], %s527
        %s529 = sand.u32 %s46, 1
        %s530 = smul.addr %s529, 128
        %s531 = scalar_lea.vmem [#allocation2], %s530
        %p532 = pneg %p59
        %p533 = pneg %p56
        %s534 = sand.u32 %s38, 1
        %s535 = scalar_lea.sflag [#allocation6], %s534
        %s536 = sand.u32 %s72, 1
        %s537 = smul.addr %s536, 128
        %s538 = scalar_lea.vmem [#allocation5], %s537
        %p539 = pneg %p85
        %p540 = pneg %p82
        %s541 = sand.u32 %s38, 1
        %s542 = scalar_lea.sflag [#allocation6], %s541
        %s543 = sand.u32 %s98, 1
        %s544 = smul.addr %s543, 128
        %s545 = scalar_lea.vmem [#allocation7], %s544
        %p546 = pneg %p111
        %p547 = pneg %p108
        %p548 = pneg %p132
        %p549 = pneg %p129
        %p550 = pneg %p153
        %p551 = pneg %p150
        %p552 = pneg %p174
        %p553 = pneg %p171
        %p554 = pneg %p195
        %p555 = pneg %p192
        %p556 = pneg %p216
        %p557 = pneg %p213
        %p558 = pneg %p237
        %p559 = pneg %p234
        %p560 = pneg %p263
        %p561 = pneg %p260
        %s562 = sand.u32 %s250, 1
        %s563 = scalar_lea.sflag [#allocation4], %s562
        %s564 = sand.u32 %s250, 1
        %s565 = smul.addr %s564, 128
        %s566 = scalar_lea.vmem [#allocation17], %s565
        %p567 = pneg %p289
        %p568 = pneg %p286
        %s569 = sand.u32 %s38, 1
        %s570 = scalar_lea.sflag [#allocation19], %s569
        %s571 = sand.u32 %s276, 1
        %s572 = smul.addr %s571, 128
        %s573 = scalar_lea.vmem [#allocation18], %s572
        %p574 = pneg %p315
        %p575 = pneg %p312
        %s576 = sand.u32 %s38, 1
        %s577 = scalar_lea.sflag [#allocation19], %s576
        %s578 = sand.u32 %s302, 1
        %s579 = smul.addr %s578, 128
        %s580 = scalar_lea.vmem [#allocation20], %s579
        %s581 = smul.u32 16, %s38
        %s582 = smul.u32 16, %s38
        %s583 = smul.u32 16, %s38
        %s584 = smul.u32 16, %s38
        %s585 = smul.u32 16, %s38
        %s586 = smul.u32 16, %s38
        %v587 = vld [vmem:[#allocation8] sm:$0xff]
        %v588 = vld [vmem:[#allocation8 + $0x8] sm:$0xff]
        %v589 = vld [vmem:[#allocation8 + $0x10] sm:$0xff]
        %v590 = vld [vmem:[#allocation8 + $0x18] sm:$0xff]
        %v591 = vld [vmem:[#allocation8 + $0x20] sm:$0xff]
        %v592 = vld [vmem:[#allocation8 + $0x28] sm:$0xff]
        %v593 = vld [vmem:[#allocation8 + $0x30] sm:$0xff]
        %v594 = vld [vmem:[#allocation8 + $0x38] sm:$0xff]
        %v595 = vld [vmem:[#allocation10] sm:$0x1]
        %v596 = vld [vmem:[%s480] sm:$0xff]
        %v597 = vld [vmem:[%s480 + $0x8] sm:$0xff]
        %v598 = vld [vmem:[%s480 + $0x10] sm:$0xff]
        %v599 = vld [vmem:[%s480 + $0x18] sm:$0xff]
        %v600 = vld [vmem:[%s480 + $0x20] sm:$0xff]
        %v601 = vld [vmem:[%s480 + $0x28] sm:$0xff]
        %v602 = vld [vmem:[%s480 + $0x30] sm:$0xff]
        %v603 = vld [vmem:[%s480 + $0x38] sm:$0xff]
        %v604 = vld [vmem:[%s480 + $0x40] sm:$0xff]
        %v605 = vld [vmem:[%s480 + $0x48] sm:$0xff]
        %v606 = vld [vmem:[%s480 + $0x50] sm:$0xff]
        %v607 = vld [vmem:[%s480 + $0x58] sm:$0xff]
        %v608 = vld [vmem:[%s480 + $0x60] sm:$0xff]
        %v609 = vld [vmem:[%s480 + $0x68] sm:$0xff]
        %v610 = vld [vmem:[%s480 + $0x70] sm:$0xff]
        %v611 = vld [vmem:[%s480 + $0x78] sm:$0xff]
        %v613 = vlaneseq
        %v614 = vshrl.u32 %v613, 7
        %v615 = vsub.s32 0, %v614
        %v616 = vrot.slane %v595, %v615
        %vm618 = vcmask 523264
        %v620 = vsel %vm618, %v596, 0
        %v623 = vsel %vm618, %v597, 0
        %v626 = vsel %vm618, %v598, 0
        %v629 = vsel %vm618, %v599, 0
        %v632 = vsel %vm618, %v600, 0
        %v635 = vsel %vm618, %v601, 0
        %v638 = vsel %vm618, %v602, 0
        %v641 = vsel %vm618, %v603, 0
        %v644 = vsel %vm618, %v604, 0
        %v647 = vsel %vm618, %v605, 0
        %v650 = vsel %vm618, %v606, 0
        %v653 = vsel %vm618, %v607, 0
        %v656 = vsel %vm618, %v608, 0
        %v659 = vsel %vm618, %v609, 0
        %v662 = vsel %vm618, %v610, 0
        %v665 = vsel %vm618, %v611, 0
        %667 = vmatprep.subr.mxu0 0.0
        %668 = vmatpush1.msra.mxu0 %v587
        %669 = vmatprep.subr.mxu0 0.0
        %670 = vmatpush1.msra.mxu0 %v588
        %671 = vmatprep.subr.mxu0 0.0
        %672 = vmatpush1.msra.mxu0 %v589
        %673 = vmatprep.subr.mxu0 0.0
        %674 = vmatpush1.msra.mxu0 %v590
        %675 = vmatprep.subr.mxu0 0.0
        %676 = vmatpush1.msra.mxu0 %v591
        %677 = vmatprep.subr.mxu0 0.0
        %678 = vmatpush1.msra.mxu0 %v592
        %679 = vmatprep.subr.mxu0 0.0
        %680 = vmatpush1.msra.mxu0 %v593
        %681 = vmatprep.subr.mxu0 0.0
        %682 = vmatpush1.msra.mxu0 %v594
        %683 = vmatprep.subr.mxu0 0.0
        %684 = vmatpush1.msra.mxu0 0.0
        %685 = vmatprep.subr.mxu0 0.0
        %686 = vmatpush1.msra.mxu0 0.0
        %687 = vmatprep.subr.mxu0 0.0
        %688 = vmatpush1.msra.mxu0 0.0
        %689 = vmatprep.subr.mxu0 0.0
        %690 = vmatpush1.msra.mxu0 0.0
        %691 = vmatprep.subr.mxu0 0.0
        %692 = vmatpush1.msra.mxu0 0.0
        %693 = vmatprep.subr.mxu0 0.0
        %694 = vmatpush1.msra.mxu0 0.0
        %695 = vmatprep.subr.mxu0 0.0
        %696 = vmatpush1.msra.mxu0 0.0
        %697 = vmatprep.subr.mxu0 0.0
        %698 = vmatpush1.msra.mxu0 0.0
        %699 = vmatprep.subr.mxu0 0.0
        %700 = vmatpush1.msra.mxu0 0.0
        %701 = vmatprep.subr.mxu0 0.0
        %702 = vmatpush1.msra.mxu0 0.0
        %703 = vmatprep.subr.mxu0 0.0
        %704 = vmatpush1.msra.mxu0 0.0
        %705 = vmatprep.subr.mxu0 0.0
        %706 = vmatpush1.msra.mxu0 0.0
        %707 = vmatprep.subr.mxu0 0.0
        %708 = vmatpush1.msra.mxu0 0.0
        %709 = vmatprep.subr.mxu0 0.0
        %710 = vmatpush1.msra.mxu0 0.0
        %711 = vmatprep.subr.mxu0 0.0
        %712 = vmatpush1.msra.mxu0 0.0
        %713 = vmatprep.subr.mxu0 0.0
        %714 = vmatpush1.msra.mxu0 0.0
        %715 = vmatprep.subr.mxu0 0.0
        %716 = vmatpush1.msra.mxu0 0.0
        %717 = vmatprep.subr.mxu0 0.0
        %718 = vmatpush1.msra.mxu0 0.0
        %719 = vmatprep.subr.mxu0 0.0
        %720 = vmatpush1.msra.mxu0 0.0
        %721 = vmatprep.subr.mxu0 0.0
        %722 = vmatpush1.msra.mxu0 0.0
        %723 = vmatprep.subr.mxu0 0.0
        %724 = vmatpush1.msra.mxu0 0.0
        %725 = vmatprep.subr.mxu0 0.0
        %726 = vmatpush1.msra.mxu0 0.0
        %727 = vmatprep.subr.mxu0 0.0
        %728 = vmatpush1.msra.mxu0 0.0
        %729 = vmatprep.subr.mxu0 0.0
        %730 = vmatpush1.msra.mxu0 0.0
        %731 = vmatprep.mubr.f32.mxu0 0.0
        %732 = vmatmul.mubr.f32.gmra.mrb[0].mxu0 %v620
        %v733 = vpop.f32.mrb[0].mxu0
        %v734 = vadd.f32 %v616, %v733
        %v735 = vpop.f32.mrb[0].mxu0
        %736 = vmatprep.mubr.f32.mxu0 0.0
        %737 = vmatmul.mubr.f32.gmra.mrb[0].mxu0 %v623
        %v738 = vpop.f32.mrb[0].mxu0
        %v739 = vadd.f32 %v616, %v738
        %v740 = vpop.f32.mrb[0].mxu0
        %741 = vmatprep.mubr.f32.mxu0 0.0
        %742 = vmatmul.mubr.f32.gmra.mrb[0].mxu0 %v626
        %v743 = vpop.f32.mrb[0].mxu0
        %v744 = vadd.f32 %v616, %v743
        %v745 = vpop.f32.mrb[0].mxu0
        %746 = vmatprep.mubr.f32.mxu0 0.0
        %747 = vmatmul.mubr.f32.gmra.mrb[0].mxu0 %v629
        %v748 = vpop.f32.mrb[0].mxu0
        %v749 = vadd.f32 %v616, %v748
        %v750 = vpop.f32.mrb[0].mxu0
        %751 = vmatprep.mubr.f32.mxu0 0.0
        %752 = vmatmul.mubr.f32.gmra.mrb[0].mxu0 %v632
        %v753 = vpop.f32.mrb[0].mxu0
        %v754 = vadd.f32 %v616, %v753
        %v755 = vpop.f32.mrb[0].mxu0
        %756 = vmatprep.mubr.f32.mxu0 0.0
        %757 = vmatmul.mubr.f32.gmra.mrb[0].mxu0 %v635
        %v758 = vpop.f32.mrb[0].mxu0
        %v759 = vadd.f32 %v616, %v758
        %v760 = vpop.f32.mrb[0].mxu0
        %761 = vmatprep.mubr.f32.mxu0 0.0
        %762 = vmatmul.mubr.f32.gmra.mrb[0].mxu0 %v638
        %v763 = vpop.f32.mrb[0].mxu0
        %v764 = vadd.f32 %v616, %v763
        %v765 = vpop.f32.mrb[0].mxu0
        %766 = vmatprep.mubr.f32.mxu0 0.0
        %767 = vmatmul.mubr.f32.gmra.mrb[0].mxu0 %v641
        %v768 = vpop.f32.mrb[0].mxu0
        %v769 = vadd.f32 %v616, %v768
        %v770 = vpop.f32.mrb[0].mxu0
        %771 = vmatprep.mubr.f32.mxu0 0.0
        %772 = vmatmul.mubr.f32.gmra.mrb[0].mxu0 %v644
        %v773 = vpop.f32.mrb[0].mxu0
        %v774 = vadd.f32 %v616, %v773
        %v775 = vpop.f32.mrb[0].mxu0
        %776 = vmatprep.mubr.f32.mxu0 0.0
        %777 = vmatmul.mubr.f32.gmra.mrb[0].mxu0 %v647
        %v778 = vpop.f32.mrb[0].mxu0
        %v779 = vadd.f32 %v616, %v778
        %v780 = vpop.f32.mrb[0].mxu0
        %781 = vmatprep.mubr.f32.mxu0 0.0
        %782 = vmatmul.mubr.f32.gmra.mrb[0].mxu0 %v650
        %v783 = vpop.f32.mrb[0].mxu0
        %v784 = vadd.f32 %v616, %v783
        %v785 = vpop.f32.mrb[0].mxu0
        %786 = vmatprep.mubr.f32.mxu0 0.0
        %787 = vmatmul.mubr.f32.gmra.mrb[0].mxu0 %v653
        %v788 = vpop.f32.mrb[0].mxu0
        %v789 = vadd.f32 %v616, %v788
        %v790 = vpop.f32.mrb[0].mxu0
        %791 = vmatprep.mubr.f32.mxu0 0.0
        %792 = vmatmul.mubr.f32.gmra.mrb[0].mxu0 %v656
        %v793 = vpop.f32.mrb[0].mxu0
        %v794 = vadd.f32 %v616, %v793
        %v795 = vpop.f32.mrb[0].mxu0
        %796 = vmatprep.mubr.f32.mxu0 0.0
        %797 = vmatmul.mubr.f32.gmra.mrb[0].mxu0 %v659
        %v798 = vpop.f32.mrb[0].mxu0
        %v799 = vadd.f32 %v616, %v798
        %v800 = vpop.f32.mrb[0].mxu0
        %801 = vmatprep.mubr.f32.mxu0 0.0
        %802 = vmatmul.mubr.f32.gmra.mrb[0].mxu0 %v662
        %v803 = vpop.f32.mrb[0].mxu0
        %v804 = vadd.f32 %v616, %v803
        %v805 = vpop.f32.mrb[0].mxu0
        %806 = vmatprep.mubr.f32.mxu0 0.0
        %807 = vmatmul.mubr.f32.gmra.mrb[0].mxu0 %v665
        %v808 = vpop.f32.mrb[0].mxu0
        %v809 = vadd.f32 %v616, %v808
        %v810 = vpop.f32.mrb[0].mxu0
        %811 = vdwg.mxu0
        %vm812 = vcmp.ge.f32.partialorder %v734, 0.0
        %vm813 = vcmp.ge.f32.partialorder %v739, 0.0
        %vm814 = vcmp.ge.f32.partialorder %v744, 0.0
        %vm815 = vcmp.ge.f32.partialorder %v749, 0.0
        %vm816 = vcmp.ge.f32.partialorder %v754, 0.0
        %vm817 = vcmp.ge.f32.partialorder %v759, 0.0
        %vm818 = vcmp.ge.f32.partialorder %v764, 0.0
        %vm819 = vcmp.ge.f32.partialorder %v769, 0.0
        %vm820 = vcmp.ge.f32.partialorder %v774, 0.0
        %vm821 = vcmp.ge.f32.partialorder %v779, 0.0
        %vm822 = vcmp.ge.f32.partialorder %v784, 0.0
        %vm823 = vcmp.ge.f32.partialorder %v789, 0.0
        %vm824 = vcmp.ge.f32.partialorder %v794, 0.0
        %vm825 = vcmp.ge.f32.partialorder %v799, 0.0
        %vm826 = vcmp.ge.f32.partialorder %v804, 0.0
        %vm827 = vcmp.ge.f32.partialorder %v809, 0.0
        %v828 = vmul.f32 %v734, 0.2
        %v829 = vmul.f32 %v739, 0.2
        %v830 = vmul.f32 %v744, 0.2
        %v831 = vmul.f32 %v749, 0.2
        %v832 = vmul.f32 %v754, 0.2
        %v833 = vmul.f32 %v759, 0.2
        %v834 = vmul.f32 %v764, 0.2
        %v835 = vmul.f32 %v769, 0.2
        %v836 = vmul.f32 %v774, 0.2
        %v837 = vmul.f32 %v779, 0.2
        %v838 = vmul.f32 %v784, 0.2
        %v839 = vmul.f32 %v789, 0.2
        %v840 = vmul.f32 %v794, 0.2
        %v841 = vmul.f32 %v799, 0.2
        %v842 = vmul.f32 %v804, 0.2
        %v843 = vmul.f32 %v809, 0.2
        %v844 = vsel %vm812, %v734, %v828
        %v845 = vsel %vm813, %v739, %v829
        %v846 = vsel %vm814, %v744, %v830
        %v847 = vsel %vm815, %v749, %v831
        %v848 = vsel %vm816, %v754, %v832
        %v849 = vsel %vm817, %v759, %v833
        %v850 = vsel %vm818, %v764, %v834
        %v851 = vsel %vm819, %v769, %v835
        %v852 = vsel %vm820, %v774, %v836
        %v853 = vsel %vm821, %v779, %v837
        %v854 = vsel %vm822, %v784, %v838
        %v855 = vsel %vm823, %v789, %v839
        %v856 = vsel %vm824, %v794, %v840
        %v857 = vsel %vm825, %v799, %v841
        %v858 = vsel %vm826, %v804, %v842
        %v859 = vsel %vm827, %v809, %v843
        %v860 = vld [vmem:[#allocation11] sm:$0x1]
        %v861 = vlaneseq
        %v862 = vshrl.u32 %v861, 7
        %v863 = vsub.s32 0, %v862
        %v864 = vrot.slane %v860, %v863
        %v865 = vmul.f32 %v844, %v864
        %v866 = vmul.f32 %v845, %v864
        %v867 = vmul.f32 %v846, %v864
        %v868 = vmul.f32 %v847, %v864
        %v869 = vmul.f32 %v848, %v864
        %v870 = vmul.f32 %v849, %v864
        %v871 = vmul.f32 %v850, %v864
        %v872 = vmul.f32 %v851, %v864
        %v873 = vmul.f32 %v852, %v864
        %v874 = vmul.f32 %v853, %v864
        %v875 = vmul.f32 %v854, %v864
        %v876 = vmul.f32 %v855, %v864
        %v877 = vmul.f32 %v856, %v864
        %v878 = vmul.f32 %v857, %v864
        %v879 = vmul.f32 %v858, %v864
        %v880 = vmul.f32 %v859, %v864
        %v881 = vld [vmem:[%s489] sm:$0xff]
        %v882 = vld [vmem:[%s489 + $0x8] sm:$0xff]
        %v883 = vld [vmem:[%s489 + $0x10] sm:$0xff]
        %v884 = vld [vmem:[%s489 + $0x18] sm:$0xff]
        %v885 = vld [vmem:[%s489 + $0x20] sm:$0xff]
        %v886 = vld [vmem:[%s489 + $0x28] sm:$0xff]
        %v887 = vld [vmem:[%s489 + $0x30] sm:$0xff]
        %v888 = vld [vmem:[%s489 + $0x38] sm:$0xff]
        %v889 = vld [vmem:[%s489 + $0x40] sm:$0xff]
        %v890 = vld [vmem:[%s489 + $0x48] sm:$0xff]
        %v891 = vld [vmem:[%s489 + $0x50] sm:$0xff]
        %v892 = vld [vmem:[%s489 + $0x58] sm:$0xff]
        %v893 = vld [vmem:[%s489 + $0x60] sm:$0xff]
        %v894 = vld [vmem:[%s489 + $0x68] sm:$0xff]
        %v895 = vld [vmem:[%s489 + $0x70] sm:$0xff]
        %v896 = vld [vmem:[%s489 + $0x78] sm:$0xff]
        %v898 = vsel %vm618, %v881, 0
        %v901 = vsel %vm618, %v882, 0
        %v904 = vsel %vm618, %v883, 0
        %v907 = vsel %vm618, %v884, 0
        %v910 = vsel %vm618, %v885, 0
        %v913 = vsel %vm618, %v886, 0
        %v916 = vsel %vm618, %v887, 0
        %v919 = vsel %vm618, %v888, 0
        %v922 = vsel %vm618, %v889, 0
        %v925 = vsel %vm618, %v890, 0
        %v928 = vsel %vm618, %v891, 0
        %v931 = vsel %vm618, %v892, 0
        %v934 = vsel %vm618, %v893, 0
        %v937 = vsel %vm618, %v894, 0
        %v940 = vsel %vm618, %v895, 0
        %v943 = vsel %vm618, %v896, 0
        %945 = vmatprep.subr.mxu0 0.0
        %946 = vmatpush1.msra.mxu0 %v587
        %947 = vmatprep.subr.mxu0 0.0
        %948 = vmatpush1.msra.mxu0 %v588
        %949 = vmatprep.subr.mxu0 0.0
        %950 = vmatpush1.msra.mxu0 %v589
        %951 = vmatprep.subr.mxu0 0.0
        %952 = vmatpush1.msra.mxu0 %v590
        %953 = vmatprep.subr.mxu0 0.0
        %954 = vmatpush1.msra.mxu0 %v591
        %955 = vmatprep.subr.mxu0 0.0
        %956 = vmatpush1.msra.mxu0 %v592
        %957 = vmatprep.subr.mxu0 0.0
        %958 = vmatpush1.msra.mxu0 %v593
        %959 = vmatprep.subr.mxu0 0.0
        %960 = vmatpush1.msra.mxu0 %v594
        %961 = vmatprep.subr.mxu0 0.0
        %962 = vmatpush1.msra.mxu0 0.0
        %963 = vmatprep.subr.mxu0 0.0
        %964 = vmatpush1.msra.mxu0 0.0
        %965 = vmatprep.subr.mxu0 0.0
        %966 = vmatpush1.msra.mxu0 0.0
        %967 = vmatprep.subr.mxu0 0.0
        %968 = vmatpush1.msra.mxu0 0.0
        %969 = vmatprep.subr.mxu0 0.0
        %970 = vmatpush1.msra.mxu0 0.0
        %971 = vmatprep.subr.mxu0 0.0
        %972 = vmatpush1.msra.mxu0 0.0
        %973 = vmatprep.subr.mxu0 0.0
        %974 = vmatpush1.msra.mxu0 0.0
        %975 = vmatprep.subr.mxu0 0.0
        %976 = vmatpush1.msra.mxu0 0.0
        %977 = vmatprep.subr.mxu0 0.0
        %978 = vmatpush1.msra.mxu0 0.0
        %979 = vmatprep.subr.mxu0 0.0
        %980 = vmatpush1.msra.mxu0 0.0
        %981 = vmatprep.subr.mxu0 0.0
        %982 = vmatpush1.msra.mxu0 0.0
        %983 = vmatprep.subr.mxu0 0.0
        %984 = vmatpush1.msra.mxu0 0.0
        %985 = vmatprep.subr.mxu0 0.0
        %986 = vmatpush1.msra.mxu0 0.0
        %987 = vmatprep.subr.mxu0 0.0
        %988 = vmatpush1.msra.mxu0 0.0
        %989 = vmatprep.subr.mxu0 0.0
        %990 = vmatpush1.msra.mxu0 0.0
        %991 = vmatprep.subr.mxu0 0.0
        %992 = vmatpush1.msra.mxu0 0.0
        %993 = vmatprep.subr.mxu0 0.0
        %994 = vmatpush1.msra.mxu0 0.0
        %995 = vmatprep.subr.mxu0 0.0
        %996 = vmatpush1.msra.mxu0 0.0
        %997 = vmatprep.subr.mxu0 0.0
        %998 = vmatpush1.msra.mxu0 0.0
        %999 = vmatprep.subr.mxu0 0.0
        %1000 = vmatpush1.msra.mxu0 0.0
        %1001 = vmatprep.subr.mxu0 0.0
        %1002 = vmatpush1.msra.mxu0 0.0
        %1003 = vmatprep.subr.mxu0 0.0
        %1004 = vmatpush1.msra.mxu0 0.0
        %1005 = vmatprep.subr.mxu0 0.0
        %1006 = vmatpush1.msra.mxu0 0.0
        %1007 = vmatprep.subr.mxu0 0.0
        %1008 = vmatpush1.msra.mxu0 0.0
        %1009 = vmatprep.mubr.f32.mxu0 0.0
        %1010 = vmatmul.mubr.f32.gmra.mrb[0].mxu0 %v898
        %v1011 = vpop.f32.mrb[0].mxu0
        %v1012 = vadd.f32 %v616, %v1011
        %v1013 = vpop.f32.mrb[0].mxu0
        %1014 = vmatprep.mubr.f32.mxu0 0.0
        %1015 = vmatmul.mubr.f32.gmra.mrb[0].mxu0 %v901
        %v1016 = vpop.f32.mrb[0].mxu0
        %v1017 = vadd.f32 %v616, %v1016
        %v1018 = vpop.f32.mrb[0].mxu0
        %1019 = vmatprep.mubr.f32.mxu0 0.0
        %1020 = vmatmul.mubr.f32.gmra.mrb[0].mxu0 %v904
        %v1021 = vpop.f32.mrb[0].mxu0
        %v1022 = vadd.f32 %v616, %v1021
        %v1023 = vpop.f32.mrb[0].mxu0
        %1024 = vmatprep.mubr.f32.mxu0 0.0
        %1025 = vmatmul.mubr.f32.gmra.mrb[0].mxu0 %v907
        %v1026 = vpop.f32.mrb[0].mxu0
        %v1027 = vadd.f32 %v616, %v1026
        %v1028 = vpop.f32.mrb[0].mxu0
        %1029 = vmatprep.mubr.f32.mxu0 0.0
        %1030 = vmatmul.mubr.f32.gmra.mrb[0].mxu0 %v910
        %v1031 = vpop.f32.mrb[0].mxu0
        %v1032 = vadd.f32 %v616, %v1031
        %v1033 = vpop.f32.mrb[0].mxu0
        %1034 = vmatprep.mubr.f32.mxu0 0.0
        %1035 = vmatmul.mubr.f32.gmra.mrb[0].mxu0 %v913
        %v1036 = vpop.f32.mrb[0].mxu0
        %v1037 = vadd.f32 %v616, %v1036
        %v1038 = vpop.f32.mrb[0].mxu0
        %1039 = vmatprep.mubr.f32.mxu0 0.0
        %1040 = vmatmul.mubr.f32.gmra.mrb[0].mxu0 %v916
        %v1041 = vpop.f32.mrb[0].mxu0
        %v1042 = vadd.f32 %v616, %v1041
        %v1043 = vpop.f32.mrb[0].mxu0
        %1044 = vmatprep.mubr.f32.mxu0 0.0
        %1045 = vmatmul.mubr.f32.gmra.mrb[0].mxu0 %v919
        %v1046 = vpop.f32.mrb[0].mxu0
        %v1047 = vadd.f32 %v616, %v1046
        %v1048 = vpop.f32.mrb[0].mxu0
        %1049 = vmatprep.mubr.f32.mxu0 0.0
        %1050 = vmatmul.mubr.f32.gmra.mrb[0].mxu0 %v922
        %v1051 = vpop.f32.mrb[0].mxu0
        %v1052 = vadd.f32 %v616, %v1051
        %v1053 = vpop.f32.mrb[0].mxu0
        %1054 = vmatprep.mubr.f32.mxu0 0.0
        %1055 = vmatmul.mubr.f32.gmra.mrb[0].mxu0 %v925
        %v1056 = vpop.f32.mrb[0].mxu0
        %v1057 = vadd.f32 %v616, %v1056
        %v1058 = vpop.f32.mrb[0].mxu0
        %1059 = vmatprep.mubr.f32.mxu0 0.0
        %1060 = vmatmul.mubr.f32.gmra.mrb[0].mxu0 %v928
        %v1061 = vpop.f32.mrb[0].mxu0
        %v1062 = vadd.f32 %v616, %v1061
        %v1063 = vpop.f32.mrb[0].mxu0
        %1064 = vmatprep.mubr.f32.mxu0 0.0
        %1065 = vmatmul.mubr.f32.gmra.mrb[0].mxu0 %v931
        %v1066 = vpop.f32.mrb[0].mxu0
        %v1067 = vadd.f32 %v616, %v1066
        %v1068 = vpop.f32.mrb[0].mxu0
        %1069 = vmatprep.mubr.f32.mxu0 0.0
        %1070 = vmatmul.mubr.f32.gmra.mrb[0].mxu0 %v934
        %v1071 = vpop.f32.mrb[0].mxu0
        %v1072 = vadd.f32 %v616, %v1071
        %v1073 = vpop.f32.mrb[0].mxu0
        %1074 = vmatprep.mubr.f32.mxu0 0.0
        %1075 = vmatmul.mubr.f32.gmra.mrb[0].mxu0 %v937
        %v1076 = vpop.f32.mrb[0].mxu0
        %v1077 = vadd.f32 %v616, %v1076
        %v1078 = vpop.f32.mrb[0].mxu0
        %1079 = vmatprep.mubr.f32.mxu0 0.0
        %1080 = vmatmul.mubr.f32.gmra.mrb[0].mxu0 %v940
        %v1081 = vpop.f32.mrb[0].mxu0
        %v1082 = vadd.f32 %v616, %v1081
        %v1083 = vpop.f32.mrb[0].mxu0
        %1084 = vmatprep.mubr.f32.mxu0 0.0
        %1085 = vmatmul.mubr.f32.gmra.mrb[0].mxu0 %v943
        %v1086 = vpop.f32.mrb[0].mxu0
        %v1087 = vadd.f32 %v616, %v1086
        %v1088 = vpop.f32.mrb[0].mxu0
        %1089 = vdwg.mxu0
        %vm1090 = vcmp.ge.f32.partialorder %v1012, 0.0
        %vm1091 = vcmp.ge.f32.partialorder %v1017, 0.0
        %vm1092 = vcmp.ge.f32.partialorder %v1022, 0.0
        %vm1093 = vcmp.ge.f32.partialorder %v1027, 0.0
        %vm1094 = vcmp.ge.f32.partialorder %v1032, 0.0
        %vm1095 = vcmp.ge.f32.partialorder %v1037, 0.0
        %vm1096 = vcmp.ge.f32.partialorder %v1042, 0.0
        %vm1097 = vcmp.ge.f32.partialorder %v1047, 0.0
        %vm1098 = vcmp.ge.f32.partialorder %v1052, 0.0
        %vm1099 = vcmp.ge.f32.partialorder %v1057, 0.0
        %vm1100 = vcmp.ge.f32.partialorder %v1062, 0.0
        %vm1101 = vcmp.ge.f32.partialorder %v1067, 0.0
        %vm1102 = vcmp.ge.f32.partialorder %v1072, 0.0
        %vm1103 = vcmp.ge.f32.partialorder %v1077, 0.0
        %vm1104 = vcmp.ge.f32.partialorder %v1082, 0.0
        %vm1105 = vcmp.ge.f32.partialorder %v1087, 0.0
        %v1106 = vmul.f32 %v1012, 0.2
        %v1107 = vmul.f32 %v1017, 0.2
        %v1108 = vmul.f32 %v1022, 0.2
        %v1109 = vmul.f32 %v1027, 0.2
        %v1110 = vmul.f32 %v1032, 0.2
        %v1111 = vmul.f32 %v1037, 0.2
        %v1112 = vmul.f32 %v1042, 0.2
        %v1113 = vmul.f32 %v1047, 0.2
        %v1114 = vmul.f32 %v1052, 0.2
        %v1115 = vmul.f32 %v1057, 0.2
        %v1116 = vmul.f32 %v1062, 0.2
        %v1117 = vmul.f32 %v1067, 0.2
        %v1118 = vmul.f32 %v1072, 0.2
        %v1119 = vmul.f32 %v1077, 0.2
        %v1120 = vmul.f32 %v1082, 0.2
        %v1121 = vmul.f32 %v1087, 0.2
        %v1122 = vsel %vm1090, %v1012, %v1106
        %v1123 = vsel %vm1091, %v1017, %v1107
        %v1124 = vsel %vm1092, %v1022, %v1108
        %v1125 = vsel %vm1093, %v1027, %v1109
        %v1126 = vsel %vm1094, %v1032, %v1110
        %v1127 = vsel %vm1095, %v1037, %v1111
        %v1128 = vsel %vm1096, %v1042, %v1112
        %v1129 = vsel %vm1097, %v1047, %v1113
        %v1130 = vsel %vm1098, %v1052, %v1114
        %v1131 = vsel %vm1099, %v1057, %v1115
        %v1132 = vsel %vm1100, %v1062, %v1116
        %v1133 = vsel %vm1101, %v1067, %v1117
        %v1134 = vsel %vm1102, %v1072, %v1118
        %v1135 = vsel %vm1103, %v1077, %v1119
        %v1136 = vsel %vm1104, %v1082, %v1120
        %v1137 = vsel %vm1105, %v1087, %v1121
        %v1138 = vld [vmem:[#allocation11 + $0x1] sm:$0x1]
        %v1139 = vlaneseq
        %v1140 = vshrl.u32 %v1139, 7
        %v1141 = vsub.s32 0, %v1140
        %v1142 = vrot.slane %v1138, %v1141
        %v1143 = vmul.f32 %v1122, %v1142
        %v1144 = vmul.f32 %v1123, %v1142
        %v1145 = vmul.f32 %v1124, %v1142
        %v1146 = vmul.f32 %v1125, %v1142
        %v1147 = vmul.f32 %v1126, %v1142
        %v1148 = vmul.f32 %v1127, %v1142
        %v1149 = vmul.f32 %v1128, %v1142
        %v1150 = vmul.f32 %v1129, %v1142
        %v1151 = vmul.f32 %v1130, %v1142
        %v1152 = vmul.f32 %v1131, %v1142
        %v1153 = vmul.f32 %v1132, %v1142
        %v1154 = vmul.f32 %v1133, %v1142
        %v1155 = vmul.f32 %v1134, %v1142
        %v1156 = vmul.f32 %v1135, %v1142
        %v1157 = vmul.f32 %v1136, %v1142
        %v1158 = vmul.f32 %v1137, %v1142
        %v1159 = vld [vmem:[%s498] sm:$0xff]
        %v1160 = vld [vmem:[%s498 + $0x8] sm:$0xff]
        %v1161 = vld [vmem:[%s498 + $0x10] sm:$0xff]
        %v1162 = vld [vmem:[%s498 + $0x18] sm:$0xff]
        %v1163 = vld [vmem:[%s498 + $0x20] sm:$0xff]
        %v1164 = vld [vmem:[%s498 + $0x28] sm:$0xff]
        %v1165 = vld [vmem:[%s498 + $0x30] sm:$0xff]
        %v1166 = vld [vmem:[%s498 + $0x38] sm:$0xff]
        %v1167 = vld [vmem:[%s498 + $0x40] sm:$0xff]
        %v1168 = vld [vmem:[%s498 + $0x48] sm:$0xff]
        %v1169 = vld [vmem:[%s498 + $0x50] sm:$0xff]
        %v1170 = vld [vmem:[%s498 + $0x58] sm:$0xff]
        %v1171 = vld [vmem:[%s498 + $0x60] sm:$0xff]
        %v1172 = vld [vmem:[%s498 + $0x68] sm:$0xff]
        %v1173 = vld [vmem:[%s498 + $0x70] sm:$0xff]
        %v1174 = vld [vmem:[%s498 + $0x78] sm:$0xff]
        %v1176 = vsel %vm618, %v1159, 0
        %v1179 = vsel %vm618, %v1160, 0
        %v1182 = vsel %vm618, %v1161, 0
        %v1185 = vsel %vm618, %v1162, 0
        %v1188 = vsel %vm618, %v1163, 0
        %v1191 = vsel %vm618, %v1164, 0
        %v1194 = vsel %vm618, %v1165, 0
        %v1197 = vsel %vm618, %v1166, 0
        %v1200 = vsel %vm618, %v1167, 0
        %v1203 = vsel %vm618, %v1168, 0
        %v1206 = vsel %vm618, %v1169, 0
        %v1209 = vsel %vm618, %v1170, 0
        %v1212 = vsel %vm618, %v1171, 0
        %v1215 = vsel %vm618, %v1172, 0
        %v1218 = vsel %vm618, %v1173, 0
        %v1221 = vsel %vm618, %v1174, 0
        %1223 = vmatprep.subr.mxu0 0.0
        %1224 = vmatpush1.msra.mxu0 %v587
        %1225 = vmatprep.subr.mxu0 0.0
        %1226 = vmatpush1.msra.mxu0 %v588
        %1227 = vmatprep.subr.mxu0 0.0
        %1228 = vmatpush1.msra.mxu0 %v589
        %1229 = vmatprep.subr.mxu0 0.0
        %1230 = vmatpush1.msra.mxu0 %v590
        %1231 = vmatprep.subr.mxu0 0.0
        %1232 = vmatpush1.msra.mxu0 %v591
        %1233 = vmatprep.subr.mxu0 0.0
        %1234 = vmatpush1.msra.mxu0 %v592
        %1235 = vmatprep.subr.mxu0 0.0
        %1236 = vmatpush1.msra.mxu0 %v593
        %1237 = vmatprep.subr.mxu0 0.0
        %1238 = vmatpush1.msra.mxu0 %v594
        %1239 = vmatprep.subr.mxu0 0.0
        %1240 = vmatpush1.msra.mxu0 0.0
        %1241 = vmatprep.subr.mxu0 0.0
        %1242 = vmatpush1.msra.mxu0 0.0
        %1243 = vmatprep.subr.mxu0 0.0
        %1244 = vmatpush1.msra.mxu0 0.0
        %1245 = vmatprep.subr.mxu0 0.0
        %1246 = vmatpush1.msra.mxu0 0.0
        %1247 = vmatprep.subr.mxu0 0.0
        %1248 = vmatpush1.msra.mxu0 0.0
        %1249 = vmatprep.subr.mxu0 0.0
        %1250 = vmatpush1.msra.mxu0 0.0
        %1251 = vmatprep.subr.mxu0 0.0
        %1252 = vmatpush1.msra.mxu0 0.0
        %1253 = vmatprep.subr.mxu0 0.0
        %1254 = vmatpush1.msra.mxu0 0.0
        %1255 = vmatprep.subr.mxu0 0.0
        %1256 = vmatpush1.msra.mxu0 0.0
        %1257 = vmatprep.subr.mxu0 0.0
        %1258 = vmatpush1.msra.mxu0 0.0
        %1259 = vmatprep.subr.mxu0 0.0
        %1260 = vmatpush1.msra.mxu0 0.0
        %1261 = vmatprep.subr.mxu0 0.0
        %1262 = vmatpush1.msra.mxu0 0.0
        %1263 = vmatprep.subr.mxu0 0.0
        %1264 = vmatpush1.msra.mxu0 0.0
        %1265 = vmatprep.subr.mxu0 0.0
        %1266 = vmatpush1.msra.mxu0 0.0
        %1267 = vmatprep.subr.mxu0 0.0
        %1268 = vmatpush1.msra.mxu0 0.0
        %1269 = vmatprep.subr.mxu0 0.0
        %1270 = vmatpush1.msra.mxu0 0.0
        %1271 = vmatprep.subr.mxu0 0.0
        %1272 = vmatpush1.msra.mxu0 0.0
        %1273 = vmatprep.subr.mxu0 0.0
        %1274 = vmatpush1.msra.mxu0 0.0
        %1275 = vmatprep.subr.mxu0 0.0
        %1276 = vmatpush1.msra.mxu0 0.0
        %1277 = vmatprep.subr.mxu0 0.0
        %1278 = vmatpush1.msra.mxu0 0.0
        %1279 = vmatprep.subr.mxu0 0.0
        %1280 = vmatpush1.msra.mxu0 0.0
        %1281 = vmatprep.subr.mxu0 0.0
        %1282 = vmatpush1.msra.mxu0 0.0
        %1283 = vmatprep.subr.mxu0 0.0
        %1284 = vmatpush1.msra.mxu0 0.0
        %1285 = vmatprep.subr.mxu0 0.0
        %1286 = vmatpush1.msra.mxu0 0.0
        %1287 = vmatprep.mubr.f32.mxu0 0.0
        %1288 = vmatmul.mubr.f32.gmra.mrb[0].mxu0 %v1176
        %v1289 = vpop.f32.mrb[0].mxu0
        %v1290 = vadd.f32 %v616, %v1289
        %v1291 = vpop.f32.mrb[0].mxu0
        %1292 = vmatprep.mubr.f32.mxu0 0.0
        %1293 = vmatmul.mubr.f32.gmra.mrb[0].mxu0 %v1179
        %v1294 = vpop.f32.mrb[0].mxu0
        %v1295 = vadd.f32 %v616, %v1294
        %v1296 = vpop.f32.mrb[0].mxu0
        %1297 = vmatprep.mubr.f32.mxu0 0.0
        %1298 = vmatmul.mubr.f32.gmra.mrb[0].mxu0 %v1182
        %v1299 = vpop.f32.mrb[0].mxu0
        %v1300 = vadd.f32 %v616, %v1299
        %v1301 = vpop.f32.mrb[0].mxu0
        %1302 = vmatprep.mubr.f32.mxu0 0.0
        %1303 = vmatmul.mubr.f32.gmra.mrb[0].mxu0 %v1185
        %v1304 = vpop.f32.mrb[0].mxu0
        %v1305 = vadd.f32 %v616, %v1304
        %v1306 = vpop.f32.mrb[0].mxu0
        %1307 = vmatprep.mubr.f32.mxu0 0.0
        %1308 = vmatmul.mubr.f32.gmra.mrb[0].mxu0 %v1188
        %v1309 = vpop.f32.mrb[0].mxu0
        %v1310 = vadd.f32 %v616, %v1309
        %v1311 = vpop.f32.mrb[0].mxu0
        %1312 = vmatprep.mubr.f32.mxu0 0.0
        %1313 = vmatmul.mubr.f32.gmra.mrb[0].mxu0 %v1191
        %v1314 = vpop.f32.mrb[0].mxu0
        %v1315 = vadd.f32 %v616, %v1314
        %v1316 = vpop.f32.mrb[0].mxu0
        %1317 = vmatprep.mubr.f32.mxu0 0.0
        %1318 = vmatmul.mubr.f32.gmra.mrb[0].mxu0 %v1194
        %v1319 = vpop.f32.mrb[0].mxu0
        %v1320 = vadd.f32 %v616, %v1319
        %v1321 = vpop.f32.mrb[0].mxu0
        %1322 = vmatprep.mubr.f32.mxu0 0.0
        %1323 = vmatmul.mubr.f32.gmra.mrb[0].mxu0 %v1197
        %v1324 = vpop.f32.mrb[0].mxu0
        %v1325 = vadd.f32 %v616, %v1324
        %v1326 = vpop.f32.mrb[0].mxu0
        %1327 = vmatprep.mubr.f32.mxu0 0.0
        %1328 = vmatmul.mubr.f32.gmra.mrb[0].mxu0 %v1200
        %v1329 = vpop.f32.mrb[0].mxu0
        %v1330 = vadd.f32 %v616, %v1329
        %v1331 = vpop.f32.mrb[0].mxu0
        %1332 = vmatprep.mubr.f32.mxu0 0.0
        %1333 = vmatmul.mubr.f32.gmra.mrb[0].mxu0 %v1203
        %v1334 = vpop.f32.mrb[0].mxu0
        %v1335 = vadd.f32 %v616, %v1334
        %v1336 = vpop.f32.mrb[0].mxu0
        %1337 = vmatprep.mubr.f32.mxu0 0.0
        %1338 = vmatmul.mubr.f32.gmra.mrb[0].mxu0 %v1206
        %v1339 = vpop.f32.mrb[0].mxu0
        %v1340 = vadd.f32 %v616, %v1339
        %v1341 = vpop.f32.mrb[0].mxu0
        %1342 = vmatprep.mubr.f32.mxu0 0.0
        %1343 = vmatmul.mubr.f32.gmra.mrb[0].mxu0 %v1209
        %v1344 = vpop.f32.mrb[0].mxu0
        %v1345 = vadd.f32 %v616, %v1344
        %v1346 = vpop.f32.mrb[0].mxu0
        %1347 = vmatprep.mubr.f32.mxu0 0.0
        %1348 = vmatmul.mubr.f32.gmra.mrb[0].mxu0 %v1212
        %v1349 = vpop.f32.mrb[0].mxu0
        %v1350 = vadd.f32 %v616, %v1349
        %v1351 = vpop.f32.mrb[0].mxu0
        %1352 = vmatprep.mubr.f32.mxu0 0.0
        %1353 = vmatmul.mubr.f32.gmra.mrb[0].mxu0 %v1215
        %v1354 = vpop.f32.mrb[0].mxu0
        %v1355 = vadd.f32 %v616, %v1354
        %v1356 = vpop.f32.mrb[0].mxu0
        %1357 = vmatprep.mubr.f32.mxu0 0.0
        %1358 = vmatmul.mubr.f32.gmra.mrb[0].mxu0 %v1218
        %v1359 = vpop.f32.mrb[0].mxu0
        %v1360 = vadd.f32 %v616, %v1359
        %v1361 = vpop.f32.mrb[0].mxu0
        %1362 = vmatprep.mubr.f32.mxu0 0.0
        %1363 = vmatmul.mubr.f32.gmra.mrb[0].mxu0 %v1221
        %v1364 = vpop.f32.mrb[0].mxu0
        %v1365 = vadd.f32 %v616, %v1364
        %v1366 = vpop.f32.mrb[0].mxu0
        %1367 = vdwg.mxu0
        %vm1368 = vcmp.ge.f32.partialorder %v1290, 0.0
        %vm1369 = vcmp.ge.f32.partialorder %v1295, 0.0
        %vm1370 = vcmp.ge.f32.partialorder %v1300, 0.0
        %vm1371 = vcmp.ge.f32.partialorder %v1305, 0.0
        %vm1372 = vcmp.ge.f32.partialorder %v1310, 0.0
        %vm1373 = vcmp.ge.f32.partialorder %v1315, 0.0
        %vm1374 = vcmp.ge.f32.partialorder %v1320, 0.0
        %vm1375 = vcmp.ge.f32.partialorder %v1325, 0.0
        %vm1376 = vcmp.ge.f32.partialorder %v1330, 0.0
        %vm1377 = vcmp.ge.f32.partialorder %v1335, 0.0
        %vm1378 = vcmp.ge.f32.partialorder %v1340, 0.0
        %vm1379 = vcmp.ge.f32.partialorder %v1345, 0.0
        %vm1380 = vcmp.ge.f32.partialorder %v1350, 0.0
        %vm1381 = vcmp.ge.f32.partialorder %v1355, 0.0
        %vm1382 = vcmp.ge.f32.partialorder %v1360, 0.0
        %vm1383 = vcmp.ge.f32.partialorder %v1365, 0.0
        %v1384 = vmul.f32 %v1290, 0.2
        %v1385 = vmul.f32 %v1295, 0.2
        %v1386 = vmul.f32 %v1300, 0.2
        %v1387 = vmul.f32 %v1305, 0.2
        %v1388 = vmul.f32 %v1310, 0.2
        %v1389 = vmul.f32 %v1315, 0.2
        %v1390 = vmul.f32 %v1320, 0.2
        %v1391 = vmul.f32 %v1325, 0.2
        %v1392 = vmul.f32 %v1330, 0.2
        %v1393 = vmul.f32 %v1335, 0.2
        %v1394 = vmul.f32 %v1340, 0.2
        %v1395 = vmul.f32 %v1345, 0.2
        %v1396 = vmul.f32 %v1350, 0.2
        %v1397 = vmul.f32 %v1355, 0.2
        %v1398 = vmul.f32 %v1360, 0.2
        %v1399 = vmul.f32 %v1365, 0.2
        %v1400 = vsel %vm1368, %v1290, %v1384
        %v1401 = vsel %vm1369, %v1295, %v1385
        %v1402 = vsel %vm1370, %v1300, %v1386
        %v1403 = vsel %vm1371, %v1305, %v1387
        %v1404 = vsel %vm1372, %v1310, %v1388
        %v1405 = vsel %vm1373, %v1315, %v1389
        %v1406 = vsel %vm1374, %v1320, %v1390
        %v1407 = vsel %vm1375, %v1325, %v1391
        %v1408 = vsel %vm1376, %v1330, %v1392
        %v1409 = vsel %vm1377, %v1335, %v1393
        %v1410 = vsel %vm1378, %v1340, %v1394
        %v1411 = vsel %vm1379, %v1345, %v1395
        %v1412 = vsel %vm1380, %v1350, %v1396
        %v1413 = vsel %vm1381, %v1355, %v1397
        %v1414 = vsel %vm1382, %v1360, %v1398
        %v1415 = vsel %vm1383, %v1365, %v1399
        %v1416 = vld [vmem:[#allocation11 + $0x2] sm:$0x1]
        %v1417 = vlaneseq
        %v1418 = vshrl.u32 %v1417, 7
        %v1419 = vsub.s32 0, %v1418
        %v1420 = vrot.slane %v1416, %v1419
        %v1421 = vmul.f32 %v1400, %v1420
        %v1422 = vmul.f32 %v1401, %v1420
        %v1423 = vmul.f32 %v1402, %v1420
        %v1424 = vmul.f32 %v1403, %v1420
        %v1425 = vmul.f32 %v1404, %v1420
        %v1426 = vmul.f32 %v1405, %v1420
        %v1427 = vmul.f32 %v1406, %v1420
        %v1428 = vmul.f32 %v1407, %v1420
        %v1429 = vmul.f32 %v1408, %v1420
        %v1430 = vmul.f32 %v1409, %v1420
        %v1431 = vmul.f32 %v1410, %v1420
        %v1432 = vmul.f32 %v1411, %v1420
        %v1433 = vmul.f32 %v1412, %v1420
        %v1434 = vmul.f32 %v1413, %v1420
        %v1435 = vmul.f32 %v1414, %v1420
        %v1436 = vmul.f32 %v1415, %v1420
        %v1437 = vadd.f32 %v865, %v865
        %v1438 = vadd.f32 %v866, %v866
        %v1439 = vadd.f32 %v867, %v867
        %v1440 = vadd.f32 %v868, %v868
        %v1441 = vadd.f32 %v869, %v869
        %v1442 = vadd.f32 %v870, %v870
        %v1443 = vadd.f32 %v871, %v871
        %v1444 = vadd.f32 %v872, %v872
        %v1445 = vadd.f32 %v873, %v873
        %v1446 = vadd.f32 %v874, %v874
        %v1447 = vadd.f32 %v875, %v875
        %v1448 = vadd.f32 %v876, %v876
        %v1449 = vadd.f32 %v877, %v877
        %v1450 = vadd.f32 %v878, %v878
        %v1451 = vadd.f32 %v879, %v879
        %v1452 = vadd.f32 %v880, %v880
        %v1453 = vadd.f32 %v865, %v1143
        %v1454 = vadd.f32 %v866, %v1144
        %v1455 = vadd.f32 %v867, %v1145
        %v1456 = vadd.f32 %v868, %v1146
        %v1457 = vadd.f32 %v869, %v1147
        %v1458 = vadd.f32 %v870, %v1148
        %v1459 = vadd.f32 %v871, %v1149
        %v1460 = vadd.f32 %v872, %v1150
        %v1461 = vadd.f32 %v873, %v1151
        %v1462 = vadd.f32 %v874, %v1152
        %v1463 = vadd.f32 %v875, %v1153
        %v1464 = vadd.f32 %v876, %v1154
        %v1465 = vadd.f32 %v877, %v1155
        %v1466 = vadd.f32 %v878, %v1156
        %v1467 = vadd.f32 %v879, %v1157
        %v1468 = vadd.f32 %v880, %v1158
        %v1469 = vadd.f32 %v865, %v1421
        %v1470 = vadd.f32 %v866, %v1422
        %v1471 = vadd.f32 %v867, %v1423
        %v1472 = vadd.f32 %v868, %v1424
        %v1473 = vadd.f32 %v869, %v1425
        %v1474 = vadd.f32 %v870, %v1426
        %v1475 = vadd.f32 %v871, %v1427
        %v1476 = vadd.f32 %v872, %v1428
        %v1477 = vadd.f32 %v873, %v1429
        %v1478 = vadd.f32 %v874, %v1430
        %v1479 = vadd.f32 %v875, %v1431
        %v1480 = vadd.f32 %v876, %v1432
        %v1481 = vadd.f32 %v877, %v1433
        %v1482 = vadd.f32 %v878, %v1434
        %v1483 = vadd.f32 %v879, %v1435
        %v1484 = vadd.f32 %v880, %v1436
        %v1485 = vmax.f32 %v1437, %v1453
        %v1486 = vmax.f32 %v1438, %v1454
        %v1487 = vmax.f32 %v1439, %v1455
        %v1488 = vmax.f32 %v1440, %v1456
        %v1489 = vmax.f32 %v1441, %v1457
        %v1490 = vmax.f32 %v1442, %v1458
        %v1491 = vmax.f32 %v1443, %v1459
        %v1492 = vmax.f32 %v1444, %v1460
        %v1493 = vmax.f32 %v1445, %v1461
        %v1494 = vmax.f32 %v1446, %v1462
        %v1495 = vmax.f32 %v1447, %v1463
        %v1496 = vmax.f32 %v1448, %v1464
        %v1497 = vmax.f32 %v1449, %v1465
        %v1498 = vmax.f32 %v1450, %v1466
        %v1499 = vmax.f32 %v1451, %v1467
        %v1500 = vmax.f32 %v1452, %v1468
        %v1501 = vmax.f32 %v1485, %v1469
        %v1502 = vmax.f32 %v1486, %v1470
        %v1503 = vmax.f32 %v1487, %v1471
        %v1504 = vmax.f32 %v1488, %v1472
        %v1505 = vmax.f32 %v1489, %v1473
        %v1506 = vmax.f32 %v1490, %v1474
        %v1507 = vmax.f32 %v1491, %v1475
        %v1508 = vmax.f32 %v1492, %v1476
        %v1509 = vmax.f32 %v1493, %v1477
        %v1510 = vmax.f32 %v1494, %v1478
        %v1511 = vmax.f32 %v1495, %v1479
        %v1512 = vmax.f32 %v1496, %v1480
        %v1513 = vmax.f32 %v1497, %v1481
        %v1514 = vmax.f32 %v1498, %v1482
        %v1515 = vmax.f32 %v1499, %v1483
        %v1516 = vmax.f32 %v1500, %v1484
        %v1517 = vsub.f32 %v1437, %v1501
        %v1518 = vsub.f32 %v1438, %v1502
        %v1519 = vsub.f32 %v1439, %v1503
        %v1520 = vsub.f32 %v1440, %v1504
        %v1521 = vsub.f32 %v1441, %v1505
        %v1522 = vsub.f32 %v1442, %v1506
        %v1523 = vsub.f32 %v1443, %v1507
        %v1524 = vsub.f32 %v1444, %v1508
        %v1525 = vsub.f32 %v1445, %v1509
        %v1526 = vsub.f32 %v1446, %v1510
        %v1527 = vsub.f32 %v1447, %v1511
        %v1528 = vsub.f32 %v1448, %v1512
        %v1529 = vsub.f32 %v1449, %v1513
        %v1530 = vsub.f32 %v1450, %v1514
        %v1531 = vsub.f32 %v1451, %v1515
        %v1532 = vsub.f32 %v1452, %v1516
        %v1533 = vmul.f32 %v1517, 1.442695
        %v1534 = vpow.pop %v1533
        %v1535 = vmul.f32 %v1518, 1.442695
        %v1536 = vpow.pop %v1535
        %v1537 = vmul.f32 %v1519, 1.442695
        %v1538 = vpow.pop %v1537
        %v1539 = vmul.f32 %v1520, 1.442695
        %v1540 = vpow.pop %v1539
        %v1541 = vmul.f32 %v1521, 1.442695
        %v1542 = vpow.pop %v1541
        %v1543 = vmul.f32 %v1522, 1.442695
        %v1544 = vpow.pop %v1543
        %v1545 = vmul.f32 %v1523, 1.442695
        %v1546 = vpow.pop %v1545
        %v1547 = vmul.f32 %v1524, 1.442695
        %v1548 = vpow.pop %v1547
        %v1549 = vmul.f32 %v1525, 1.442695
        %v1550 = vpow.pop %v1549
        %v1551 = vmul.f32 %v1526, 1.442695
        %v1552 = vpow.pop %v1551
        %v1553 = vmul.f32 %v1527, 1.442695
        %v1554 = vpow.pop %v1553
        %v1555 = vmul.f32 %v1528, 1.442695
        %v1556 = vpow.pop %v1555
        %v1557 = vmul.f32 %v1529, 1.442695
        %v1558 = vpow.pop %v1557
        %v1559 = vmul.f32 %v1530, 1.442695
        %v1560 = vpow.pop %v1559
        %v1561 = vmul.f32 %v1531, 1.442695
        %v1562 = vpow.pop %v1561
        %v1563 = vmul.f32 %v1532, 1.442695
        %v1564 = vpow.pop %v1563
        %v1565 = vsub.f32 %v1453, %v1501
        %v1566 = vsub.f32 %v1454, %v1502
        %v1567 = vsub.f32 %v1455, %v1503
        %v1568 = vsub.f32 %v1456, %v1504
        %v1569 = vsub.f32 %v1457, %v1505
        %v1570 = vsub.f32 %v1458, %v1506
        %v1571 = vsub.f32 %v1459, %v1507
        %v1572 = vsub.f32 %v1460, %v1508
        %v1573 = vsub.f32 %v1461, %v1509
        %v1574 = vsub.f32 %v1462, %v1510
        %v1575 = vsub.f32 %v1463, %v1511
        %v1576 = vsub.f32 %v1464, %v1512
        %v1577 = vsub.f32 %v1465, %v1513
        %v1578 = vsub.f32 %v1466, %v1514
        %v1579 = vsub.f32 %v1467, %v1515
        %v1580 = vsub.f32 %v1468, %v1516
        %v1581 = vmul.f32 %v1565, 1.442695
        %v1582 = vpow.pop %v1581
        %v1583 = vmul.f32 %v1566, 1.442695
        %v1584 = vpow.pop %v1583
        %v1585 = vmul.f32 %v1567, 1.442695
        %v1586 = vpow.pop %v1585
        %v1587 = vmul.f32 %v1568, 1.442695
        %v1588 = vpow.pop %v1587
        %v1589 = vmul.f32 %v1569, 1.442695
        %v1590 = vpow.pop %v1589
        %v1591 = vmul.f32 %v1570, 1.442695
        %v1592 = vpow.pop %v1591
        %v1593 = vmul.f32 %v1571, 1.442695
        %v1594 = vpow.pop %v1593
        %v1595 = vmul.f32 %v1572, 1.442695
        %v1596 = vpow.pop %v1595
        %v1597 = vmul.f32 %v1573, 1.442695
        %v1598 = vpow.pop %v1597
        %v1599 = vmul.f32 %v1574, 1.442695
        %v1600 = vpow.pop %v1599
        %v1601 = vmul.f32 %v1575, 1.442695
        %v1602 = vpow.pop %v1601
        %v1603 = vmul.f32 %v1576, 1.442695
        %v1604 = vpow.pop %v1603
        %v1605 = vmul.f32 %v1577, 1.442695
        %v1606 = vpow.pop %v1605
        %v1607 = vmul.f32 %v1578, 1.442695
        %v1608 = vpow.pop %v1607
        %v1609 = vmul.f32 %v1579, 1.442695
        %v1610 = vpow.pop %v1609
        %v1611 = vmul.f32 %v1580, 1.442695
        %v1612 = vpow.pop %v1611
        %v1613 = vsub.f32 %v1469, %v1501
        %v1614 = vsub.f32 %v1470, %v1502
        %v1615 = vsub.f32 %v1471, %v1503
        %v1616 = vsub.f32 %v1472, %v1504
        %v1617 = vsub.f32 %v1473, %v1505
        %v1618 = vsub.f32 %v1474, %v1506
        %v1619 = vsub.f32 %v1475, %v1507
        %v1620 = vsub.f32 %v1476, %v1508
        %v1621 = vsub.f32 %v1477, %v1509
        %v1622 = vsub.f32 %v1478, %v1510
        %v1623 = vsub.f32 %v1479, %v1511
        %v1624 = vsub.f32 %v1480, %v1512
        %v1625 = vsub.f32 %v1481, %v1513
        %v1626 = vsub.f32 %v1482, %v1514
        %v1627 = vsub.f32 %v1483, %v1515
        %v1628 = vsub.f32 %v1484, %v1516
        %v1629 = vmul.f32 %v1613, 1.442695
        %v1630 = vpow.pop %v1629
        %v1631 = vmul.f32 %v1614, 1.442695
        %v1632 = vpow.pop %v1631
        %v1633 = vmul.f32 %v1615, 1.442695
        %v1634 = vpow.pop %v1633
        %v1635 = vmul.f32 %v1616, 1.442695
        %v1636 = vpow.pop %v1635
        %v1637 = vmul.f32 %v1617, 1.442695
        %v1638 = vpow.pop %v1637
        %v1639 = vmul.f32 %v1618, 1.442695
        %v1640 = vpow.pop %v1639
        %v1641 = vmul.f32 %v1619, 1.442695
        %v1642 = vpow.pop %v1641
        %v1643 = vmul.f32 %v1620, 1.442695
        %v1644 = vpow.pop %v1643
        %v1645 = vmul.f32 %v1621, 1.442695
        %v1646 = vpow.pop %v1645
        %v1647 = vmul.f32 %v1622, 1.442695
        %v1648 = vpow.pop %v1647
        %v1649 = vmul.f32 %v1623, 1.442695
        %v1650 = vpow.pop %v1649
        %v1651 = vmul.f32 %v1624, 1.442695
        %v1652 = vpow.pop %v1651
        %v1653 = vmul.f32 %v1625, 1.442695
        %v1654 = vpow.pop %v1653
        %v1655 = vmul.f32 %v1626, 1.442695
        %v1656 = vpow.pop %v1655
        %v1657 = vmul.f32 %v1627, 1.442695
        %v1658 = vpow.pop %v1657
        %v1659 = vmul.f32 %v1628, 1.442695
        %v1660 = vpow.pop %v1659
        %v1661 = vadd.f32 %v1534, %v1582
        %v1662 = vadd.f32 %v1536, %v1584
        %v1663 = vadd.f32 %v1538, %v1586
        %v1664 = vadd.f32 %v1540, %v1588
        %v1665 = vadd.f32 %v1542, %v1590
        %v1666 = vadd.f32 %v1544, %v1592
        %v1667 = vadd.f32 %v1546, %v1594
        %v1668 = vadd.f32 %v1548, %v1596
        %v1669 = vadd.f32 %v1550, %v1598
        %v1670 = vadd.f32 %v1552, %v1600
        %v1671 = vadd.f32 %v1554, %v1602
        %v1672 = vadd.f32 %v1556, %v1604
        %v1673 = vadd.f32 %v1558, %v1606
        %v1674 = vadd.f32 %v1560, %v1608
        %v1675 = vadd.f32 %v1562, %v1610
        %v1676 = vadd.f32 %v1564, %v1612
        %v1677 = vadd.f32 %v1661, %v1630
        %v1678 = vadd.f32 %v1662, %v1632
        %v1679 = vadd.f32 %v1663, %v1634
        %v1680 = vadd.f32 %v1664, %v1636
        %v1681 = vadd.f32 %v1665, %v1638
        %v1682 = vadd.f32 %v1666, %v1640
        %v1683 = vadd.f32 %v1667, %v1642
        %v1684 = vadd.f32 %v1668, %v1644
        %v1685 = vadd.f32 %v1669, %v1646
        %v1686 = vadd.f32 %v1670, %v1648
        %v1687 = vadd.f32 %v1671, %v1650
        %v1688 = vadd.f32 %v1672, %v1652
        %v1689 = vadd.f32 %v1673, %v1654
        %v1690 = vadd.f32 %v1674, %v1656
        %v1691 = vadd.f32 %v1675, %v1658
        %v1692 = vadd.f32 %v1676, %v1660
        %v1693 = vrcp.pop %v1677
        %v1694 = vmul.f32 %v1534, %v1693
        %v1695 = vrcp.pop %v1678
        %v1696 = vmul.f32 %v1536, %v1695
        %v1697 = vrcp.pop %v1679
        %v1698 = vmul.f32 %v1538, %v1697
        %v1699 = vrcp.pop %v1680
        %v1700 = vmul.f32 %v1540, %v1699
        %v1701 = vrcp.pop %v1681
        %v1702 = vmul.f32 %v1542, %v1701
        %v1703 = vrcp.pop %v1682
        %v1704 = vmul.f32 %v1544, %v1703
        %v1705 = vrcp.pop %v1683
        %v1706 = vmul.f32 %v1546, %v1705
        %v1707 = vrcp.pop %v1684
        %v1708 = vmul.f32 %v1548, %v1707
        %v1709 = vrcp.pop %v1685
        %v1710 = vmul.f32 %v1550, %v1709
        %v1711 = vrcp.pop %v1686
        %v1712 = vmul.f32 %v1552, %v1711
        %v1713 = vrcp.pop %v1687
        %v1714 = vmul.f32 %v1554, %v1713
        %v1715 = vrcp.pop %v1688
        %v1716 = vmul.f32 %v1556, %v1715
        %v1717 = vrcp.pop %v1689
        %v1718 = vmul.f32 %v1558, %v1717
        %v1719 = vrcp.pop %v1690
        %v1720 = vmul.f32 %v1560, %v1719
        %v1721 = vrcp.pop %v1691
        %v1722 = vmul.f32 %v1562, %v1721
        %v1723 = vrcp.pop %v1692
        %v1724 = vmul.f32 %v1564, %v1723
        %v1725 = vmul.f32 %v844, %v1694
        %v1726 = vmul.f32 %v845, %v1696
        %v1727 = vmul.f32 %v846, %v1698
        %v1728 = vmul.f32 %v847, %v1700
        %v1729 = vmul.f32 %v848, %v1702
        %v1730 = vmul.f32 %v849, %v1704
        %v1731 = vmul.f32 %v850, %v1706
        %v1732 = vmul.f32 %v851, %v1708
        %v1733 = vmul.f32 %v852, %v1710
        %v1734 = vmul.f32 %v853, %v1712
        %v1735 = vmul.f32 %v854, %v1714
        %v1736 = vmul.f32 %v855, %v1716
        %v1737 = vmul.f32 %v856, %v1718
        %v1738 = vmul.f32 %v857, %v1720
        %v1739 = vmul.f32 %v858, %v1722
        %v1740 = vmul.f32 %v859, %v1724
        %v1741 = vmul.f32 %v1582, %v1693
        %v1742 = vmul.f32 %v1584, %v1695
        %v1743 = vmul.f32 %v1586, %v1697
        %v1744 = vmul.f32 %v1588, %v1699
        %v1745 = vmul.f32 %v1590, %v1701
        %v1746 = vmul.f32 %v1592, %v1703
        %v1747 = vmul.f32 %v1594, %v1705
        %v1748 = vmul.f32 %v1596, %v1707
        %v1749 = vmul.f32 %v1598, %v1709
        %v1750 = vmul.f32 %v1600, %v1711
        %v1751 = vmul.f32 %v1602, %v1713
        %v1752 = vmul.f32 %v1604, %v1715
        %v1753 = vmul.f32 %v1606, %v1717
        %v1754 = vmul.f32 %v1608, %v1719
        %v1755 = vmul.f32 %v1610, %v1721
        %v1756 = vmul.f32 %v1612, %v1723
        %v1757 = vmul.f32 %v1122, %v1741
        %v1758 = vmul.f32 %v1123, %v1742
        %v1759 = vmul.f32 %v1124, %v1743
        %v1760 = vmul.f32 %v1125, %v1744
        %v1761 = vmul.f32 %v1126, %v1745
        %v1762 = vmul.f32 %v1127, %v1746
        %v1763 = vmul.f32 %v1128, %v1747
        %v1764 = vmul.f32 %v1129, %v1748
        %v1765 = vmul.f32 %v1130, %v1749
        %v1766 = vmul.f32 %v1131, %v1750
        %v1767 = vmul.f32 %v1132, %v1751
        %v1768 = vmul.f32 %v1133, %v1752
        %v1769 = vmul.f32 %v1134, %v1753
        %v1770 = vmul.f32 %v1135, %v1754
        %v1771 = vmul.f32 %v1136, %v1755
        %v1772 = vmul.f32 %v1137, %v1756
        %v1773 = vadd.f32 %v1725, %v1757
        %v1774 = vadd.f32 %v1726, %v1758
        %v1775 = vadd.f32 %v1727, %v1759
        %v1776 = vadd.f32 %v1728, %v1760
        %v1777 = vadd.f32 %v1729, %v1761
        %v1778 = vadd.f32 %v1730, %v1762
        %v1779 = vadd.f32 %v1731, %v1763
        %v1780 = vadd.f32 %v1732, %v1764
        %v1781 = vadd.f32 %v1733, %v1765
        %v1782 = vadd.f32 %v1734, %v1766
        %v1783 = vadd.f32 %v1735, %v1767
        %v1784 = vadd.f32 %v1736, %v1768
        %v1785 = vadd.f32 %v1737, %v1769
        %v1786 = vadd.f32 %v1738, %v1770
        %v1787 = vadd.f32 %v1739, %v1771
        %v1788 = vadd.f32 %v1740, %v1772
        %v1789 = vmul.f32 %v1630, %v1693
        %v1790 = vmul.f32 %v1632, %v1695
        %v1791 = vmul.f32 %v1634, %v1697
        %v1792 = vmul.f32 %v1636, %v1699
        %v1793 = vmul.f32 %v1638, %v1701
        %v1794 = vmul.f32 %v1640, %v1703
        %v1795 = vmul.f32 %v1642, %v1705
        %v1796 = vmul.f32 %v1644, %v1707
        %v1797 = vmul.f32 %v1646, %v1709
        %v1798 = vmul.f32 %v1648, %v1711
        %v1799 = vmul.f32 %v1650, %v1713
        %v1800 = vmul.f32 %v1652, %v1715
        %v1801 = vmul.f32 %v1654, %v1717
        %v1802 = vmul.f32 %v1656, %v1719
        %v1803 = vmul.f32 %v1658, %v1721
        %v1804 = vmul.f32 %v1660, %v1723
        %v1805 = vmul.f32 %v1400, %v1789
        %v1806 = vmul.f32 %v1401, %v1790
        %v1807 = vmul.f32 %v1402, %v1791
        %v1808 = vmul.f32 %v1403, %v1792
        %v1809 = vmul.f32 %v1404, %v1793
        %v1810 = vmul.f32 %v1405, %v1794
        %v1811 = vmul.f32 %v1406, %v1795
        %v1812 = vmul.f32 %v1407, %v1796
        %v1813 = vmul.f32 %v1408, %v1797
        %v1814 = vmul.f32 %v1409, %v1798
        %v1815 = vmul.f32 %v1410, %v1799
        %v1816 = vmul.f32 %v1411, %v1800
        %v1817 = vmul.f32 %v1412, %v1801
        %v1818 = vmul.f32 %v1413, %v1802
        %v1819 = vmul.f32 %v1414, %v1803
        %v1820 = vmul.f32 %v1415, %v1804
        %v1821 = vadd.f32 %v1773, %v1805
        %v1822 = vadd.f32 %v1774, %v1806
        %v1823 = vadd.f32 %v1775, %v1807
        %v1824 = vadd.f32 %v1776, %v1808
        %v1825 = vadd.f32 %v1777, %v1809
        %v1826 = vadd.f32 %v1778, %v1810
        %v1827 = vadd.f32 %v1779, %v1811
        %v1828 = vadd.f32 %v1780, %v1812
        %v1829 = vadd.f32 %v1781, %v1813
        %v1830 = vadd.f32 %v1782, %v1814
        %v1831 = vadd.f32 %v1783, %v1815
        %v1832 = vadd.f32 %v1784, %v1816
        %v1833 = vadd.f32 %v1785, %v1817
        %v1834 = vadd.f32 %v1786, %v1818
        %v1835 = vadd.f32 %v1787, %v1819
        %v1836 = vadd.f32 %v1788, %v1820
        %v1837 = vld [vmem:[#allocation13] sm:$0xff]
        %v1838 = vld [vmem:[#allocation13 + $0x8] sm:$0xff]
        %v1839 = vld [vmem:[#allocation13 + $0x10] sm:$0xff]
        %v1840 = vld [vmem:[#allocation13 + $0x18] sm:$0xff]
        %v1841 = vld [vmem:[#allocation13 + $0x20] sm:$0xff]
        %v1842 = vld [vmem:[#allocation13 + $0x28] sm:$0xff]
        %v1843 = vld [vmem:[#allocation13 + $0x30] sm:$0xff]
        %v1844 = vld [vmem:[#allocation13 + $0x38] sm:$0xff]
        %v1845 = vld [vmem:[#allocation13 + $0x40] sm:$0xff]
        %v1846 = vld [vmem:[#allocation13 + $0x48] sm:$0xff]
        %v1847 = vld [vmem:[#allocation13 + $0x50] sm:$0xff]
        %v1848 = vld [vmem:[#allocation13 + $0x58] sm:$0xff]
        %v1849 = vld [vmem:[#allocation13 + $0x60] sm:$0xff]
        %v1850 = vld [vmem:[#allocation13 + $0x68] sm:$0xff]
        %v1851 = vld [vmem:[#allocation13 + $0x70] sm:$0xff]
        %v1852 = vld [vmem:[#allocation13 + $0x78] sm:$0xff]
        %v1853 = vld [vmem:[#allocation14] sm:$0x1]
        %v1855 = vlaneseq
        %v1856 = vshrl.u32 %v1855, 7
        %v1857 = vsub.s32 0, %v1856
        %v1858 = vrot.slane %v1853, %v1857
        %1860 = vmatprep.subr.mxu0 0.0
        %1861 = vmatpush1.msra.mxu0 %v1837
        %1862 = vmatprep.subr.mxu0 0.0
        %1863 = vmatpush1.msra.mxu0 %v1838
        %1864 = vmatprep.subr.mxu0 0.0
        %1865 = vmatpush1.msra.mxu0 %v1839
        %1866 = vmatprep.subr.mxu0 0.0
        %1867 = vmatpush1.msra.mxu0 %v1840
        %1868 = vmatprep.subr.mxu0 0.0
        %1869 = vmatpush1.msra.mxu0 %v1841
        %1870 = vmatprep.subr.mxu0 0.0
        %1871 = vmatpush1.msra.mxu0 %v1842
        %1872 = vmatprep.subr.mxu0 0.0
        %1873 = vmatpush1.msra.mxu0 %v1843
        %1874 = vmatprep.subr.mxu0 0.0
        %1875 = vmatpush1.msra.mxu0 %v1844
        %1876 = vmatprep.subr.mxu0 0.0
        %1877 = vmatpush1.msra.mxu0 %v1845
        %1878 = vmatprep.subr.mxu0 0.0
        %1879 = vmatpush1.msra.mxu0 %v1846
        %1880 = vmatprep.subr.mxu0 0.0
        %1881 = vmatpush1.msra.mxu0 %v1847
        %1882 = vmatprep.subr.mxu0 0.0
        %1883 = vmatpush1.msra.mxu0 %v1848
        %1884 = vmatprep.subr.mxu0 0.0
        %1885 = vmatpush1.msra.mxu0 %v1849
        %1886 = vmatprep.subr.mxu0 0.0
        %1887 = vmatpush1.msra.mxu0 %v1850
        %1888 = vmatprep.subr.mxu0 0.0
        %1889 = vmatpush1.msra.mxu0 %v1851
        %1890 = vmatprep.subr.mxu0 0.0
        %1891 = vmatpush1.msra.mxu0 %v1852
        %1892 = vmatprep.subr.mxu0 0.0
        %1893 = vmatpush1.msra.mxu0 0.0
        %1894 = vmatprep.subr.mxu0 0.0
        %1895 = vmatpush1.msra.mxu0 0.0
        %1896 = vmatprep.subr.mxu0 0.0
        %1897 = vmatpush1.msra.mxu0 0.0
        %1898 = vmatprep.subr.mxu0 0.0
        %1899 = vmatpush1.msra.mxu0 0.0
        %1900 = vmatprep.subr.mxu0 0.0
        %1901 = vmatpush1.msra.mxu0 0.0
        %1902 = vmatprep.subr.mxu0 0.0
        %1903 = vmatpush1.msra.mxu0 0.0
        %1904 = vmatprep.subr.mxu0 0.0
        %1905 = vmatpush1.msra.mxu0 0.0
        %1906 = vmatprep.subr.mxu0 0.0
        %1907 = vmatpush1.msra.mxu0 0.0
        %1908 = vmatprep.subr.mxu0 0.0
        %1909 = vmatpush1.msra.mxu0 0.0
        %1910 = vmatprep.subr.mxu0 0.0
        %1911 = vmatpush1.msra.mxu0 0.0
        %1912 = vmatprep.subr.mxu0 0.0
        %1913 = vmatpush1.msra.mxu0 0.0
        %1914 = vmatprep.subr.mxu0 0.0
        %1915 = vmatpush1.msra.mxu0 0.0
        %1916 = vmatprep.subr.mxu0 0.0
        %1917 = vmatpush1.msra.mxu0 0.0
        %1918 = vmatprep.subr.mxu0 0.0
        %1919 = vmatpush1.msra.mxu0 0.0
        %1920 = vmatprep.subr.mxu0 0.0
        %1921 = vmatpush1.msra.mxu0 0.0
        %1922 = vmatprep.subr.mxu0 0.0
        %1923 = vmatpush1.msra.mxu0 0.0
        %1924 = vmatprep.mubr.f32.mxu0 0.0
        %1925 = vmatmul.mubr.f32.gmra.mrb[0].mxu0 %v1821
        %v1926 = vpop.f32.mrb[0].mxu0
        %v1927 = vadd.f32 %v1858, %v1926
        %v1928 = vpop.f32.mrb[0].mxu0
        %1929 = vmatprep.mubr.f32.mxu0 0.0
        %1930 = vmatmul.mubr.f32.gmra.mrb[0].mxu0 %v1822
        %v1931 = vpop.f32.mrb[0].mxu0
        %v1932 = vadd.f32 %v1858, %v1931
        %v1933 = vpop.f32.mrb[0].mxu0
        %1934 = vmatprep.mubr.f32.mxu0 0.0
        %1935 = vmatmul.mubr.f32.gmra.mrb[0].mxu0 %v1823
        %v1936 = vpop.f32.mrb[0].mxu0
        %v1937 = vadd.f32 %v1858, %v1936
        %v1938 = vpop.f32.mrb[0].mxu0
        %1939 = vmatprep.mubr.f32.mxu0 0.0
        %1940 = vmatmul.mubr.f32.gmra.mrb[0].mxu0 %v1824
        %v1941 = vpop.f32.mrb[0].mxu0
        %v1942 = vadd.f32 %v1858, %v1941
        %v1943 = vpop.f32.mrb[0].mxu0
        %1944 = vmatprep.mubr.f32.mxu0 0.0
        %1945 = vmatmul.mubr.f32.gmra.mrb[0].mxu0 %v1825
        %v1946 = vpop.f32.mrb[0].mxu0
        %v1947 = vadd.f32 %v1858, %v1946
        %v1948 = vpop.f32.mrb[0].mxu0
        %1949 = vmatprep.mubr.f32.mxu0 0.0
        %1950 = vmatmul.mubr.f32.gmra.mrb[0].mxu0 %v1826
        %v1951 = vpop.f32.mrb[0].mxu0
        %v1952 = vadd.f32 %v1858, %v1951
        %v1953 = vpop.f32.mrb[0].mxu0
        %1954 = vmatprep.mubr.f32.mxu0 0.0
        %1955 = vmatmul.mubr.f32.gmra.mrb[0].mxu0 %v1827
        %v1956 = vpop.f32.mrb[0].mxu0
        %v1957 = vadd.f32 %v1858, %v1956
        %v1958 = vpop.f32.mrb[0].mxu0
        %1959 = vmatprep.mubr.f32.mxu0 0.0
        %1960 = vmatmul.mubr.f32.gmra.mrb[0].mxu0 %v1828
        %v1961 = vpop.f32.mrb[0].mxu0
        %v1962 = vadd.f32 %v1858, %v1961
        %v1963 = vpop.f32.mrb[0].mxu0
        %1964 = vmatprep.mubr.f32.mxu0 0.0
        %1965 = vmatmul.mubr.f32.gmra.mrb[0].mxu0 %v1829
        %v1966 = vpop.f32.mrb[0].mxu0
        %v1967 = vadd.f32 %v1858, %v1966
        %v1968 = vpop.f32.mrb[0].mxu0
        %1969 = vmatprep.mubr.f32.mxu0 0.0
        %1970 = vmatmul.mubr.f32.gmra.mrb[0].mxu0 %v1830
        %v1971 = vpop.f32.mrb[0].mxu0
        %v1972 = vadd.f32 %v1858, %v1971
        %v1973 = vpop.f32.mrb[0].mxu0
        %1974 = vmatprep.mubr.f32.mxu0 0.0
        %1975 = vmatmul.mubr.f32.gmra.mrb[0].mxu0 %v1831
        %v1976 = vpop.f32.mrb[0].mxu0
        %v1977 = vadd.f32 %v1858, %v1976
        %v1978 = vpop.f32.mrb[0].mxu0
        %1979 = vmatprep.mubr.f32.mxu0 0.0
        %1980 = vmatmul.mubr.f32.gmra.mrb[0].mxu0 %v1832
        %v1981 = vpop.f32.mrb[0].mxu0
        %v1982 = vadd.f32 %v1858, %v1981
        %v1983 = vpop.f32.mrb[0].mxu0
        %1984 = vmatprep.mubr.f32.mxu0 0.0
        %1985 = vmatmul.mubr.f32.gmra.mrb[0].mxu0 %v1833
        %v1986 = vpop.f32.mrb[0].mxu0
        %v1987 = vadd.f32 %v1858, %v1986
        %v1988 = vpop.f32.mrb[0].mxu0
        %1989 = vmatprep.mubr.f32.mxu0 0.0
        %1990 = vmatmul.mubr.f32.gmra.mrb[0].mxu0 %v1834
        %v1991 = vpop.f32.mrb[0].mxu0
        %v1992 = vadd.f32 %v1858, %v1991
        %v1993 = vpop.f32.mrb[0].mxu0
        %1994 = vmatprep.mubr.f32.mxu0 0.0
        %1995 = vmatmul.mubr.f32.gmra.mrb[0].mxu0 %v1835
        %v1996 = vpop.f32.mrb[0].mxu0
        %v1997 = vadd.f32 %v1858, %v1996
        %v1998 = vpop.f32.mrb[0].mxu0
        %1999 = vmatprep.mubr.f32.mxu0 0.0
        %2000 = vmatmul.mubr.f32.gmra.mrb[0].mxu0 %v1836
        %v2001 = vpop.f32.mrb[0].mxu0
        %v2002 = vadd.f32 %v1858, %v2001
        %v2003 = vpop.f32.mrb[0].mxu0
        %2004 = vdwg.mxu0
        %vm2005 = vcmp.ge.f32.partialorder %v1927, 0.0
        %vm2006 = vcmp.ge.f32.partialorder %v1932, 0.0
        %vm2007 = vcmp.ge.f32.partialorder %v1937, 0.0
        %vm2008 = vcmp.ge.f32.partialorder %v1942, 0.0
        %vm2009 = vcmp.ge.f32.partialorder %v1947, 0.0
        %vm2010 = vcmp.ge.f32.partialorder %v1952, 0.0
        %vm2011 = vcmp.ge.f32.partialorder %v1957, 0.0
        %vm2012 = vcmp.ge.f32.partialorder %v1962, 0.0
        %vm2013 = vcmp.ge.f32.partialorder %v1967, 0.0
        %vm2014 = vcmp.ge.f32.partialorder %v1972, 0.0
        %vm2015 = vcmp.ge.f32.partialorder %v1977, 0.0
        %vm2016 = vcmp.ge.f32.partialorder %v1982, 0.0
        %vm2017 = vcmp.ge.f32.partialorder %v1987, 0.0
        %vm2018 = vcmp.ge.f32.partialorder %v1992, 0.0
        %vm2019 = vcmp.ge.f32.partialorder %v1997, 0.0
        %vm2020 = vcmp.ge.f32.partialorder %v2002, 0.0
        %v2021 = vmul.f32 %v1927, 0.2
        %v2022 = vmul.f32 %v1932, 0.2
        %v2023 = vmul.f32 %v1937, 0.2
        %v2024 = vmul.f32 %v1942, 0.2
        %v2025 = vmul.f32 %v1947, 0.2
        %v2026 = vmul.f32 %v1952, 0.2
        %v2027 = vmul.f32 %v1957, 0.2
        %v2028 = vmul.f32 %v1962, 0.2
        %v2029 = vmul.f32 %v1967, 0.2
        %v2030 = vmul.f32 %v1972, 0.2
        %v2031 = vmul.f32 %v1977, 0.2
        %v2032 = vmul.f32 %v1982, 0.2
        %v2033 = vmul.f32 %v1987, 0.2
        %v2034 = vmul.f32 %v1992, 0.2
        %v2035 = vmul.f32 %v1997, 0.2
        %v2036 = vmul.f32 %v2002, 0.2
        %v2037 = vsel %vm2005, %v1927, %v2021
        %v2038 = vsel %vm2006, %v1932, %v2022
        %v2039 = vsel %vm2007, %v1937, %v2023
        %v2040 = vsel %vm2008, %v1942, %v2024
        %v2041 = vsel %vm2009, %v1947, %v2025
        %v2042 = vsel %vm2010, %v1952, %v2026
        %v2043 = vsel %vm2011, %v1957, %v2027
        %v2044 = vsel %vm2012, %v1962, %v2028
        %v2045 = vsel %vm2013, %v1967, %v2029
        %v2046 = vsel %vm2014, %v1972, %v2030
        %v2047 = vsel %vm2015, %v1977, %v2031
        %v2048 = vsel %vm2016, %v1982, %v2032
        %v2049 = vsel %vm2017, %v1987, %v2033
        %v2050 = vsel %vm2018, %v1992, %v2034
        %v2051 = vsel %vm2019, %v1997, %v2035
        %v2052 = vsel %vm2020, %v2002, %v2036
        %2053 = vst [vmem:[%s573] sm:$0xff] %v2037
        %2054 = vst [vmem:[%s573 + $0x8] sm:$0xff] %v2038
        %2055 = vst [vmem:[%s573 + $0x10] sm:$0xff] %v2039
        %2056 = vst [vmem:[%s573 + $0x18] sm:$0xff] %v2040
        %2057 = vst [vmem:[%s573 + $0x20] sm:$0xff] %v2041
        %2058 = vst [vmem:[%s573 + $0x28] sm:$0xff] %v2042
        %2059 = vst [vmem:[%s573 + $0x30] sm:$0xff] %v2043
        %2060 = vst [vmem:[%s573 + $0x38] sm:$0xff] %v2044
        %2061 = vst [vmem:[%s573 + $0x40] sm:$0xff] %v2045
        %2062 = vst [vmem:[%s573 + $0x48] sm:$0xff] %v2046
        %2063 = vst [vmem:[%s573 + $0x50] sm:$0xff] %v2047
        %2064 = vst [vmem:[%s573 + $0x58] sm:$0xff] %v2048
        %2065 = vst [vmem:[%s573 + $0x60] sm:$0xff] %v2049
        %2066 = vst [vmem:[%s573 + $0x68] sm:$0xff] %v2050
        %2067 = vst [vmem:[%s573 + $0x70] sm:$0xff] %v2051
        %2068 = vst [vmem:[%s573 + $0x78] sm:$0xff] %v2052
        %v2069 = vld [vmem:[#allocation16] sm:$0xff]
        %v2070 = vld [vmem:[#allocation16 + $0x8] sm:$0xff]
        %v2071 = vld [vmem:[#allocation16 + $0x10] sm:$0xff]
        %v2072 = vld [vmem:[#allocation16 + $0x18] sm:$0xff]
        %v2073 = vld [vmem:[#allocation16 + $0x20] sm:$0xff]
        %v2074 = vld [vmem:[#allocation16 + $0x28] sm:$0xff]
        %v2075 = vld [vmem:[#allocation16 + $0x30] sm:$0xff]
        %v2076 = vld [vmem:[#allocation16 + $0x38] sm:$0xff]
        %v2077 = vld [vmem:[#allocation16 + $0x40] sm:$0xff]
        %v2078 = vld [vmem:[#allocation16 + $0x48] sm:$0xff]
        %v2079 = vld [vmem:[#allocation16 + $0x50] sm:$0xff]
        %v2080 = vld [vmem:[#allocation16 + $0x58] sm:$0xff]
        %v2081 = vld [vmem:[#allocation16 + $0x60] sm:$0xff]
        %v2082 = vld [vmem:[#allocation16 + $0x68] sm:$0xff]
        %v2083 = vld [vmem:[#allocation16 + $0x70] sm:$0xff]
        %v2084 = vld [vmem:[#allocation16 + $0x78] sm:$0xff]
        %2085 = vmatprep.subr.mxu0 0.0
        %2086 = vmatpush1.msra.mxu0 %v2069
        %2087 = vmatprep.subr.mxu0 0.0
        %2088 = vmatpush1.msra.mxu0 %v2070
        %2089 = vmatprep.subr.mxu0 0.0
        %2090 = vmatpush1.msra.mxu0 %v2071
        %2091 = vmatprep.subr.mxu0 0.0
        %2092 = vmatpush1.msra.mxu0 %v2072
        %2093 = vmatprep.subr.mxu0 0.0
        %2094 = vmatpush1.msra.mxu0 %v2073
        %2095 = vmatprep.subr.mxu0 0.0
        %2096 = vmatpush1.msra.mxu0 %v2074
        %2097 = vmatprep.subr.mxu0 0.0
        %2098 = vmatpush1.msra.mxu0 %v2075
        %2099 = vmatprep.subr.mxu0 0.0
        %2100 = vmatpush1.msra.mxu0 %v2076
        %2101 = vmatprep.subr.mxu0 0.0
        %2102 = vmatpush1.msra.mxu0 %v2077
        %2103 = vmatprep.subr.mxu0 0.0
        %2104 = vmatpush1.msra.mxu0 %v2078
        %2105 = vmatprep.subr.mxu0 0.0
        %2106 = vmatpush1.msra.mxu0 %v2079
        %2107 = vmatprep.subr.mxu0 0.0
        %2108 = vmatpush1.msra.mxu0 %v2080
        %2109 = vmatprep.subr.mxu0 0.0
        %2110 = vmatpush1.msra.mxu0 %v2081
        %2111 = vmatprep.subr.mxu0 0.0
        %2112 = vmatpush1.msra.mxu0 %v2082
        %2113 = vmatprep.subr.mxu0 0.0
        %2114 = vmatpush1.msra.mxu0 %v2083
        %2115 = vmatprep.subr.mxu0 0.0
        %2116 = vmatpush1.msra.mxu0 %v2084
        %2117 = vmatprep.subr.mxu0 0.0
        %2118 = vmatpush1.msra.mxu0 0.0
        %2119 = vmatprep.subr.mxu0 0.0
        %2120 = vmatpush1.msra.mxu0 0.0
        %2121 = vmatprep.subr.mxu0 0.0
        %2122 = vmatpush1.msra.mxu0 0.0
        %2123 = vmatprep.subr.mxu0 0.0
        %2124 = vmatpush1.msra.mxu0 0.0
        %2125 = vmatprep.subr.mxu0 0.0
        %2126 = vmatpush1.msra.mxu0 0.0
        %2127 = vmatprep.subr.mxu0 0.0
        %2128 = vmatpush1.msra.mxu0 0.0
        %2129 = vmatprep.subr.mxu0 0.0
        %2130 = vmatpush1.msra.mxu0 0.0
        %2131 = vmatprep.subr.mxu0 0.0
        %2132 = vmatpush1.msra.mxu0 0.0
        %2133 = vmatprep.subr.mxu0 0.0
        %2134 = vmatpush1.msra.mxu0 0.0
        %2135 = vmatprep.subr.mxu0 0.0
        %2136 = vmatpush1.msra.mxu0 0.0
        %2137 = vmatprep.subr.mxu0 0.0
        %2138 = vmatpush1.msra.mxu0 0.0
        %2139 = vmatprep.subr.mxu0 0.0
        %2140 = vmatpush1.msra.mxu0 0.0
        %2141 = vmatprep.subr.mxu0 0.0
        %2142 = vmatpush1.msra.mxu0 0.0
        %2143 = vmatprep.subr.mxu0 0.0
        %2144 = vmatpush1.msra.mxu0 0.0
        %2145 = vmatprep.subr.mxu0 0.0
        %2146 = vmatpush1.msra.mxu0 0.0
        %2147 = vmatprep.subr.mxu0 0.0
        %2148 = vmatpush1.msra.mxu0 0.0
        %2149 = vmatprep.mubr.f32.mxu0 0.0
        %2150 = vmatmul.mubr.f32.gmra.mrb[0].mxu0 %v2037
        %v2151 = vpop.f32.mrb[0].mxu0
        %v2152 = vadd.f32 0.0, %v2151
        %v2153 = vpop.f32.mrb[0].mxu0
        %2154 = vmatprep.mubr.f32.mxu0 0.0
        %2155 = vmatmul.mubr.f32.gmra.mrb[0].mxu0 %v2038
        %v2156 = vpop.f32.mrb[0].mxu0
        %v2157 = vadd.f32 0.0, %v2156
        %v2158 = vpop.f32.mrb[0].mxu0
        %2159 = vmatprep.mubr.f32.mxu0 0.0
        %2160 = vmatmul.mubr.f32.gmra.mrb[0].mxu0 %v2039
        %v2161 = vpop.f32.mrb[0].mxu0
        %v2162 = vadd.f32 0.0, %v2161
        %v2163 = vpop.f32.mrb[0].mxu0
        %2164 = vmatprep.mubr.f32.mxu0 0.0
        %2165 = vmatmul.mubr.f32.gmra.mrb[0].mxu0 %v2040
        %v2166 = vpop.f32.mrb[0].mxu0
        %v2167 = vadd.f32 0.0, %v2166
        %v2168 = vpop.f32.mrb[0].mxu0
        %2169 = vmatprep.mubr.f32.mxu0 0.0
        %2170 = vmatmul.mubr.f32.gmra.mrb[0].mxu0 %v2041
        %v2171 = vpop.f32.mrb[0].mxu0
        %v2172 = vadd.f32 0.0, %v2171
        %v2173 = vpop.f32.mrb[0].mxu0
        %2174 = vmatprep.mubr.f32.mxu0 0.0
        %2175 = vmatmul.mubr.f32.gmra.mrb[0].mxu0 %v2042
        %v2176 = vpop.f32.mrb[0].mxu0
        %v2177 = vadd.f32 0.0, %v2176
        %v2178 = vpop.f32.mrb[0].mxu0
        %2179 = vmatprep.mubr.f32.mxu0 0.0
        %2180 = vmatmul.mubr.f32.gmra.mrb[0].mxu0 %v2043
        %v2181 = vpop.f32.mrb[0].mxu0
        %v2182 = vadd.f32 0.0, %v2181
        %v2183 = vpop.f32.mrb[0].mxu0
        %2184 = vmatprep.mubr.f32.mxu0 0.0
        %2185 = vmatmul.mubr.f32.gmra.mrb[0].mxu0 %v2044
        %v2186 = vpop.f32.mrb[0].mxu0
        %v2187 = vadd.f32 0.0, %v2186
        %v2188 = vpop.f32.mrb[0].mxu0
        %2189 = vmatprep.mubr.f32.mxu0 0.0
        %2190 = vmatmul.mubr.f32.gmra.mrb[0].mxu0 %v2045
        %v2191 = vpop.f32.mrb[0].mxu0
        %v2192 = vadd.f32 0.0, %v2191
        %v2193 = vpop.f32.mrb[0].mxu0
        %2194 = vmatprep.mubr.f32.mxu0 0.0
        %2195 = vmatmul.mubr.f32.gmra.mrb[0].mxu0 %v2046
        %v2196 = vpop.f32.mrb[0].mxu0
        %v2197 = vadd.f32 0.0, %v2196
        %v2198 = vpop.f32.mrb[0].mxu0
        %2199 = vmatprep.mubr.f32.mxu0 0.0
        %2200 = vmatmul.mubr.f32.gmra.mrb[0].mxu0 %v2047
        %v2201 = vpop.f32.mrb[0].mxu0
        %v2202 = vadd.f32 0.0, %v2201
        %v2203 = vpop.f32.mrb[0].mxu0
        %2204 = vmatprep.mubr.f32.mxu0 0.0
        %2205 = vmatmul.mubr.f32.gmra.mrb[0].mxu0 %v2048
        %v2206 = vpop.f32.mrb[0].mxu0
        %v2207 = vadd.f32 0.0, %v2206
        %v2208 = vpop.f32.mrb[0].mxu0
        %2209 = vmatprep.mubr.f32.mxu0 0.0
        %2210 = vmatmul.mubr.f32.gmra.mrb[0].mxu0 %v2049
        %v2211 = vpop.f32.mrb[0].mxu0
        %v2212 = vadd.f32 0.0, %v2211
        %v2213 = vpop.f32.mrb[0].mxu0
        %2214 = vmatprep.mubr.f32.mxu0 0.0
        %2215 = vmatmul.mubr.f32.gmra.mrb[0].mxu0 %v2050
        %v2216 = vpop.f32.mrb[0].mxu0
        %v2217 = vadd.f32 0.0, %v2216
        %v2218 = vpop.f32.mrb[0].mxu0
        %2219 = vmatprep.mubr.f32.mxu0 0.0
        %2220 = vmatmul.mubr.f32.gmra.mrb[0].mxu0 %v2051
        %v2221 = vpop.f32.mrb[0].mxu0
        %v2222 = vadd.f32 0.0, %v2221
        %v2223 = vpop.f32.mrb[0].mxu0
        %2224 = vmatprep.mubr.f32.mxu0 0.0
        %2225 = vmatmul.mubr.f32.gmra.mrb[0].mxu0 %v2052
        %v2226 = vpop.f32.mrb[0].mxu0
        %v2227 = vadd.f32 0.0, %v2226
        %v2228 = vpop.f32.mrb[0].mxu0
        %2229 = vdwg.mxu0
        %2230 = vst [vmem:[%s566] sm:$0xff] %v2152
        %2231 = vst [vmem:[%s566 + $0x8] sm:$0xff] %v2157
        %2232 = vst [vmem:[%s566 + $0x10] sm:$0xff] %v2162
        %2233 = vst [vmem:[%s566 + $0x18] sm:$0xff] %v2167
        %2234 = vst [vmem:[%s566 + $0x20] sm:$0xff] %v2172
        %2235 = vst [vmem:[%s566 + $0x28] sm:$0xff] %v2177
        %2236 = vst [vmem:[%s566 + $0x30] sm:$0xff] %v2182
        %2237 = vst [vmem:[%s566 + $0x38] sm:$0xff] %v2187
        %2238 = vst [vmem:[%s566 + $0x40] sm:$0xff] %v2192
        %2239 = vst [vmem:[%s566 + $0x48] sm:$0xff] %v2197
        %2240 = vst [vmem:[%s566 + $0x50] sm:$0xff] %v2202
        %2241 = vst [vmem:[%s566 + $0x58] sm:$0xff] %v2207
        %2242 = vst [vmem:[%s566 + $0x60] sm:$0xff] %v2212
        %2243 = vst [vmem:[%s566 + $0x68] sm:$0xff] %v2217
        %2244 = vst [vmem:[%s566 + $0x70] sm:$0xff] %v2222
        %2245 = vst [vmem:[%s566 + $0x78] sm:$0xff] %v2227
        %v2246 = vmul.f32 %v2037, %v2037
        %v2247 = vmul.f32 %v2038, %v2038
        %v2248 = vmul.f32 %v2039, %v2039
        %v2249 = vmul.f32 %v2040, %v2040
        %v2250 = vmul.f32 %v2041, %v2041
        %v2251 = vmul.f32 %v2042, %v2042
        %v2252 = vmul.f32 %v2043, %v2043
        %v2253 = vmul.f32 %v2044, %v2044
        %v2254 = vmul.f32 %v2045, %v2045
        %v2255 = vmul.f32 %v2046, %v2046
        %v2256 = vmul.f32 %v2047, %v2047
        %v2257 = vmul.f32 %v2048, %v2048
        %v2258 = vmul.f32 %v2049, %v2049
        %v2259 = vmul.f32 %v2050, %v2050
        %v2260 = vmul.f32 %v2051, %v2051
        %v2261 = vmul.f32 %v2052, %v2052
        %2262 = vadd.xlane.f32.xlu0 %v2246
        %v2263 = vpop.xlane.xlu0 %2262
        %2264 = vadd.xlane.f32.xlu0 %v2247
        %v2265 = vpop.xlane.xlu0 %2264
        %2266 = vadd.xlane.f32.xlu0 %v2248
        %v2267 = vpop.xlane.xlu0 %2266
        %2268 = vadd.xlane.f32.xlu0 %v2249
        %v2269 = vpop.xlane.xlu0 %2268
        %2270 = vadd.xlane.f32.xlu0 %v2250
        %v2271 = vpop.xlane.xlu0 %2270
        %2272 = vadd.xlane.f32.xlu0 %v2251
        %v2273 = vpop.xlane.xlu0 %2272
        %2274 = vadd.xlane.f32.xlu0 %v2252
        %v2275 = vpop.xlane.xlu0 %2274
        %2276 = vadd.xlane.f32.xlu0 %v2253
        %v2277 = vpop.xlane.xlu0 %2276
        %2278 = vadd.xlane.f32.xlu0 %v2254
        %v2279 = vpop.xlane.xlu0 %2278
        %2280 = vadd.xlane.f32.xlu0 %v2255
        %v2281 = vpop.xlane.xlu0 %2280
        %2282 = vadd.xlane.f32.xlu0 %v2256
        %v2283 = vpop.xlane.xlu0 %2282
        %2284 = vadd.xlane.f32.xlu0 %v2257
        %v2285 = vpop.xlane.xlu0 %2284
        %2286 = vadd.xlane.f32.xlu0 %v2258
        %v2287 = vpop.xlane.xlu0 %2286
        %2288 = vadd.xlane.f32.xlu0 %v2259
        %v2289 = vpop.xlane.xlu0 %2288
        %2290 = vadd.xlane.f32.xlu0 %v2260
        %v2291 = vpop.xlane.xlu0 %2290
        %2292 = vadd.xlane.f32.xlu0 %v2261
        %v2293 = vpop.xlane.xlu0 %2292
        %v2294 = vmul.f32 %v2069, %v2069
        %v2295 = vmul.f32 %v2070, %v2070
        %v2296 = vmul.f32 %v2071, %v2071
        %v2297 = vmul.f32 %v2072, %v2072
        %v2298 = vmul.f32 %v2073, %v2073
        %v2299 = vmul.f32 %v2074, %v2074
        %v2300 = vmul.f32 %v2075, %v2075
        %v2301 = vmul.f32 %v2076, %v2076
        %v2302 = vmul.f32 %v2077, %v2077
        %v2303 = vmul.f32 %v2078, %v2078
        %v2304 = vmul.f32 %v2079, %v2079
        %v2305 = vmul.f32 %v2080, %v2080
        %v2306 = vmul.f32 %v2081, %v2081
        %v2307 = vmul.f32 %v2082, %v2082
        %v2308 = vmul.f32 %v2083, %v2083
        %v2309 = vmul.f32 %v2084, %v2084
        %v2310 = vadd.f32 %v2294, %v2295
        %v2311 = vadd.f32 %v2310, %v2296
        %v2312 = vadd.f32 %v2311, %v2297
        %v2313 = vadd.f32 %v2312, %v2298
        %v2314 = vadd.f32 %v2313, %v2299
        %v2315 = vadd.f32 %v2314, %v2300
        %v2316 = vadd.f32 %v2315, %v2301
        %v2317 = vadd.f32 %v2316, %v2302
        %v2318 = vadd.f32 %v2317, %v2303
        %v2319 = vadd.f32 %v2318, %v2304
        %v2320 = vadd.f32 %v2319, %v2305
        %v2321 = vadd.f32 %v2320, %v2306
        %v2322 = vadd.f32 %v2321, %v2307
        %v2323 = vadd.f32 %v2322, %v2308
        %v2324 = vadd.f32 %v2323, %v2309
        %v2325 = vrot.slane %v2324, 4
        %v2326 = vadd.f32 %v2324, %v2325
        %v2327 = vrot.slane %v2326, 2
        %v2328 = vadd.f32 %v2326, %v2327
        %v2329 = vrot.slane %v2328, 1
        %v2330 = vadd.f32 %v2328, %v2329
        %v2331 = vadd.f32 %v2263, %v2330
        %v2332 = vadd.f32 %v2265, %v2330
        %v2333 = vadd.f32 %v2267, %v2330
        %v2334 = vadd.f32 %v2269, %v2330
        %v2335 = vadd.f32 %v2271, %v2330
        %v2336 = vadd.f32 %v2273, %v2330
        %v2337 = vadd.f32 %v2275, %v2330
        %v2338 = vadd.f32 %v2277, %v2330
        %v2339 = vadd.f32 %v2279, %v2330
        %v2340 = vadd.f32 %v2281, %v2330
        %v2341 = vadd.f32 %v2283, %v2330
        %v2342 = vadd.f32 %v2285, %v2330
        %v2343 = vadd.f32 %v2287, %v2330
        %v2344 = vadd.f32 %v2289, %v2330
        %v2345 = vadd.f32 %v2291, %v2330
        %v2346 = vadd.f32 %v2293, %v2330
        %v2347 = vmul.f32 %v2152, 2.0
        %v2348 = vmul.f32 %v2157, 2.0
        %v2349 = vmul.f32 %v2162, 2.0
        %v2350 = vmul.f32 %v2167, 2.0
        %v2351 = vmul.f32 %v2172, 2.0
        %v2352 = vmul.f32 %v2177, 2.0
        %v2353 = vmul.f32 %v2182, 2.0
        %v2354 = vmul.f32 %v2187, 2.0
        %v2355 = vmul.f32 %v2192, 2.0
        %v2356 = vmul.f32 %v2197, 2.0
        %v2357 = vmul.f32 %v2202, 2.0
        %v2358 = vmul.f32 %v2207, 2.0
        %v2359 = vmul.f32 %v2212, 2.0
        %v2360 = vmul.f32 %v2217, 2.0
        %v2361 = vmul.f32 %v2222, 2.0
        %v2362 = vmul.f32 %v2227, 2.0
        %v2363 = vsub.f32 %v2331, %v2347
        %v2364 = vsub.f32 %v2332, %v2348
        %v2365 = vsub.f32 %v2333, %v2349
        %v2366 = vsub.f32 %v2334, %v2350
        %v2367 = vsub.f32 %v2335, %v2351
        %v2368 = vsub.f32 %v2336, %v2352
        %v2369 = vsub.f32 %v2337, %v2353
        %v2370 = vsub.f32 %v2338, %v2354
        %v2371 = vsub.f32 %v2339, %v2355
        %v2372 = vsub.f32 %v2340, %v2356
        %v2373 = vsub.f32 %v2341, %v2357
        %v2374 = vsub.f32 %v2342, %v2358
        %v2375 = vsub.f32 %v2343, %v2359
        %v2376 = vsub.f32 %v2344, %v2360
        %v2377 = vsub.f32 %v2345, %v2361
        %v2378 = vsub.f32 %v2346, %v2362
        %v2379 = vmax.f32 %v2363, 0.0
        %v2380 = vmax.f32 %v2364, 0.0
        %v2381 = vmax.f32 %v2365, 0.0
        %v2382 = vmax.f32 %v2366, 0.0
        %v2383 = vmax.f32 %v2367, 0.0
        %v2384 = vmax.f32 %v2368, 0.0
        %v2385 = vmax.f32 %v2369, 0.0
        %v2386 = vmax.f32 %v2370, 0.0
        %v2387 = vmax.f32 %v2371, 0.0
        %v2388 = vmax.f32 %v2372, 0.0
        %v2389 = vmax.f32 %v2373, 0.0
        %v2390 = vmax.f32 %v2374, 0.0
        %v2391 = vmax.f32 %v2375, 0.0
        %v2392 = vmax.f32 %v2376, 0.0
        %v2393 = vmax.f32 %v2377, 0.0
        %v2394 = vmax.f32 %v2378, 0.0
        %v2395 = vrsqrt.pop %v2379
        %v2396 = vmul.f32 %v2379, %v2395
        %vm2397 = vcmp.eq.f32.partialorder %v2379, inf
        %v2398 = vsel %vm2397, %v2379, %v2396
        %vm2399 = vcmp.eq.f32.partialorder %v2379, 0.0
        %v2400 = vand.u32 %v2379, 2147483648
        %v2401 = vsel %vm2399, %v2400, %v2398
        %v2402 = vrsqrt.pop %v2380
        %v2403 = vmul.f32 %v2380, %v2402
        %vm2404 = vcmp.eq.f32.partialorder %v2380, inf
        %v2405 = vsel %vm2404, %v2380, %v2403
        %vm2406 = vcmp.eq.f32.partialorder %v2380, 0.0
        %v2407 = vand.u32 %v2380, 2147483648
        %v2408 = vsel %vm2406, %v2407, %v2405
        %v2409 = vrsqrt.pop %v2381
        %v2410 = vmul.f32 %v2381, %v2409
        %vm2411 = vcmp.eq.f32.partialorder %v2381, inf
        %v2412 = vsel %vm2411, %v2381, %v2410
        %vm2413 = vcmp.eq.f32.partialorder %v2381, 0.0
        %v2414 = vand.u32 %v2381, 2147483648
        %v2415 = vsel %vm2413, %v2414, %v2412
        %v2416 = vrsqrt.pop %v2382
        %v2417 = vmul.f32 %v2382, %v2416
        %vm2418 = vcmp.eq.f32.partialorder %v2382, inf
        %v2419 = vsel %vm2418, %v2382, %v2417
        %vm2420 = vcmp.eq.f32.partialorder %v2382, 0.0
        %v2421 = vand.u32 %v2382, 2147483648
        %v2422 = vsel %vm2420, %v2421, %v2419
        %v2423 = vrsqrt.pop %v2383
        %v2424 = vmul.f32 %v2383, %v2423
        %vm2425 = vcmp.eq.f32.partialorder %v2383, inf
        %v2426 = vsel %vm2425, %v2383, %v2424
        %vm2427 = vcmp.eq.f32.partialorder %v2383, 0.0
        %v2428 = vand.u32 %v2383, 2147483648
        %v2429 = vsel %vm2427, %v2428, %v2426
        %v2430 = vrsqrt.pop %v2384
        %v2431 = vmul.f32 %v2384, %v2430
        %vm2432 = vcmp.eq.f32.partialorder %v2384, inf
        %v2433 = vsel %vm2432, %v2384, %v2431
        %vm2434 = vcmp.eq.f32.partialorder %v2384, 0.0
        %v2435 = vand.u32 %v2384, 2147483648
        %v2436 = vsel %vm2434, %v2435, %v2433
        %v2437 = vrsqrt.pop %v2385
        %v2438 = vmul.f32 %v2385, %v2437
        %vm2439 = vcmp.eq.f32.partialorder %v2385, inf
        %v2440 = vsel %vm2439, %v2385, %v2438
        %vm2441 = vcmp.eq.f32.partialorder %v2385, 0.0
        %v2442 = vand.u32 %v2385, 2147483648
        %v2443 = vsel %vm2441, %v2442, %v2440
        %v2444 = vrsqrt.pop %v2386
        %v2445 = vmul.f32 %v2386, %v2444
        %vm2446 = vcmp.eq.f32.partialorder %v2386, inf
        %v2447 = vsel %vm2446, %v2386, %v2445
        %vm2448 = vcmp.eq.f32.partialorder %v2386, 0.0
        %v2449 = vand.u32 %v2386, 2147483648
        %v2450 = vsel %vm2448, %v2449, %v2447
        %v2451 = vrsqrt.pop %v2387
        %v2452 = vmul.f32 %v2387, %v2451
        %vm2453 = vcmp.eq.f32.partialorder %v2387, inf
        %v2454 = vsel %vm2453, %v2387, %v2452
        %vm2455 = vcmp.eq.f32.partialorder %v2387, 0.0
        %v2456 = vand.u32 %v2387, 2147483648
        %v2457 = vsel %vm2455, %v2456, %v2454
        %v2458 = vrsqrt.pop %v2388
        %v2459 = vmul.f32 %v2388, %v2458
        %vm2460 = vcmp.eq.f32.partialorder %v2388, inf
        %v2461 = vsel %vm2460, %v2388, %v2459
        %vm2462 = vcmp.eq.f32.partialorder %v2388, 0.0
        %v2463 = vand.u32 %v2388, 2147483648
        %v2464 = vsel %vm2462, %v2463, %v2461
        %v2465 = vrsqrt.pop %v2389
        %v2466 = vmul.f32 %v2389, %v2465
        %vm2467 = vcmp.eq.f32.partialorder %v2389, inf
        %v2468 = vsel %vm2467, %v2389, %v2466
        %vm2469 = vcmp.eq.f32.partialorder %v2389, 0.0
        %v2470 = vand.u32 %v2389, 2147483648
        %v2471 = vsel %vm2469, %v2470, %v2468
        %v2472 = vrsqrt.pop %v2390
        %v2473 = vmul.f32 %v2390, %v2472
        %vm2474 = vcmp.eq.f32.partialorder %v2390, inf
        %v2475 = vsel %vm2474, %v2390, %v2473
        %vm2476 = vcmp.eq.f32.partialorder %v2390, 0.0
        %v2477 = vand.u32 %v2390, 2147483648
        %v2478 = vsel %vm2476, %v2477, %v2475
        %v2479 = vrsqrt.pop %v2391
        %v2480 = vmul.f32 %v2391, %v2479
        %vm2481 = vcmp.eq.f32.partialorder %v2391, inf
        %v2482 = vsel %vm2481, %v2391, %v2480
        %vm2483 = vcmp.eq.f32.partialorder %v2391, 0.0
        %v2484 = vand.u32 %v2391, 2147483648
        %v2485 = vsel %vm2483, %v2484, %v2482
        %v2486 = vrsqrt.pop %v2392
        %v2487 = vmul.f32 %v2392, %v2486
        %vm2488 = vcmp.eq.f32.partialorder %v2392, inf
        %v2489 = vsel %vm2488, %v2392, %v2487
        %vm2490 = vcmp.eq.f32.partialorder %v2392, 0.0
        %v2491 = vand.u32 %v2392, 2147483648
        %v2492 = vsel %vm2490, %v2491, %v2489
        %v2493 = vrsqrt.pop %v2393
        %v2494 = vmul.f32 %v2393, %v2493
        %vm2495 = vcmp.eq.f32.partialorder %v2393, inf
        %v2496 = vsel %vm2495, %v2393, %v2494
        %vm2497 = vcmp.eq.f32.partialorder %v2393, 0.0
        %v2498 = vand.u32 %v2393, 2147483648
        %v2499 = vsel %vm2497, %v2498, %v2496
        %v2500 = vrsqrt.pop %v2394
        %v2501 = vmul.f32 %v2394, %v2500
        %vm2502 = vcmp.eq.f32.partialorder %v2394, inf
        %v2503 = vsel %vm2502, %v2394, %v2501
        %vm2504 = vcmp.eq.f32.partialorder %v2394, 0.0
        %v2505 = vand.u32 %v2394, 2147483648
        %v2506 = vsel %vm2504, %v2505, %v2503
        %v2507 = vsub.f32 0.0, %v2401
        %v2508 = vsub.f32 0.0, %v2408
        %v2509 = vsub.f32 0.0, %v2415
        %v2510 = vsub.f32 0.0, %v2422
        %v2511 = vsub.f32 0.0, %v2429
        %v2512 = vsub.f32 0.0, %v2436
        %v2513 = vsub.f32 0.0, %v2443
        %v2514 = vsub.f32 0.0, %v2450
        %v2515 = vsub.f32 0.0, %v2457
        %v2516 = vsub.f32 0.0, %v2464
        %v2517 = vsub.f32 0.0, %v2471
        %v2518 = vsub.f32 0.0, %v2478
        %v2519 = vsub.f32 0.0, %v2485
        %v2520 = vsub.f32 0.0, %v2492
        %v2521 = vsub.f32 0.0, %v2499
        %v2522 = vsub.f32 0.0, %v2506
        %v2523 = vrsqrt.pop %v2263
        %v2524 = vmul.f32 %v2263, %v2523
        %vm2525 = vcmp.eq.f32.partialorder %v2263, inf
        %v2526 = vsel %vm2525, %v2263, %v2524
        %vm2527 = vcmp.eq.f32.partialorder %v2263, 0.0
        %v2528 = vand.u32 %v2263, 2147483648
        %v2529 = vsel %vm2527, %v2528, %v2526
        %v2530 = vrsqrt.pop %v2265
        %v2531 = vmul.f32 %v2265, %v2530
        %vm2532 = vcmp.eq.f32.partialorder %v2265, inf
        %v2533 = vsel %vm2532, %v2265, %v2531
        %vm2534 = vcmp.eq.f32.partialorder %v2265, 0.0
        %v2535 = vand.u32 %v2265, 2147483648
        %v2536 = vsel %vm2534, %v2535, %v2533
        %v2537 = vrsqrt.pop %v2267
        %v2538 = vmul.f32 %v2267, %v2537
        %vm2539 = vcmp.eq.f32.partialorder %v2267, inf
        %v2540 = vsel %vm2539, %v2267, %v2538
        %vm2541 = vcmp.eq.f32.partialorder %v2267, 0.0
        %v2542 = vand.u32 %v2267, 2147483648
        %v2543 = vsel %vm2541, %v2542, %v2540
        %v2544 = vrsqrt.pop %v2269
        %v2545 = vmul.f32 %v2269, %v2544
        %vm2546 = vcmp.eq.f32.partialorder %v2269, inf
        %v2547 = vsel %vm2546, %v2269, %v2545
        %vm2548 = vcmp.eq.f32.partialorder %v2269, 0.0
        %v2549 = vand.u32 %v2269, 2147483648
        %v2550 = vsel %vm2548, %v2549, %v2547
        %v2551 = vrsqrt.pop %v2271
        %v2552 = vmul.f32 %v2271, %v2551
        %vm2553 = vcmp.eq.f32.partialorder %v2271, inf
        %v2554 = vsel %vm2553, %v2271, %v2552
        %vm2555 = vcmp.eq.f32.partialorder %v2271, 0.0
        %v2556 = vand.u32 %v2271, 2147483648
        %v2557 = vsel %vm2555, %v2556, %v2554
        %v2558 = vrsqrt.pop %v2273
        %v2559 = vmul.f32 %v2273, %v2558
        %vm2560 = vcmp.eq.f32.partialorder %v2273, inf
        %v2561 = vsel %vm2560, %v2273, %v2559
        %vm2562 = vcmp.eq.f32.partialorder %v2273, 0.0
        %v2563 = vand.u32 %v2273, 2147483648
        %v2564 = vsel %vm2562, %v2563, %v2561
        %v2565 = vrsqrt.pop %v2275
        %v2566 = vmul.f32 %v2275, %v2565
        %vm2567 = vcmp.eq.f32.partialorder %v2275, inf
        %v2568 = vsel %vm2567, %v2275, %v2566
        %vm2569 = vcmp.eq.f32.partialorder %v2275, 0.0
        %v2570 = vand.u32 %v2275, 2147483648
        %v2571 = vsel %vm2569, %v2570, %v2568
        %v2572 = vrsqrt.pop %v2277
        %v2573 = vmul.f32 %v2277, %v2572
        %vm2574 = vcmp.eq.f32.partialorder %v2277, inf
        %v2575 = vsel %vm2574, %v2277, %v2573
        %vm2576 = vcmp.eq.f32.partialorder %v2277, 0.0
        %v2577 = vand.u32 %v2277, 2147483648
        %v2578 = vsel %vm2576, %v2577, %v2575
        %v2579 = vrsqrt.pop %v2279
        %v2580 = vmul.f32 %v2279, %v2579
        %vm2581 = vcmp.eq.f32.partialorder %v2279, inf
        %v2582 = vsel %vm2581, %v2279, %v2580
        %vm2583 = vcmp.eq.f32.partialorder %v2279, 0.0
        %v2584 = vand.u32 %v2279, 2147483648
        %v2585 = vsel %vm2583, %v2584, %v2582
        %v2586 = vrsqrt.pop %v2281
        %v2587 = vmul.f32 %v2281, %v2586
        %vm2588 = vcmp.eq.f32.partialorder %v2281, inf
        %v2589 = vsel %vm2588, %v2281, %v2587
        %vm2590 = vcmp.eq.f32.partialorder %v2281, 0.0
        %v2591 = vand.u32 %v2281, 2147483648
        %v2592 = vsel %vm2590, %v2591, %v2589
        %v2593 = vrsqrt.pop %v2283
        %v2594 = vmul.f32 %v2283, %v2593
        %vm2595 = vcmp.eq.f32.partialorder %v2283, inf
        %v2596 = vsel %vm2595, %v2283, %v2594
        %vm2597 = vcmp.eq.f32.partialorder %v2283, 0.0
        %v2598 = vand.u32 %v2283, 2147483648
        %v2599 = vsel %vm2597, %v2598, %v2596
        %v2600 = vrsqrt.pop %v2285
        %v2601 = vmul.f32 %v2285, %v2600
        %vm2602 = vcmp.eq.f32.partialorder %v2285, inf
        %v2603 = vsel %vm2602, %v2285, %v2601
        %vm2604 = vcmp.eq.f32.partialorder %v2285, 0.0
        %v2605 = vand.u32 %v2285, 2147483648
        %v2606 = vsel %vm2604, %v2605, %v2603
        %v2607 = vrsqrt.pop %v2287
        %v2608 = vmul.f32 %v2287, %v2607
        %vm2609 = vcmp.eq.f32.partialorder %v2287, inf
        %v2610 = vsel %vm2609, %v2287, %v2608
        %vm2611 = vcmp.eq.f32.partialorder %v2287, 0.0
        %v2612 = vand.u32 %v2287, 2147483648
        %v2613 = vsel %vm2611, %v2612, %v2610
        %v2614 = vrsqrt.pop %v2289
        %v2615 = vmul.f32 %v2289, %v2614
        %vm2616 = vcmp.eq.f32.partialorder %v2289, inf
        %v2617 = vsel %vm2616, %v2289, %v2615
        %vm2618 = vcmp.eq.f32.partialorder %v2289, 0.0
        %v2619 = vand.u32 %v2289, 2147483648
        %v2620 = vsel %vm2618, %v2619, %v2617
        %v2621 = vrsqrt.pop %v2291
        %v2622 = vmul.f32 %v2291, %v2621
        %vm2623 = vcmp.eq.f32.partialorder %v2291, inf
        %v2624 = vsel %vm2623, %v2291, %v2622
        %vm2625 = vcmp.eq.f32.partialorder %v2291, 0.0
        %v2626 = vand.u32 %v2291, 2147483648
        %v2627 = vsel %vm2625, %v2626, %v2624
        %v2628 = vrsqrt.pop %v2293
        %v2629 = vmul.f32 %v2293, %v2628
        %vm2630 = vcmp.eq.f32.partialorder %v2293, inf
        %v2631 = vsel %vm2630, %v2293, %v2629
        %vm2632 = vcmp.eq.f32.partialorder %v2293, 0.0
        %v2633 = vand.u32 %v2293, 2147483648
        %v2634 = vsel %vm2632, %v2633, %v2631
        %v2635 = vrsqrt.pop %v2330
        %v2636 = vmul.f32 %v2330, %v2635
        %vm2637 = vcmp.eq.f32.partialorder %v2330, inf
        %v2638 = vsel %vm2637, %v2330, %v2636
        %vm2639 = vcmp.eq.f32.partialorder %v2330, 0.0
        %v2640 = vand.u32 %v2330, 2147483648
        %v2641 = vsel %vm2639, %v2640, %v2638
        %v2642 = vmul.f32 %v2529, %v2641
        %v2643 = vmul.f32 %v2536, %v2641
        %v2644 = vmul.f32 %v2543, %v2641
        %v2645 = vmul.f32 %v2550, %v2641
        %v2646 = vmul.f32 %v2557, %v2641
        %v2647 = vmul.f32 %v2564, %v2641
        %v2648 = vmul.f32 %v2571, %v2641
        %v2649 = vmul.f32 %v2578, %v2641
        %v2650 = vmul.f32 %v2585, %v2641
        %v2651 = vmul.f32 %v2592, %v2641
        %v2652 = vmul.f32 %v2599, %v2641
        %v2653 = vmul.f32 %v2606, %v2641
        %v2654 = vmul.f32 %v2613, %v2641
        %v2655 = vmul.f32 %v2620, %v2641
        %v2656 = vmul.f32 %v2627, %v2641
        %v2657 = vmul.f32 %v2634, %v2641
        %v2658 = vmax.f32 %v2642, 1e-06
        %v2659 = vmax.f32 %v2643, 1e-06
        %v2660 = vmax.f32 %v2644, 1e-06
        %v2661 = vmax.f32 %v2645, 1e-06
        %v2662 = vmax.f32 %v2646, 1e-06
        %v2663 = vmax.f32 %v2647, 1e-06
        %v2664 = vmax.f32 %v2648, 1e-06
        %v2665 = vmax.f32 %v2649, 1e-06
        %v2666 = vmax.f32 %v2650, 1e-06
        %v2667 = vmax.f32 %v2651, 1e-06
        %v2668 = vmax.f32 %v2652, 1e-06
        %v2669 = vmax.f32 %v2653, 1e-06
        %v2670 = vmax.f32 %v2654, 1e-06
        %v2671 = vmax.f32 %v2655, 1e-06
        %v2672 = vmax.f32 %v2656, 1e-06
        %v2673 = vmax.f32 %v2657, 1e-06
        %v2674 = vrcp.pop %v2658
        %v2675 = vmul.f32 %v2152, %v2674
        %v2676 = vrcp.pop %v2659
        %v2677 = vmul.f32 %v2157, %v2676
        %v2678 = vrcp.pop %v2660
        %v2679 = vmul.f32 %v2162, %v2678
        %v2680 = vrcp.pop %v2661
        %v2681 = vmul.f32 %v2167, %v2680
        %v2682 = vrcp.pop %v2662
        %v2683 = vmul.f32 %v2172, %v2682
        %v2684 = vrcp.pop %v2663
        %v2685 = vmul.f32 %v2177, %v2684
        %v2686 = vrcp.pop %v2664
        %v2687 = vmul.f32 %v2182, %v2686
        %v2688 = vrcp.pop %v2665
        %v2689 = vmul.f32 %v2187, %v2688
        %v2690 = vrcp.pop %v2666
        %v2691 = vmul.f32 %v2192, %v2690
        %v2692 = vrcp.pop %v2667
        %v2693 = vmul.f32 %v2197, %v2692
        %v2694 = vrcp.pop %v2668
        %v2695 = vmul.f32 %v2202, %v2694
        %v2696 = vrcp.pop %v2669
        %v2697 = vmul.f32 %v2207, %v2696
        %v2698 = vrcp.pop %v2670
        %v2699 = vmul.f32 %v2212, %v2698
        %v2700 = vrcp.pop %v2671
        %v2701 = vmul.f32 %v2217, %v2700
        %v2702 = vrcp.pop %v2672
        %v2703 = vmul.f32 %v2222, %v2702
        %v2704 = vrcp.pop %v2673
        %v2705 = vmul.f32 %v2227, %v2704
        %v2706 = vlaneseq
        %v2707 = vand.u32 %v2706, 127
        %vm2708 = vcmp.lt.s32.totalorder %v2707, 8
        %v2709 = vsel %vm2708, %v2507, -inf
        %v2710 = vsel %vm2708, %v2508, -inf
        %v2711 = vsel %vm2708, %v2509, -inf
        %v2712 = vsel %vm2708, %v2510, -inf
        %v2713 = vsel %vm2708, %v2511, -inf
        %v2714 = vsel %vm2708, %v2512, -inf
        %v2715 = vsel %vm2708, %v2513, -inf
        %v2716 = vsel %vm2708, %v2514, -inf
        %v2717 = vsel %vm2708, %v2515, -inf
        %v2718 = vsel %vm2708, %v2516, -inf
        %v2719 = vsel %vm2708, %v2517, -inf
        %v2720 = vsel %vm2708, %v2518, -inf
        %v2721 = vsel %vm2708, %v2519, -inf
        %v2722 = vsel %vm2708, %v2520, -inf
        %v2723 = vsel %vm2708, %v2521, -inf
        %v2724 = vsel %vm2708, %v2522, -inf
        %2725 = vmax.xlane.f32.xlu0 %v2709
        %v2726 = vpop.xlane.xlu0 %2725
        %2727 = vmax.xlane.f32.xlu0 %v2710
        %v2728 = vpop.xlane.xlu0 %2727
        %2729 = vmax.xlane.f32.xlu0 %v2711
        %v2730 = vpop.xlane.xlu0 %2729
        %2731 = vmax.xlane.f32.xlu0 %v2712
        %v2732 = vpop.xlane.xlu0 %2731
        %2733 = vmax.xlane.f32.xlu0 %v2713
        %v2734 = vpop.xlane.xlu0 %2733
        %2735 = vmax.xlane.f32.xlu0 %v2714
        %v2736 = vpop.xlane.xlu0 %2735
        %2737 = vmax.xlane.f32.xlu0 %v2715
        %v2738 = vpop.xlane.xlu0 %2737
        %2739 = vmax.xlane.f32.xlu0 %v2716
        %v2740 = vpop.xlane.xlu0 %2739
        %2741 = vmax.xlane.f32.xlu0 %v2717
        %v2742 = vpop.xlane.xlu0 %2741
        %2743 = vmax.xlane.f32.xlu0 %v2718
        %v2744 = vpop.xlane.xlu0 %2743
        %2745 = vmax.xlane.f32.xlu0 %v2719
        %v2746 = vpop.xlane.xlu0 %2745
        %2747 = vmax.xlane.f32.xlu0 %v2720
        %v2748 = vpop.xlane.xlu0 %2747
        %2749 = vmax.xlane.f32.xlu0 %v2721
        %v2750 = vpop.xlane.xlu0 %2749
        %2751 = vmax.xlane.f32.xlu0 %v2722
        %v2752 = vpop.xlane.xlu0 %2751
        %2753 = vmax.xlane.f32.xlu0 %v2723
        %v2754 = vpop.xlane.xlu0 %2753
        %2755 = vmax.xlane.f32.xlu0 %v2724
        %v2756 = vpop.xlane.xlu0 %2755
        %v2757 = vsub.f32 %v2507, %v2726
        %v2758 = vsub.f32 %v2508, %v2728
        %v2759 = vsub.f32 %v2509, %v2730
        %v2760 = vsub.f32 %v2510, %v2732
        %v2761 = vsub.f32 %v2511, %v2734
        %v2762 = vsub.f32 %v2512, %v2736
        %v2763 = vsub.f32 %v2513, %v2738
        %v2764 = vsub.f32 %v2514, %v2740
        %v2765 = vsub.f32 %v2515, %v2742
        %v2766 = vsub.f32 %v2516, %v2744
        %v2767 = vsub.f32 %v2517, %v2746
        %v2768 = vsub.f32 %v2518, %v2748
        %v2769 = vsub.f32 %v2519, %v2750
        %v2770 = vsub.f32 %v2520, %v2752
        %v2771 = vsub.f32 %v2521, %v2754
        %v2772 = vsub.f32 %v2522, %v2756
        %v2773 = vmul.f32 %v2757, 1.442695
        %v2774 = vpow.pop %v2773
        %v2775 = vmul.f32 %v2758, 1.442695
        %v2776 = vpow.pop %v2775
        %v2777 = vmul.f32 %v2759, 1.442695
        %v2778 = vpow.pop %v2777
        %v2779 = vmul.f32 %v2760, 1.442695
        %v2780 = vpow.pop %v2779
        %v2781 = vmul.f32 %v2761, 1.442695
        %v2782 = vpow.pop %v2781
        %v2783 = vmul.f32 %v2762, 1.442695
        %v2784 = vpow.pop %v2783
        %v2785 = vmul.f32 %v2763, 1.442695
        %v2786 = vpow.pop %v2785
        %v2787 = vmul.f32 %v2764, 1.442695
        %v2788 = vpow.pop %v2787
        %v2789 = vmul.f32 %v2765, 1.442695
        %v2790 = vpow.pop %v2789
        %v2791 = vmul.f32 %v2766, 1.442695
        %v2792 = vpow.pop %v2791
        %v2793 = vmul.f32 %v2767, 1.442695
        %v2794 = vpow.pop %v2793
        %v2795 = vmul.f32 %v2768, 1.442695
        %v2796 = vpow.pop %v2795
        %v2797 = vmul.f32 %v2769, 1.442695
        %v2798 = vpow.pop %v2797
        %v2799 = vmul.f32 %v2770, 1.442695
        %v2800 = vpow.pop %v2799
        %v2801 = vmul.f32 %v2771, 1.442695
        %v2802 = vpow.pop %v2801
        %v2803 = vmul.f32 %v2772, 1.442695
        %v2804 = vpow.pop %v2803
        %v2805 = vsel %vm2708, %v2774, 0.0
        %v2806 = vsel %vm2708, %v2776, 0.0
        %v2807 = vsel %vm2708, %v2778, 0.0
        %v2808 = vsel %vm2708, %v2780, 0.0
        %v2809 = vsel %vm2708, %v2782, 0.0
        %v2810 = vsel %vm2708, %v2784, 0.0
        %v2811 = vsel %vm2708, %v2786, 0.0
        %v2812 = vsel %vm2708, %v2788, 0.0
        %v2813 = vsel %vm2708, %v2790, 0.0
        %v2814 = vsel %vm2708, %v2792, 0.0
        %v2815 = vsel %vm2708, %v2794, 0.0
        %v2816 = vsel %vm2708, %v2796, 0.0
        %v2817 = vsel %vm2708, %v2798, 0.0
        %v2818 = vsel %vm2708, %v2800, 0.0
        %v2819 = vsel %vm2708, %v2802, 0.0
        %v2820 = vsel %vm2708, %v2804, 0.0
        %2821 = vadd.xlane.f32.xlu0 %v2805
        %v2822 = vpop.xlane.xlu0 %2821
        %2823 = vadd.xlane.f32.xlu0 %v2806
        %v2824 = vpop.xlane.xlu0 %2823
        %2825 = vadd.xlane.f32.xlu0 %v2807
        %v2826 = vpop.xlane.xlu0 %2825
        %2827 = vadd.xlane.f32.xlu0 %v2808
        %v2828 = vpop.xlane.xlu0 %2827
        %2829 = vadd.xlane.f32.xlu0 %v2809
        %v2830 = vpop.xlane.xlu0 %2829
        %2831 = vadd.xlane.f32.xlu0 %v2810
        %v2832 = vpop.xlane.xlu0 %2831
        %2833 = vadd.xlane.f32.xlu0 %v2811
        %v2834 = vpop.xlane.xlu0 %2833
        %2835 = vadd.xlane.f32.xlu0 %v2812
        %v2836 = vpop.xlane.xlu0 %2835
        %2837 = vadd.xlane.f32.xlu0 %v2813
        %v2838 = vpop.xlane.xlu0 %2837
        %2839 = vadd.xlane.f32.xlu0 %v2814
        %v2840 = vpop.xlane.xlu0 %2839
        %2841 = vadd.xlane.f32.xlu0 %v2815
        %v2842 = vpop.xlane.xlu0 %2841
        %2843 = vadd.xlane.f32.xlu0 %v2816
        %v2844 = vpop.xlane.xlu0 %2843
        %2845 = vadd.xlane.f32.xlu0 %v2817
        %v2846 = vpop.xlane.xlu0 %2845
        %2847 = vadd.xlane.f32.xlu0 %v2818
        %v2848 = vpop.xlane.xlu0 %2847
        %2849 = vadd.xlane.f32.xlu0 %v2819
        %v2850 = vpop.xlane.xlu0 %2849
        %2851 = vadd.xlane.f32.xlu0 %v2820
        %v2852 = vpop.xlane.xlu0 %2851
        %v2853 = vlog2.pop %v2822
        %v2854 = vmul.f32 %v2853, 0.6931472
        %v2855 = vlog2.pop %v2824
        %v2856 = vmul.f32 %v2855, 0.6931472
        %v2857 = vlog2.pop %v2826
        %v2858 = vmul.f32 %v2857, 0.6931472
        %v2859 = vlog2.pop %v2828
        %v2860 = vmul.f32 %v2859, 0.6931472
        %v2861 = vlog2.pop %v2830
        %v2862 = vmul.f32 %v2861, 0.6931472
        %v2863 = vlog2.pop %v2832
        %v2864 = vmul.f32 %v2863, 0.6931472
        %v2865 = vlog2.pop %v2834
        %v2866 = vmul.f32 %v2865, 0.6931472
        %v2867 = vlog2.pop %v2836
        %v2868 = vmul.f32 %v2867, 0.6931472
        %v2869 = vlog2.pop %v2838
        %v2870 = vmul.f32 %v2869, 0.6931472
        %v2871 = vlog2.pop %v2840
        %v2872 = vmul.f32 %v2871, 0.6931472
        %v2873 = vlog2.pop %v2842
        %v2874 = vmul.f32 %v2873, 0.6931472
        %v2875 = vlog2.pop %v2844
        %v2876 = vmul.f32 %v2875, 0.6931472
        %v2877 = vlog2.pop %v2846
        %v2878 = vmul.f32 %v2877, 0.6931472
        %v2879 = vlog2.pop %v2848
        %v2880 = vmul.f32 %v2879, 0.6931472
        %v2881 = vlog2.pop %v2850
        %v2882 = vmul.f32 %v2881, 0.6931472
        %v2883 = vlog2.pop %v2852
        %v2884 = vmul.f32 %v2883, 0.6931472
        %v2885 = vsub.f32 %v2757, %v2854
        %v2886 = vsub.f32 %v2758, %v2856
        %v2887 = vsub.f32 %v2759, %v2858
        %v2888 = vsub.f32 %v2760, %v2860
        %v2889 = vsub.f32 %v2761, %v2862
        %v2890 = vsub.f32 %v2762, %v2864
        %v2891 = vsub.f32 %v2763, %v2866
        %v2892 = vsub.f32 %v2764, %v2868
        %v2893 = vsub.f32 %v2765, %v2870
        %v2894 = vsub.f32 %v2766, %v2872
        %v2895 = vsub.f32 %v2767, %v2874
        %v2896 = vsub.f32 %v2768, %v2876
        %v2897 = vsub.f32 %v2769, %v2878
        %v2898 = vsub.f32 %v2770, %v2880
        %v2899 = vsub.f32 %v2771, %v2882
        %v2900 = vsub.f32 %v2772, %v2884
        %v2901 = vsel %vm2708, %v2675, -inf
        %v2902 = vsel %vm2708, %v2677, -inf
        %v2903 = vsel %vm2708, %v2679, -inf
        %v2904 = vsel %vm2708, %v2681, -inf
        %v2905 = vsel %vm2708, %v2683, -inf
        %v2906 = vsel %vm2708, %v2685, -inf
        %v2907 = vsel %vm2708, %v2687, -inf
        %v2908 = vsel %vm2708, %v2689, -inf
        %v2909 = vsel %vm2708, %v2691, -inf
        %v2910 = vsel %vm2708, %v2693, -inf
        %v2911 = vsel %vm2708, %v2695, -inf
        %v2912 = vsel %vm2708, %v2697, -inf
        %v2913 = vsel %vm2708, %v2699, -inf
        %v2914 = vsel %vm2708, %v2701, -inf
        %v2915 = vsel %vm2708, %v2703, -inf
        %v2916 = vsel %vm2708, %v2705, -inf
        %2917 = vmax.xlane.f32.xlu0 %v2901
        %v2918 = vpop.xlane.xlu0 %2917
        %2919 = vmax.xlane.f32.xlu0 %v2902
        %v2920 = vpop.xlane.xlu0 %2919
        %2921 = vmax.xlane.f32.xlu0 %v2903
        %v2922 = vpop.xlane.xlu0 %2921
        %2923 = vmax.xlane.f32.xlu0 %v2904
        %v2924 = vpop.xlane.xlu0 %2923
        %2925 = vmax.xlane.f32.xlu0 %v2905
        %v2926 = vpop.xlane.xlu0 %2925
        %2927 = vmax.xlane.f32.xlu0 %v2906
        %v2928 = vpop.xlane.xlu0 %2927
        %2929 = vmax.xlane.f32.xlu0 %v2907
        %v2930 = vpop.xlane.xlu0 %2929
        %2931 = vmax.xlane.f32.xlu0 %v2908
        %v2932 = vpop.xlane.xlu0 %2931
        %2933 = vmax.xlane.f32.xlu0 %v2909
        %v2934 = vpop.xlane.xlu0 %2933
        %2935 = vmax.xlane.f32.xlu0 %v2910
        %v2936 = vpop.xlane.xlu0 %2935
        %2937 = vmax.xlane.f32.xlu0 %v2911
        %v2938 = vpop.xlane.xlu0 %2937
        %2939 = vmax.xlane.f32.xlu0 %v2912
        %v2940 = vpop.xlane.xlu0 %2939
        %2941 = vmax.xlane.f32.xlu0 %v2913
        %v2942 = vpop.xlane.xlu0 %2941
        %2943 = vmax.xlane.f32.xlu0 %v2914
        %v2944 = vpop.xlane.xlu0 %2943
        %2945 = vmax.xlane.f32.xlu0 %v2915
        %v2946 = vpop.xlane.xlu0 %2945
        %2947 = vmax.xlane.f32.xlu0 %v2916
        %v2948 = vpop.xlane.xlu0 %2947
        %v2949 = vsub.f32 %v2675, %v2918
        %v2950 = vsub.f32 %v2677, %v2920
        %v2951 = vsub.f32 %v2679, %v2922
        %v2952 = vsub.f32 %v2681, %v2924
        %v2953 = vsub.f32 %v2683, %v2926
        %v2954 = vsub.f32 %v2685, %v2928
        %v2955 = vsub.f32 %v2687, %v2930
        %v2956 = vsub.f32 %v2689, %v2932
        %v2957 = vsub.f32 %v2691, %v2934
        %v2958 = vsub.f32 %v2693, %v2936
        %v2959 = vsub.f32 %v2695, %v2938
        %v2960 = vsub.f32 %v2697, %v2940
        %v2961 = vsub.f32 %v2699, %v2942
        %v2962 = vsub.f32 %v2701, %v2944
        %v2963 = vsub.f32 %v2703, %v2946
        %v2964 = vsub.f32 %v2705, %v2948
        %v2965 = vmul.f32 %v2949, 1.442695
        %v2966 = vpow.pop %v2965
        %v2967 = vmul.f32 %v2950, 1.442695
        %v2968 = vpow.pop %v2967
        %v2969 = vmul.f32 %v2951, 1.442695
        %v2970 = vpow.pop %v2969
        %v2971 = vmul.f32 %v2952, 1.442695
        %v2972 = vpow.pop %v2971
        %v2973 = vmul.f32 %v2953, 1.442695
        %v2974 = vpow.pop %v2973
        %v2975 = vmul.f32 %v2954, 1.442695
        %v2976 = vpow.pop %v2975
        %v2977 = vmul.f32 %v2955, 1.442695
        %v2978 = vpow.pop %v2977
        %v2979 = vmul.f32 %v2956, 1.442695
        %v2980 = vpow.pop %v2979
        %v2981 = vmul.f32 %v2957, 1.442695
        %v2982 = vpow.pop %v2981
        %v2983 = vmul.f32 %v2958, 1.442695
        %v2984 = vpow.pop %v2983
        %v2985 = vmul.f32 %v2959, 1.442695
        %v2986 = vpow.pop %v2985
        %v2987 = vmul.f32 %v2960, 1.442695
        %v2988 = vpow.pop %v2987
        %v2989 = vmul.f32 %v2961, 1.442695
        %v2990 = vpow.pop %v2989
        %v2991 = vmul.f32 %v2962, 1.442695
        %v2992 = vpow.pop %v2991
        %v2993 = vmul.f32 %v2963, 1.442695
        %v2994 = vpow.pop %v2993
        %v2995 = vmul.f32 %v2964, 1.442695
        %v2996 = vpow.pop %v2995
        %v2997 = vsel %vm2708, %v2966, 0.0
        %v2998 = vsel %vm2708, %v2968, 0.0
        %v2999 = vsel %vm2708, %v2970, 0.0
        %v3000 = vsel %vm2708, %v2972, 0.0
        %v3001 = vsel %vm2708, %v2974, 0.0
        %v3002 = vsel %vm2708, %v2976, 0.0
        %v3003 = vsel %vm2708, %v2978, 0.0
        %v3004 = vsel %vm2708, %v2980, 0.0
        %v3005 = vsel %vm2708, %v2982, 0.0
        %v3006 = vsel %vm2708, %v2984, 0.0
        %v3007 = vsel %vm2708, %v2986, 0.0
        %v3008 = vsel %vm2708, %v2988, 0.0
        %v3009 = vsel %vm2708, %v2990, 0.0
        %v3010 = vsel %vm2708, %v2992, 0.0
        %v3011 = vsel %vm2708, %v2994, 0.0
        %v3012 = vsel %vm2708, %v2996, 0.0
        %3013 = vadd.xlane.f32.xlu0 %v2997
        %v3014 = vpop.xlane.xlu0 %3013
        %3015 = vadd.xlane.f32.xlu0 %v2998
        %v3016 = vpop.xlane.xlu0 %3015
        %3017 = vadd.xlane.f32.xlu0 %v2999
        %v3018 = vpop.xlane.xlu0 %3017
        %3019 = vadd.xlane.f32.xlu0 %v3000
        %v3020 = vpop.xlane.xlu0 %3019
        %3021 = vadd.xlane.f32.xlu0 %v3001
        %v3022 = vpop.xlane.xlu0 %3021
        %3023 = vadd.xlane.f32.xlu0 %v3002
        %v3024 = vpop.xlane.xlu0 %3023
        %3025 = vadd.xlane.f32.xlu0 %v3003
        %v3026 = vpop.xlane.xlu0 %3025
        %3027 = vadd.xlane.f32.xlu0 %v3004
        %v3028 = vpop.xlane.xlu0 %3027
        %3029 = vadd.xlane.f32.xlu0 %v3005
        %v3030 = vpop.xlane.xlu0 %3029
        %3031 = vadd.xlane.f32.xlu0 %v3006
        %v3032 = vpop.xlane.xlu0 %3031
        %3033 = vadd.xlane.f32.xlu0 %v3007
        %v3034 = vpop.xlane.xlu0 %3033
        %3035 = vadd.xlane.f32.xlu0 %v3008
        %v3036 = vpop.xlane.xlu0 %3035
        %3037 = vadd.xlane.f32.xlu0 %v3009
        %v3038 = vpop.xlane.xlu0 %3037
        %3039 = vadd.xlane.f32.xlu0 %v3010
        %v3040 = vpop.xlane.xlu0 %3039
        %3041 = vadd.xlane.f32.xlu0 %v3011
        %v3042 = vpop.xlane.xlu0 %3041
        %3043 = vadd.xlane.f32.xlu0 %v3012
        %v3044 = vpop.xlane.xlu0 %3043
        %v3045 = vlog2.pop %v3014
        %v3046 = vmul.f32 %v3045, 0.6931472
        %v3047 = vlog2.pop %v3016
        %v3048 = vmul.f32 %v3047, 0.6931472
        %v3049 = vlog2.pop %v3018
        %v3050 = vmul.f32 %v3049, 0.6931472
        %v3051 = vlog2.pop %v3020
        %v3052 = vmul.f32 %v3051, 0.6931472
        %v3053 = vlog2.pop %v3022
        %v3054 = vmul.f32 %v3053, 0.6931472
        %v3055 = vlog2.pop %v3024
        %v3056 = vmul.f32 %v3055, 0.6931472
        %v3057 = vlog2.pop %v3026
        %v3058 = vmul.f32 %v3057, 0.6931472
        %v3059 = vlog2.pop %v3028
        %v3060 = vmul.f32 %v3059, 0.6931472
        %v3061 = vlog2.pop %v3030
        %v3062 = vmul.f32 %v3061, 0.6931472
        %v3063 = vlog2.pop %v3032
        %v3064 = vmul.f32 %v3063, 0.6931472
        %v3065 = vlog2.pop %v3034
        %v3066 = vmul.f32 %v3065, 0.6931472
        %v3067 = vlog2.pop %v3036
        %v3068 = vmul.f32 %v3067, 0.6931472
        %v3069 = vlog2.pop %v3038
        %v3070 = vmul.f32 %v3069, 0.6931472
        %v3071 = vlog2.pop %v3040
        %v3072 = vmul.f32 %v3071, 0.6931472
        %v3073 = vlog2.pop %v3042
        %v3074 = vmul.f32 %v3073, 0.6931472
        %v3075 = vlog2.pop %v3044
        %v3076 = vmul.f32 %v3075, 0.6931472
        %v3077 = vsub.f32 %v2949, %v3046
        %v3078 = vsub.f32 %v2950, %v3048
        %v3079 = vsub.f32 %v2951, %v3050
        %v3080 = vsub.f32 %v2952, %v3052
        %v3081 = vsub.f32 %v2953, %v3054
        %v3082 = vsub.f32 %v2954, %v3056
        %v3083 = vsub.f32 %v2955, %v3058
        %v3084 = vsub.f32 %v2956, %v3060
        %v3085 = vsub.f32 %v2957, %v3062
        %v3086 = vsub.f32 %v2958, %v3064
        %v3087 = vsub.f32 %v2959, %v3066
        %v3088 = vsub.f32 %v2960, %v3068
        %v3089 = vsub.f32 %v2961, %v3070
        %v3090 = vsub.f32 %v2962, %v3072
        %v3091 = vsub.f32 %v2963, %v3074
        %v3092 = vsub.f32 %v2964, %v3076
        %v3093 = vadd.f32 %v2885, %v3077
        %v3094 = vadd.f32 %v2886, %v3078
        %v3095 = vadd.f32 %v2887, %v3079
        %v3096 = vadd.f32 %v2888, %v3080
        %v3097 = vadd.f32 %v2889, %v3081
        %v3098 = vadd.f32 %v2890, %v3082
        %v3099 = vadd.f32 %v2891, %v3083
        %v3100 = vadd.f32 %v2892, %v3084
        %v3101 = vadd.f32 %v2893, %v3085
        %v3102 = vadd.f32 %v2894, %v3086
        %v3103 = vadd.f32 %v2895, %v3087
        %v3104 = vadd.f32 %v2896, %v3088
        %v3105 = vadd.f32 %v2897, %v3089
        %v3106 = vadd.f32 %v2898, %v3090
        %v3107 = vadd.f32 %v2899, %v3091
        %v3108 = vadd.f32 %v2900, %v3092
        %v3109 = vmul.f32 %v3093, 0.5
        %v3110 = vmul.f32 %v3094, 0.5
        %v3111 = vmul.f32 %v3095, 0.5
        %v3112 = vmul.f32 %v3096, 0.5
        %v3113 = vmul.f32 %v3097, 0.5
        %v3114 = vmul.f32 %v3098, 0.5
        %v3115 = vmul.f32 %v3099, 0.5
        %v3116 = vmul.f32 %v3100, 0.5
        %v3117 = vmul.f32 %v3101, 0.5
        %v3118 = vmul.f32 %v3102, 0.5
        %v3119 = vmul.f32 %v3103, 0.5
        %v3120 = vmul.f32 %v3104, 0.5
        %v3121 = vmul.f32 %v3105, 0.5
        %v3122 = vmul.f32 %v3106, 0.5
        %v3123 = vmul.f32 %v3107, 0.5
        %v3124 = vmul.f32 %v3108, 0.5
        %3125 = vst [vmem:[%s580] sm:$0xff] %v3109
        %3126 = vst [vmem:[%s580 + $0x8] sm:$0xff] %v3110
        %3127 = vst [vmem:[%s580 + $0x10] sm:$0xff] %v3111
        %3128 = vst [vmem:[%s580 + $0x18] sm:$0xff] %v3112
        %3129 = vst [vmem:[%s580 + $0x20] sm:$0xff] %v3113
        %3130 = vst [vmem:[%s580 + $0x28] sm:$0xff] %v3114
        %3131 = vst [vmem:[%s580 + $0x30] sm:$0xff] %v3115
        %3132 = vst [vmem:[%s580 + $0x38] sm:$0xff] %v3116
        %3133 = vst [vmem:[%s580 + $0x40] sm:$0xff] %v3117
        %3134 = vst [vmem:[%s580 + $0x48] sm:$0xff] %v3118
        %3135 = vst [vmem:[%s580 + $0x50] sm:$0xff] %v3119
        %3136 = vst [vmem:[%s580 + $0x58] sm:$0xff] %v3120
        %3137 = vst [vmem:[%s580 + $0x60] sm:$0xff] %v3121
        %3138 = vst [vmem:[%s580 + $0x68] sm:$0xff] %v3122
        %3139 = vst [vmem:[%s580 + $0x70] sm:$0xff] %v3123
        %3140 = vst [vmem:[%s580 + $0x78] sm:$0xff] %v3124
        %s3141 = sand.u32 %s250, 1
        %s3142 = scalar_lea.sflag [#allocation4], %s3141
        %s3143 = sand.u32 %s250, 1
        %s3144 = smul.addr %s3143, 128
        %s3145 = scalar_lea.vmem [#allocation17], %s3144
        %s3146 = sand.u32 %s38, 1
        %s3147 = scalar_lea.sflag [#allocation19], %s3146
        %s3148 = sand.u32 %s276, 1
        %s3149 = smul.addr %s3148, 128
        %s3150 = scalar_lea.vmem [#allocation18], %s3149
        %s3151 = sand.u32 %s38, 1
        %s3152 = scalar_lea.sflag [#allocation19], %s3151
        %s3153 = sand.u32 %s302, 1
        %s3154 = smul.addr %s3153, 128
        %s3155 = scalar_lea.vmem [#allocation20], %s3154
        // Predicated region
        $region93: #{smn_forward.3} parent=55 // pred_check
          %p3156 = pneg %p260
        $region94: #{smn_forward.3} parent=55 // pred_check_branch
          %3158 = sbr.rel (%p3156) target = $region96
        $region95: #{smn_forward.3} parent=55 // pred_region
          %s3159 = smul.u32 16, %s38
          %s3161 = ssub.s32 2048, 2048
          %3162 = vsyncadd %s3142, %s3161
          %s3163 = smul.addr %s3159, 128
          %s3164 = scalar_lea.hbm %s9, %s3163
          %s3165 = sshll.u32 %s3145, 4
          %s3166 = int_to_ptr.vmem [resolvable:$true] %s3165
          %3171 = dma.vmem_to_hbm [thread:$0]  %s3166, 2048, %s3164, %s3142, 128, 128, 8
        $region96: #{smn_forward.3} parent=55 // pred_fallthru
          _
        // Predicated region
        $region97: #{smn_forward.3} parent=55 // pred_check
          %p3172 = pneg %p286
        $region98: #{smn_forward.3} parent=55 // pred_check_branch
          %3174 = sbr.rel (%p3172) target = $region100
        $region99: #{smn_forward.3} parent=55 // pred_region
          %s3175 = smul.u32 16, %s38
          %s3177 = ssub.s32 2048, 2048
          %3178 = vsyncadd %s3147, %s3177
          %s3179 = smul.addr %s3175, 128
          %s3180 = scalar_lea.hbm %s10, %s3179
          %s3181 = sshll.u32 %s3150, 4
          %s3182 = int_to_ptr.vmem [resolvable:$true] %s3181
          %3187 = dma.vmem_to_hbm [thread:$0]  %s3182, 2048, %s3180, %s3147, 128, 128, 8
        $region100: #{smn_forward.3} parent=55 // pred_fallthru
          _
        // Predicated region
        $region101: #{smn_forward.3} parent=55 // pred_check
          %p3188 = pneg %p312
        $region102: #{smn_forward.3} parent=55 // pred_check_branch
          %3190 = sbr.rel (%p3188) target = $region104
        $region103: #{smn_forward.3} parent=55 // pred_region
          %s3191 = smul.u32 16, %s38
          %s3193 = ssub.s32 2048, 2048
          %3194 = vsyncadd %s3152, %s3193
          %s3195 = smul.addr %s3191, 128
          %s3196 = scalar_lea.hbm %s11, %s3195
          %s3197 = sshll.u32 %s3155, 4
          %s3198 = int_to_ptr.vmem [resolvable:$true] %s3197
          %3203 = dma.vmem_to_hbm [thread:$0]  %s3198, 2048, %s3196, %s3152, 128, 128, 8
        $region104: #{smn_forward.3} parent=55 // pred_fallthru
          _
      $region56: #{smn_forward.3} parent=5 // pred_fallthru
        _
      %p3204 = scmp.le.s32.totalorder 2, %s33
      // Predicated region
      $region105: #{smn_forward.3} parent=5 // pred_check
        %p3205 = pneg %p3204
      $region106: #{smn_forward.3} parent=5 // pred_check_branch
        %3207 = sbr.rel (%p3205) target = $region108
      $region107: #{smn_forward.3} parent=5 // pred_region
        %s3208 = ssub.s32 %s33, 2
        // Predicated region
        $region109: #{smn_forward.3} parent=107 // pred_check
          %p3209 = pneg %p266
        $region110: #{smn_forward.3} parent=107 // pred_check_branch
          %3211 = sbr.rel (%p3209) target = $region112
        $region111: #{smn_forward.3} parent=107 // pred_region
          %s3212 = sand.u32 %s251, 1
          %s3213 = scalar_lea.sflag [#allocation4], %s3212
          %s3214 = sand.u32 %s251, 1
          %s3215 = smul.addr %s3214, 128
          %s3216 = scalar_lea.vmem [#allocation17], %s3215
          %3217 = dma.done %s3213, 2048
        $region112: #{smn_forward.3} parent=107 // pred_fallthru
          _
        // Predicated region
        $region113: #{smn_forward.3} parent=107 // pred_check
          %p3218 = pneg %p292
        $region114: #{smn_forward.3} parent=107 // pred_check_branch
          %3220 = sbr.rel (%p3218) target = $region116
        $region115: #{smn_forward.3} parent=107 // pred_region
          %s3221 = sand.u32 %s39, 1
          %s3222 = scalar_lea.sflag [#allocation19], %s3221
          %s3223 = sand.u32 %s277, 1
          %s3224 = smul.addr %s3223, 128
          %s3225 = scalar_lea.vmem [#allocation18], %s3224
          %3226 = dma.done %s3222, 2048
        $region116: #{smn_forward.3} parent=107 // pred_fallthru
          _
        // Predicated region
        $region117: #{smn_forward.3} parent=107 // pred_check
          %p3227 = pneg %p318
        $region118: #{smn_forward.3} parent=107 // pred_check_branch
          %3229 = sbr.rel (%p3227) target = $region120
        $region119: #{smn_forward.3} parent=107 // pred_region
          %s3230 = sand.u32 %s39, 1
          %s3231 = scalar_lea.sflag [#allocation19], %s3230
          %s3232 = sand.u32 %s303, 1
          %s3233 = smul.addr %s3232, 128
          %s3234 = scalar_lea.vmem [#allocation20], %s3233
          %3235 = dma.done %s3231, 2048
        $region120: #{smn_forward.3} parent=107 // pred_fallthru
          _
      $region108: #{smn_forward.3} parent=5 // pred_fallthru
        _
    $region6: #{smn_forward.3} parent=1 // loop_footer
      %s37 = sadd.s32 1, %s33
    $region7: #{smn_forward.3} parent=1 // loop_footer_branch
      %32 = sbr.rel target = $region3
    $region8: #{smn_forward.3} parent=1 // loop_exit
      _
    %3236 = vsyncpa [#allocation3], 1
    %s3237 = scalar_lea.sflag [#allocation3], 1
    %3238 = vsyncpa %s3237, 1
    %3239 = vsyncpa [#allocation6], 1
    %s3240 = scalar_lea.sflag [#allocation6], 1
    %3241 = vsyncpa %s3240, 1
    %3242 = vsyncpa [#allocation9], 1
    %3243 = vsyncpa [#allocation12], 1
    %3244 = vsyncpa [#allocation15], 1
    %3245 = vsyncpa [#allocation4], 1
    %s3246 = scalar_lea.sflag [#allocation4], 1
    %3247 = vsyncpa %s3246, 1
    %3248 = vsyncpa [#allocation19], 1
    %s3249 = scalar_lea.sflag [#allocation19], 1
    %3250 = vsyncpa %s3249, 1

</llo_original>
